<compile_context>
chip_gen: v7x
topology: tpu7x:2x2x1
jax: 0.10.0
libtpu: 0.0.40
codegen_flags: <defaults>
</compile_context>

<pallas_src>
import functools

import jax
import jax.numpy as jnp
from jax.experimental import pallas as pl
from jax.experimental.pallas import tpu as pltpu

_LANES = 128
_SLAB_ROWS = 8
_STEPS_PER_BLOCK = 8          # U: decoder steps executed per grid iteration
_ROW_CTX, _ROW_H0, _ROW_H1, _ROW_ATTN = 0, 1, 2, 3


# ----------------------------------------------------------------------------
# Kernel: U decoder steps per grid iteration; recurrence carried in scratch.
# ----------------------------------------------------------------------------
def _attn_decoder_kernel(
    H, S, U,
    gi0e_ref,                                # (U, 1, 3H) precomputed emb-part of layer-0 input gates (+ b_ih0)
    ctx0_ref,                                # (1, H)     initial context
    h_init_ref,                              # (2, 1, H)  initial hidden
    enc_ref,                                 # (S, H)     encoder outputs
    ecol_ref,                                # (1, S)     precomputed attention column
    wih0c_ref, whh0_ref, bhh0_ref,           # GRU layer 0 (gate-fused, (H,3H)/(1,3H))
    wih1_ref, bih1_ref, whh1_ref, bhh1_ref,  # GRU layer 1
    out_ref,                                 # (U, 8, 128) packed output slab block
    h0_s, h1_s, ctx_s,                       # VMEM scratch (1, H): recurrent state
):
    f32 = jnp.float32
    c = pl.program_id(0)

    # Load the recurrent state once at chunk 0 from the provided initial state.
    @pl.when(c == 0)
    def _():
        h0_s[...] = h_init_ref[0]
        h1_s[...] = h_init_ref[1]
        ctx_s[...] = ctx0_ref[...]

    # VMEM-resident weights/constants -> vregs once per chunk of U steps.
    wih0c = wih0c_ref[...]
    whh0 = whh0_ref[...]
    bhh0 = bhh0_ref[...]
    wih1 = wih1_ref[...]
    bih1 = bih1_ref[...]
    whh1 = whh1_ref[...]
    bhh1 = bhh1_ref[...]
    enc = enc_ref[...]
    ecol = ecol_ref[...]

    out_ref[...] = jnp.zeros_like(out_ref)

    h0 = h0_s[...]
    h1 = h1_s[...]
    lastctx = ctx_s[...]

    # Statically unrolled loop over U steps: amortizes per-grid-step overhead.
    for u in range(U):
        # ---- GRU layer 0. Input = concat(embedded, last_context); the
        # embedding contribution (incl. b_ih0) is precomputed -> gi0e_ref.
        gi0 = gi0e_ref[u] + jnp.dot(lastctx, wih0c, preferred_element_type=f32)
        gh0 = jnp.dot(h0, whh0, preferred_element_type=f32) + bhh0
        r0 = jax.nn.sigmoid(gi0[:, 0:H] + gh0[:, 0:H])
        z0 = jax.nn.sigmoid(gi0[:, H:2 * H] + gh0[:, H:2 * H])
        n0 = jnp.tanh(gi0[:, 2 * H:3 * H] + r0 * gh0[:, 2 * H:3 * H])
        h0 = (1.0 - z0) * n0 + z0 * h0

        # ---- GRU layer 1 (eval mode: no inter-layer dropout).
        gi1 = jnp.dot(h0, wih1, preferred_element_type=f32) + bih1
        gh1 = jnp.dot(h1, whh1, preferred_element_type=f32) + bhh1
        r1 = jax.nn.sigmoid(gi1[:, 0:H] + gh1[:, 0:H])
        z1 = jax.nn.sigmoid(gi1[:, H:2 * H] + gh1[:, H:2 * H])
        n1 = jnp.tanh(gi1[:, 2 * H:3 * H] + r1 * gh1[:, 2 * H:3 * H])
        h1 = (1.0 - z1) * n1 + z1 * h1

        # ---- Attn 'general' (tutorial semantics):
        #   energy_i = hidden[-1,0] * (enc_i . wa.sum(0) + ba.sum())
        # The whole column is step-invariant and precomputed (ecol); only the
        # scalar hidden[-1,0] = h1[0,0] is recurrent.
        scal = h1[0:1, 0:1]                                           # (1, 1)
        energies = scal * ecol                                        # (1, S)
        m = jnp.max(energies, axis=1, keepdims=True)
        p = jnp.exp(energies - m)
        attn = p / jnp.sum(p, axis=1, keepdims=True)                  # (1, S)
        lastctx = jnp.dot(attn, enc, preferred_element_type=f32)      # (1, H)

        # ---- pack step outputs into the lane-dense slab block.
        out_ref[u, _ROW_CTX:_ROW_CTX + 1, 0:H] = lastctx
        out_ref[u, _ROW_H0:_ROW_H0 + 1, 0:H] = h0
        out_ref[u, _ROW_H1:_ROW_H1 + 1, 0:H] = h1
        out_ref[u, _ROW_ATTN:_ROW_ATTN + 1, 0:S] = attn

    # Carry recurrent state to the next chunk via VMEM scratch.
    h0_s[...] = h0
    h1_s[...] = h1
    ctx_s[...] = lastctx


# ----------------------------------------------------------------------------
# Host-side parameter preparation (done once, not per step).
# ----------------------------------------------------------------------------
def _prep_params(params):
    H = params["H"]
    w0 = params["wih0"]                                    # (3H, 2H)
    f32 = jnp.float32
    return dict(
        emb_table=jnp.asarray(params["emb_table"], f32),   # (V, H) host-side gather only
        wih0e=jnp.asarray(w0[:, 0:H].T, f32),              # (H, 3H) host-side only
        wih0c=jnp.asarray(w0[:, H:2 * H].T, f32),          # (H, 3H)
        whh0=jnp.asarray(params["whh0"].T, f32),           # (H, 3H)
        bih0=jnp.asarray(params["bih0"].reshape(1, 3 * H), f32),
        bhh0=jnp.asarray(params["bhh0"].reshape(1, 3 * H), f32),
        wih1=jnp.asarray(params["wih1"].T, f32),           # (H, 3H)
        whh1=jnp.asarray(params["whh1"].T, f32),           # (H, 3H)
        bih1=jnp.asarray(params["bih1"].reshape(1, 3 * H), f32),
        bhh1=jnp.asarray(params["bhh1"].reshape(1, 3 * H), f32),
        ecol_w=jnp.asarray(params["wa"].sum(axis=0), f32),  # (H,) reduced attn linear
        ecol_b=jnp.asarray(params["ba"].sum(), f32),        # ()
        wout=jnp.asarray(params["wout"], f32),               # (V, 2H) host-side only
        bout=jnp.asarray(params["bout"], f32),               # (V,)
    )


# ----------------------------------------------------------------------------
# Fused wrapper: T teacher-forced decoder steps, U per grid iteration.
# ----------------------------------------------------------------------------
def attn_decoder_forward_fused(word_inputs, last_context, last_hidden,
                               encoder_outputs, params):
    H = params["H"]
    S = encoder_outputs.shape[0]
    T = int(word_inputs.shape[0])
    assert max(H, S) <= _LANES, "packed slab rows assume H, S <= 128 lanes"

    p = _prep_params(params)
    U = _STEPS_PER_BLOCK
    n_chunks = int(pl.cdiv(T, U))
    Tp = U * n_chunks

    # ---- hoisted, non-recurrent work (batched, outside the kernel) ----------
    ids = jnp.pad(word_inputs.astype(jnp.int32).reshape(T), (0, Tp - T))
    emb = p["emb_table"][ids]                                       # (Tp, H)
    gi0_e = (emb @ p["wih0e"] + p["bih0"]).reshape(Tp, 1, 3 * H)    # (Tp, 1, 3H)
    enc = encoder_outputs.reshape(S, H).astype(jnp.float32)         # (S, H)
    ecol = (enc @ p["ecol_w"] + p["ecol_b"]).reshape(1, S)          # (1, S)
    ctx0 = last_context.reshape(1, H).astype(jnp.float32)
    h_init = last_hidden.reshape(2, 1, H).astype(jnp.float32)

    inputs = (
        gi0_e,                         # per-step (chunked) input
        ctx0, h_init, enc, ecol,       # resident
        p["wih0c"], p["whh0"], p["bhh0"],
        p["wih1"], p["bih1"], p["whh1"], p["bhh1"],
    )

    def resident(x):
        nd = x.ndim
        # constant block index -> DMA'd once, stays VMEM-resident across chunks
        return pl.BlockSpec(x.shape, lambda c, _n=nd: (0,) * _n)

    grid_spec = pltpu.PrefetchScalarGridSpec(
        num_scalar_prefetch=0,
        grid=(n_chunks,),
        in_specs=[pl.BlockSpec((U, 1, 3 * H), lambda c: (c, 0, 0))]
                 + [resident(x) for x in inputs[1:]],
        out_specs=pl.BlockSpec((U, _SLAB_ROWS, _LANES), lambda c: (c, 0, 0)),
        scratch_shapes=[pltpu.VMEM((1, H), jnp.float32)] * 3,
    )

    slab = pl.pallas_call(
        functools.partial(_attn_decoder_kernel, H, S, U),
        out_shape=jax.ShapeDtypeStruct((Tp, _SLAB_ROWS, _LANES), jnp.float32),
        grid_spec=grid_spec,
        compiler_params=pltpu.CompilerParams(
            dimension_semantics=("arbitrary",)),   # sequential recurrence
    )(*inputs)

    ctx_seq = slab[:T, _ROW_CTX, 0:H]                  # (T, H)
    h0_seq = slab[:T, _ROW_H0, 0:H]                    # (T, H)
    h1_seq = slab[:T, _ROW_H1, 0:H]                    # (T, H)
    attn_seq = slab[:T, _ROW_ATTN, 0:S]                # (T, S)
    hidden_seq = jnp.stack([h0_seq, h1_seq], axis=1)   # (T, 2, H)

    # ---- hoisted output projection + log_softmax (batched, off the chain) ---
    feats = jnp.concatenate([h1_seq, ctx_seq], axis=1)              # (T, 2H)
    logits = feats @ p["wout"].T + p["bout"]                        # (T, V)
    logp = jax.nn.log_softmax(logits, axis=-1)

    return logp, ctx_seq, hidden_seq, attn_seq


# ----------------------------------------------------------------------------
# Single-step wrapper with exact PyTorch module shapes (T = 1).
# ----------------------------------------------------------------------------
def attn_decoder_forward(word_input, last_context, last_hidden,
                         encoder_outputs, params):
    H = params["H"]
    S = encoder_outputs.shape[0]
    logp, ctx, hidden, attnw = attn_decoder_forward_fused(
        word_input.reshape(1), last_context, last_hidden, encoder_outputs, params)
    return logp, ctx, hidden[0].reshape(2, 1, H), attnw.reshape(1, 1, S)


# ----------------------------------------------------------------------------
# Pure-JAX reference (mirrors the PyTorch forward exactly), for verification.
# ----------------------------------------------------------------------------
def reference_forward(word_input, last_context, last_hidden, encoder_outputs, p):
    H = p["H"]
    emb = p["emb_table"][word_input[0]]
    x = jnp.concatenate([emb, last_context[0]])[None, :]              # (1, 2H)

    def cell(x, h, wih, whh, bih, bhh):
        gi = x @ wih.T + bih
        gh = h @ whh.T + bhh
        r = jax.nn.sigmoid(gi[:, :H] + gh[:, :H])
        z = jax.nn.sigmoid(gi[:, H:2 * H] + gh[:, H:2 * H])
        n = jnp.tanh(gi[:, 2 * H:] + r * gh[:, 2 * H:])
        return (1.0 - z) * n + z * h

    h0 = cell(x, last_hidden[0], p["wih0"], p["whh0"], p["bih0"], p["bhh0"])
    h1 = cell(h0, last_hidden[1], p["wih1"], p["whh1"], p["bih1"], p["bhh1"])
    rnn_out = h1                                                      # (1, H)

    enc = encoder_outputs[:, 0, :]                                    # (S, H)
    proj = enc @ p["wa"].T + p["ba"]                                  # (S, H)
    energies = rnn_out[0, 0] * jnp.sum(proj, axis=1)                  # (S,)
    attn = jax.nn.softmax(energies)[None, :]                          # (1, S)
    ctx = attn @ enc                                                  # (1, H)
    logits = jnp.concatenate([rnn_out, ctx], axis=1) @ p["wout"].T + p["bout"]
    logp = jax.nn.log_softmax(logits, axis=1)
    hidden = jnp.stack([h0, h1], axis=0)                              # (2, 1, H)
    return logp, ctx, hidden, attn[None]


if __name__ == "__main__":
    H = 32        # hidden_size
    V = 50        # output_size (vocab)
    S = 8         # encoder sequence length (<= MAX_LENGTH)
    T = 6         # fused teacher-forced decode steps

    key = jax.random.PRNGKey(0)
    ks = jax.random.split(key, 20)
    k = 1.0 / jnp.sqrt(jnp.float32(H))

    def u(kk, shape):
        return jax.random.uniform(kk, shape, jnp.float32, -k, k)

    params = dict(
        H=H, V=V,
        emb_table=jax.random.normal(ks[0], (V, H), jnp.float32),
        # GRU layer 0 (input = 2H)
        wih0=u(ks[1], (3 * H, 2 * H)), whh0=u(ks[2], (3 * H, H)),
        bih0=u(ks[3], (3 * H,)), bhh0=u(ks[4], (3 * H,)),
        # GRU layer 1 (input = H)
        wih1=u(ks[5], (3 * H, H)), whh1=u(ks[6], (3 * H, H)),
        bih1=u(ks[7], (3 * H,)), bhh1=u(ks[8], (3 * H,)),
        # Attn 'general' linear
        wa=u(ks[9], (H, H)), ba=u(ks[10], (H,)),
        # output linear (2H -> V)
        wout=u(ks[11], (V, 2 * H)), bout=u(ks[12], (V,)),
    )

    # forward inputs (PyTorch shapes)
    word_input = jnp.array([7], dtype=jnp.int32)
    last_context = jax.random.normal(ks[13], (1, H), jnp.float32)
    last_hidden = jax.random.normal(ks[14], (2, 1, H), jnp.float32)
    encoder_outputs = jax.random.normal(ks[15], (S, 1, H), jnp.float32)

    # --- single decoder step: exact module forward shapes/semantics ---------
    out = attn_decoder_forward(word_input, last_context, last_hidden,
                               encoder_outputs, params)
    out = jax.block_until_ready(out)
    ref = reference_forward(word_input, last_context, last_hidden,
                            encoder_outputs, params)
    for a, b in zip(out, ref):
        assert a.shape == b.shape, (a.shape, b.shape)
        assert jnp.allclose(a, b, atol=1e-3, rtol=1e-3), float(jnp.max(jnp.abs(a - b)))

    # --- fused decode: T steps in ONE pallas_call (weights stay in VMEM) ----
    word_ids = jnp.array([7, 3, 11, 0, 42, 5], dtype=jnp.int32)
    flogp, fctx, fhid, fattn = jax.block_until_ready(
        attn_decoder_forward_fused(word_ids, last_context, last_hidden,
                                   encoder_outputs, params))

    ctx_r, hid_r = last_context, last_hidden
    for t in range(T):
        lp, c, h, aw = reference_forward(word_ids[t:t + 1], ctx_r, hid_r,
                                         encoder_outputs, params)
        assert jnp.allclose(flogp[t], lp[0], atol=1e-3, rtol=1e-3)
        assert jnp.allclose(fctx[t], c[0], atol=1e-3, rtol=1e-3)
        assert jnp.allclose(fhid[t], h[:, 0, :], atol=1e-3, rtol=1e-3)
        assert jnp.allclose(fattn[t], aw[0, 0], atol=1e-3, rtol=1e-3)
        ctx_r, hid_r = c, h

    print("KERNEL_OK")
</pallas_src>

<mosaic_0001>
module attributes {stable_mosaic.version = 11 : i64} {
  func.func @_attn_decoder_kernel(%arg0: i32, %arg1: memref<8x1x96xf32, #tpu.memory_space<vmem>>, %arg2: memref<1x32xf32, #tpu.memory_space<vmem>>, %arg3: memref<2x1x32xf32, #tpu.memory_space<vmem>>, %arg4: memref<8x32xf32, #tpu.memory_space<vmem>>, %arg5: memref<1x8xf32, #tpu.memory_space<vmem>>, %arg6: memref<32x96xf32, #tpu.memory_space<vmem>>, %arg7: memref<32x96xf32, #tpu.memory_space<vmem>>, %arg8: memref<1x96xf32, #tpu.memory_space<vmem>>, %arg9: memref<32x96xf32, #tpu.memory_space<vmem>>, %arg10: memref<1x96xf32, #tpu.memory_space<vmem>>, %arg11: memref<32x96xf32, #tpu.memory_space<vmem>>, %arg12: memref<1x96xf32, #tpu.memory_space<vmem>>, %arg13: memref<8x8x128xf32, #tpu.memory_space<vmem>>, %arg14: memref<1x32xf32, #tpu.memory_space<vmem>>, %arg15: memref<1x32xf32, #tpu.memory_space<vmem>>, %arg16: memref<1x32xf32, #tpu.memory_space<vmem>>) attributes {dimension_semantics = [#tpu.dimension_semantics<arbitrary>], iteration_bounds = array<i64: 1>, scalar_prefetch = 0 : i64, scratch_operands = 3 : i64, tpu.core_type = #tpu.core_type<tc>, window_params = [{transform_indices = @transform_0, window_bounds = array<i64: 8, 1, 96>}, {pipeline_mode = #tpu.pipeline_mode<synchronous>, transform_indices = @transform_1, window_bounds = array<i64: 1, 32>}, {pipeline_mode = #tpu.pipeline_mode<synchronous>, transform_indices = @transform_2, window_bounds = array<i64: 2, 1, 32>}, {pipeline_mode = #tpu.pipeline_mode<synchronous>, transform_indices = @transform_3, window_bounds = array<i64: 8, 32>}, {pipeline_mode = #tpu.pipeline_mode<synchronous>, transform_indices = @transform_4, window_bounds = array<i64: 1, 8>}, {pipeline_mode = #tpu.pipeline_mode<synchronous>, transform_indices = @transform_5, window_bounds = array<i64: 32, 96>}, {pipeline_mode = #tpu.pipeline_mode<synchronous>, transform_indices = @transform_6, window_bounds = array<i64: 32, 96>}, {pipeline_mode = #tpu.pipeline_mode<synchronous>, transform_indices = @transform_7, window_bounds = array<i64: 1, 96>}, {pipeline_mode = #tpu.pipeline_mode<synchronous>, transform_indices = @transform_8, window_bounds = array<i64: 32, 96>}, {pipeline_mode = #tpu.pipeline_mode<synchronous>, transform_indices = @transform_9, window_bounds = array<i64: 1, 96>}, {pipeline_mode = #tpu.pipeline_mode<synchronous>, transform_indices = @transform_10, window_bounds = array<i64: 32, 96>}, {pipeline_mode = #tpu.pipeline_mode<synchronous>, transform_indices = @transform_11, window_bounds = array<i64: 1, 96>}, {transform_indices = @transform_12, window_bounds = array<i64: 8, 8, 128>}]} {
    %c0_i32 = arith.constant 0 : i32
    %0 = arith.cmpi eq, %arg0, %c0_i32 : i32
    %1 = arith.extui %0 : i1 to i32
    %c0_i32_0 = arith.constant 0 : i32
    %2 = arith.cmpi ne, %1, %c0_i32_0 : i32
    scf.if %2 {
      %c0_250 = arith.constant 0 : index
      %c0_251 = arith.constant 0 : index
      %c0_252 = arith.constant 0 : index
      %716 = vector.load %arg3[%c0_250, %c0_251, %c0_252] : memref<2x1x32xf32, #tpu.memory_space<vmem>>, vector<1x1x32xf32>
      %717 = vector.shape_cast %716 : vector<1x1x32xf32> to vector<1x32xf32>
      %c0_253 = arith.constant 0 : index
      %c0_254 = arith.constant 0 : index
      %718 = vector.load %arg14[%c0_253, %c0_254] : memref<1x32xf32, #tpu.memory_space<vmem>>, vector<1x32xf32>
      tpu.vector_store %arg14[%c0_253, %c0_254], %717 {strides = array<i32>} : memref<1x32xf32, #tpu.memory_space<vmem>>, vector<1x32xf32>,
      %c1_255 = arith.constant 1 : index
      %c0_256 = arith.constant 0 : index
      %c0_257 = arith.constant 0 : index
      %719 = vector.load %arg3[%c1_255, %c0_256, %c0_257] : memref<2x1x32xf32, #tpu.memory_space<vmem>>, vector<1x1x32xf32>
      %720 = vector.shape_cast %719 : vector<1x1x32xf32> to vector<1x32xf32>
      %c0_258 = arith.constant 0 : index
      %c0_259 = arith.constant 0 : index
      %721 = vector.load %arg15[%c0_258, %c0_259] : memref<1x32xf32, #tpu.memory_space<vmem>>, vector<1x32xf32>
      tpu.vector_store %arg15[%c0_258, %c0_259], %720 {strides = array<i32>} : memref<1x32xf32, #tpu.memory_space<vmem>>, vector<1x32xf32>,
      %c0_260 = arith.constant 0 : index
      %c0_261 = arith.constant 0 : index
      %722 = vector.load %arg2[%c0_260, %c0_261] : memref<1x32xf32, #tpu.memory_space<vmem>>, vector<1x32xf32>
      %c0_262 = arith.constant 0 : index
      %c0_263 = arith.constant 0 : index
      %723 = vector.load %arg16[%c0_262, %c0_263] : memref<1x32xf32, #tpu.memory_space<vmem>>, vector<1x32xf32>
      tpu.vector_store %arg16[%c0_262, %c0_263], %722 {strides = array<i32>} : memref<1x32xf32, #tpu.memory_space<vmem>>, vector<1x32xf32>,
    } else {
    }
    %c0 = arith.constant 0 : index
    %c0_1 = arith.constant 0 : index
    %3 = vector.load %arg6[%c0, %c0_1] : memref<32x96xf32, #tpu.memory_space<vmem>>, vector<32x96xf32>
    %c0_2 = arith.constant 0 : index
    %c0_3 = arith.constant 0 : index
    %4 = vector.load %arg7[%c0_2, %c0_3] : memref<32x96xf32, #tpu.memory_space<vmem>>, vector<32x96xf32>
    %c0_4 = arith.constant 0 : index
    %c0_5 = arith.constant 0 : index
    %5 = vector.load %arg8[%c0_4, %c0_5] : memref<1x96xf32, #tpu.memory_space<vmem>>, vector<1x96xf32>
    %c0_6 = arith.constant 0 : index
    %c0_7 = arith.constant 0 : index
    %6 = vector.load %arg9[%c0_6, %c0_7] : memref<32x96xf32, #tpu.memory_space<vmem>>, vector<32x96xf32>
    %c0_8 = arith.constant 0 : index
    %c0_9 = arith.constant 0 : index
    %7 = vector.load %arg10[%c0_8, %c0_9] : memref<1x96xf32, #tpu.memory_space<vmem>>, vector<1x96xf32>
    %c0_10 = arith.constant 0 : index
    %c0_11 = arith.constant 0 : index
    %8 = vector.load %arg11[%c0_10, %c0_11] : memref<32x96xf32, #tpu.memory_space<vmem>>, vector<32x96xf32>
    %c0_12 = arith.constant 0 : index
    %c0_13 = arith.constant 0 : index
    %9 = vector.load %arg12[%c0_12, %c0_13] : memref<1x96xf32, #tpu.memory_space<vmem>>, vector<1x96xf32>
    %c0_14 = arith.constant 0 : index
    %c0_15 = arith.constant 0 : index
    %10 = vector.load %arg4[%c0_14, %c0_15] : memref<8x32xf32, #tpu.memory_space<vmem>>, vector<8x32xf32>
    %c0_16 = arith.constant 0 : index
    %c0_17 = arith.constant 0 : index
    %11 = vector.load %arg5[%c0_16, %c0_17] : memref<1x8xf32, #tpu.memory_space<vmem>>, vector<1x8xf32>
    %cst = arith.constant 0.000000e+00 : f32
    %12 = vector.broadcast %cst : f32 to vector<8x8x128xf32>
    %c0_18 = arith.constant 0 : index
    %c0_19 = arith.constant 0 : index
    %c0_20 = arith.constant 0 : index
    %13 = vector.load %arg13[%c0_18, %c0_19, %c0_20] : memref<8x8x128xf32, #tpu.memory_space<vmem>>, vector<8x8x128xf32>
    tpu.vector_store %arg13[%c0_18, %c0_19, %c0_20], %12 {strides = array<i32>} : memref<8x8x128xf32, #tpu.memory_space<vmem>>, vector<8x8x128xf32>,
    %c0_21 = arith.constant 0 : index
    %c0_22 = arith.constant 0 : index
    %14 = vector.load %arg14[%c0_21, %c0_22] : memref<1x32xf32, #tpu.memory_space<vmem>>, vector<1x32xf32>
    %c0_23 = arith.constant 0 : index
    %c0_24 = arith.constant 0 : index
    %15 = vector.load %arg15[%c0_23, %c0_24] : memref<1x32xf32, #tpu.memory_space<vmem>>, vector<1x32xf32>
    %c0_25 = arith.constant 0 : index
    %c0_26 = arith.constant 0 : index
    %16 = vector.load %arg16[%c0_25, %c0_26] : memref<1x32xf32, #tpu.memory_space<vmem>>, vector<1x32xf32>
    %c0_27 = arith.constant 0 : index
    %c0_28 = arith.constant 0 : index
    %c0_29 = arith.constant 0 : index
    %17 = vector.load %arg1[%c0_27, %c0_28, %c0_29] : memref<8x1x96xf32, #tpu.memory_space<vmem>>, vector<1x1x96xf32>
    %18 = vector.shape_cast %17 : vector<1x1x96xf32> to vector<1x96xf32>
    %cst_30 = arith.constant dense<0.000000e+00> : vector<1x96xf32>
    %19 = tpu.matmul %16, %3, %cst_30 {dimension_numbers = #tpu.dot_dimension_numbers<[1], [0], [0], [1], [0, 0, 1, 1], [], []>} : vector<1x32xf32>, vector<32x96xf32>, vector<1x96xf32> -> vector<1x96xf32>
    %20 = arith.addf %18, %19 : vector<1x96xf32>
    %cst_31 = arith.constant dense<0.000000e+00> : vector<1x96xf32>
    %21 = tpu.matmul %14, %4, %cst_31 {dimension_numbers = #tpu.dot_dimension_numbers<[1], [0], [0], [1], [0, 0, 1, 1], [], []>} : vector<1x32xf32>, vector<32x96xf32>, vector<1x96xf32> -> vector<1x96xf32>
    %22 = arith.addf %21, %5 : vector<1x96xf32>
    %23 = vector.extract_strided_slice %20 {offsets = [0, 0], sizes = [1, 32], strides = [1, 1]} : vector<1x96xf32> to vector<1x32xf32>
    %24 = vector.extract_strided_slice %22 {offsets = [0, 0], sizes = [1, 32], strides = [1, 1]} : vector<1x96xf32> to vector<1x32xf32>
    %25 = arith.addf %23, %24 : vector<1x32xf32>
    %26 = arith.negf %25 : vector<1x32xf32>
    %27 = math.exp %26 : vector<1x32xf32>
    %cst_32 = arith.constant 1.000000e+00 : f32
    %28 = vector.broadcast %cst_32 : f32 to vector<1x32xf32>
    %29 = arith.addf %28, %27 : vector<1x32xf32>
    %30 = arith.divf %28, %29 : vector<1x32xf32>
    %31 = vector.extract_strided_slice %20 {offsets = [0, 32], sizes = [1, 32], strides = [1, 1]} : vector<1x96xf32> to vector<1x32xf32>
    %32 = vector.extract_strided_slice %22 {offsets = [0, 32], sizes = [1, 32], strides = [1, 1]} : vector<1x96xf32> to vector<1x32xf32>
    %33 = arith.addf %31, %32 : vector<1x32xf32>
    %34 = arith.negf %33 : vector<1x32xf32>
    %35 = math.exp %34 : vector<1x32xf32>
    %cst_33 = arith.constant 1.000000e+00 : f32
    %36 = vector.broadcast %cst_33 : f32 to vector<1x32xf32>
    %37 = arith.addf %36, %35 : vector<1x32xf32>
    %38 = arith.divf %36, %37 : vector<1x32xf32>
    %39 = vector.extract_strided_slice %20 {offsets = [0, 64], sizes = [1, 32], strides = [1, 1]} : vector<1x96xf32> to vector<1x32xf32>
    %40 = vector.extract_strided_slice %22 {offsets = [0, 64], sizes = [1, 32], strides = [1, 1]} : vector<1x96xf32> to vector<1x32xf32>
    %41 = arith.mulf %30, %40 : vector<1x32xf32>
    %42 = arith.addf %39, %41 : vector<1x32xf32>
    %43 = math.tanh %42 : vector<1x32xf32>
    %cst_34 = arith.constant 1.000000e+00 : f32
    %44 = vector.broadcast %cst_34 : f32 to vector<1x32xf32>
    %45 = arith.subf %44, %38 : vector<1x32xf32>
    %46 = arith.mulf %45, %43 : vector<1x32xf32>
    %47 = arith.mulf %38, %14 : vector<1x32xf32>
    %48 = arith.addf %46, %47 : vector<1x32xf32>
    %cst_35 = arith.constant dense<0.000000e+00> : vector<1x96xf32>
    %49 = tpu.matmul %48, %6, %cst_35 {dimension_numbers = #tpu.dot_dimension_numbers<[1], [0], [0], [1], [0, 0, 1, 1], [], []>} : vector<1x32xf32>, vector<32x96xf32>, vector<1x96xf32> -> vector<1x96xf32>
    %50 = arith.addf %49, %7 : vector<1x96xf32>
    %cst_36 = arith.constant dense<0.000000e+00> : vector<1x96xf32>
    %51 = tpu.matmul %15, %8, %cst_36 {dimension_numbers = #tpu.dot_dimension_numbers<[1], [0], [0], [1], [0, 0, 1, 1], [], []>} : vector<1x32xf32>, vector<32x96xf32>, vector<1x96xf32> -> vector<1x96xf32>
    %52 = arith.addf %51, %9 : vector<1x96xf32>
    %53 = vector.extract_strided_slice %50 {offsets = [0, 0], sizes = [1, 32], strides = [1, 1]} : vector<1x96xf32> to vector<1x32xf32>
    %54 = vector.extract_strided_slice %52 {offsets = [0, 0], sizes = [1, 32], strides = [1, 1]} : vector<1x96xf32> to vector<1x32xf32>
    %55 = arith.addf %53, %54 : vector<1x32xf32>
    %56 = arith.negf %55 : vector<1x32xf32>
    %57 = math.exp %56 : vector<1x32xf32>
    %cst_37 = arith.constant 1.000000e+00 : f32
    %58 = vector.broadcast %cst_37 : f32 to vector<1x32xf32>
    %59 = arith.addf %58, %57 : vector<1x32xf32>
    %60 = arith.divf %58, %59 : vector<1x32xf32>
    %61 = vector.extract_strided_slice %50 {offsets = [0, 32], sizes = [1, 32], strides = [1, 1]} : vector<1x96xf32> to vector<1x32xf32>
    %62 = vector.extract_strided_slice %52 {offsets = [0, 32], sizes = [1, 32], strides = [1, 1]} : vector<1x96xf32> to vector<1x32xf32>
    %63 = arith.addf %61, %62 : vector<1x32xf32>
    %64 = arith.negf %63 : vector<1x32xf32>
    %65 = math.exp %64 : vector<1x32xf32>
    %cst_38 = arith.constant 1.000000e+00 : f32
    %66 = vector.broadcast %cst_38 : f32 to vector<1x32xf32>
    %67 = arith.addf %66, %65 : vector<1x32xf32>
    %68 = arith.divf %66, %67 : vector<1x32xf32>
    %69 = vector.extract_strided_slice %50 {offsets = [0, 64], sizes = [1, 32], strides = [1, 1]} : vector<1x96xf32> to vector<1x32xf32>
    %70 = vector.extract_strided_slice %52 {offsets = [0, 64], sizes = [1, 32], strides = [1, 1]} : vector<1x96xf32> to vector<1x32xf32>
    %71 = arith.mulf %60, %70 : vector<1x32xf32>
    %72 = arith.addf %69, %71 : vector<1x32xf32>
    %73 = math.tanh %72 : vector<1x32xf32>
    %cst_39 = arith.constant 1.000000e+00 : f32
    %74 = vector.broadcast %cst_39 : f32 to vector<1x32xf32>
    %75 = arith.subf %74, %68 : vector<1x32xf32>
    %76 = arith.mulf %75, %73 : vector<1x32xf32>
    %77 = arith.mulf %68, %15 : vector<1x32xf32>
    %78 = arith.addf %76, %77 : vector<1x32xf32>
    %79 = vector.extract_strided_slice %78 {offsets = [0, 0], sizes = [1, 1], strides = [1, 1]} : vector<1x32xf32> to vector<1x1xf32>
    %80 = vector.broadcast %79 : vector<1x1xf32> to vector<1x8xf32>
    %81 = arith.mulf %80, %11 : vector<1x8xf32>
    %cst_40 = arith.constant dense<0xFF800000> : vector<1xf32>
    %82 = vector.multi_reduction <maximumf>, %81, %cst_40 [1] : vector<1x8xf32> to vector<1xf32>
    %83 = vector.shape_cast %82 : vector<1xf32> to vector<1x1xf32>
    %84 = vector.broadcast %83 : vector<1x1xf32> to vector<1x8xf32>
    %85 = arith.subf %81, %84 : vector<1x8xf32>
    %86 = math.exp %85 : vector<1x8xf32>
    %cst_41 = arith.constant dense<0.000000e+00> : vector<1xf32>
    %87 = vector.multi_reduction <add>, %86, %cst_41 [1] : vector<1x8xf32> to vector<1xf32>
    %88 = vector.shape_cast %87 : vector<1xf32> to vector<1x1xf32>
    %89 = vector.broadcast %88 : vector<1x1xf32> to vector<1x8xf32>
    %90 = arith.divf %86, %89 : vector<1x8xf32>
    %cst_42 = arith.constant dense<0.000000e+00> : vector<1x32xf32>
    %91 = tpu.matmul %90, %10, %cst_42 {dimension_numbers = #tpu.dot_dimension_numbers<[1], [0], [0], [1], [0, 0, 1, 1], [], []>} : vector<1x8xf32>, vector<8x32xf32>, vector<1x32xf32> -> vector<1x32xf32>
    %c0_43 = arith.constant 0 : index
    %c0_44 = arith.constant 0 : index
    %c0_45 = arith.constant 0 : index
    %92 = vector.load %arg13[%c0_43, %c0_44, %c0_45] : memref<8x8x128xf32, #tpu.memory_space<vmem>>, vector<1x1x32xf32>
    %93 = vector.shape_cast %92 : vector<1x1x32xf32> to vector<1x32xf32>
    %94 = vector.shape_cast %91 : vector<1x32xf32> to vector<1x1x32xf32>
    tpu.vector_store %arg13[%c0_43, %c0_44, %c0_45], %94 {strides = array<i32>} : memref<8x8x128xf32, #tpu.memory_space<vmem>>, vector<1x1x32xf32>,
    %c0_46 = arith.constant 0 : index
    %c1 = arith.constant 1 : index
    %c0_47 = arith.constant 0 : index
    %95 = vector.load %arg13[%c0_46, %c1, %c0_47] : memref<8x8x128xf32, #tpu.memory_space<vmem>>, vector<1x1x32xf32>
    %96 = vector.shape_cast %95 : vector<1x1x32xf32> to vector<1x32xf32>
    %97 = vector.shape_cast %48 : vector<1x32xf32> to vector<1x1x32xf32>
    tpu.vector_store %arg13[%c0_46, %c1, %c0_47], %97 {strides = array<i32>} : memref<8x8x128xf32, #tpu.memory_space<vmem>>, vector<1x1x32xf32>,
    %c0_48 = arith.constant 0 : index
    %c2 = arith.constant 2 : index
    %c0_49 = arith.constant 0 : index
    %98 = vector.load %arg13[%c0_48, %c2, %c0_49] : memref<8x8x128xf32, #tpu.memory_space<vmem>>, vector<1x1x32xf32>
    %99 = vector.shape_cast %98 : vector<1x1x32xf32> to vector<1x32xf32>
    %100 = vector.shape_cast %78 : vector<1x32xf32> to vector<1x1x32xf32>
    tpu.vector_store %arg13[%c0_48, %c2, %c0_49], %100 {strides = array<i32>} : memref<8x8x128xf32, #tpu.memory_space<vmem>>, vector<1x1x32xf32>,
    %c0_50 = arith.constant 0 : index
    %c3 = arith.constant 3 : index
    %c0_51 = arith.constant 0 : index
    %101 = vector.load %arg13[%c0_50, %c3, %c0_51] : memref<8x8x128xf32, #tpu.memory_space<vmem>>, vector<1x1x8xf32>
    %102 = vector.shape_cast %101 : vector<1x1x8xf32> to vector<1x8xf32>
    %103 = vector.shape_cast %90 : vector<1x8xf32> to vector<1x1x8xf32>
    tpu.vector_store %arg13[%c0_50, %c3, %c0_51], %103 {strides = array<i32>} : memref<8x8x128xf32, #tpu.memory_space<vmem>>, vector<1x1x8xf32>,
    %c1_52 = arith.constant 1 : index
    %c0_53 = arith.constant 0 : index
    %c0_54 = arith.constant 0 : index
    %104 = vector.load %arg1[%c1_52, %c0_53, %c0_54] : memref<8x1x96xf32, #tpu.memory_space<vmem>>, vector<1x1x96xf32>
    %105 = vector.shape_cast %104 : vector<1x1x96xf32> to vector<1x96xf32>
    %cst_55 = arith.constant dense<0.000000e+00> : vector<1x96xf32>
    %106 = tpu.matmul %91, %3, %cst_55 {dimension_numbers = #tpu.dot_dimension_numbers<[1], [0], [0], [1], [0, 0, 1, 1], [], []>} : vector<1x32xf32>, vector<32x96xf32>, vector<1x96xf32> -> vector<1x96xf32>
    %107 = arith.addf %105, %106 : vector<1x96xf32>
    %cst_56 = arith.constant dense<0.000000e+00> : vector<1x96xf32>
    %108 = tpu.matmul %48, %4, %cst_56 {dimension_numbers = #tpu.dot_dimension_numbers<[1], [0], [0], [1], [0, 0, 1, 1], [], []>} : vector<1x32xf32>, vector<32x96xf32>, vector<1x96xf32> -> vector<1x96xf32>
    %109 = arith.addf %108, %5 : vector<1x96xf32>
    %110 = vector.extract_strided_slice %107 {offsets = [0, 0], sizes = [1, 32], strides = [1, 1]} : vector<1x96xf32> to vector<1x32xf32>
    %111 = vector.extract_strided_slice %109 {offsets = [0, 0], sizes = [1, 32], strides = [1, 1]} : vector<1x96xf32> to vector<1x32xf32>
    %112 = arith.addf %110, %111 : vector<1x32xf32>
    %113 = arith.negf %112 : vector<1x32xf32>
    %114 = math.exp %113 : vector<1x32xf32>
    %cst_57 = arith.constant 1.000000e+00 : f32
    %115 = vector.broadcast %cst_57 : f32 to vector<1x32xf32>
    %116 = arith.addf %115, %114 : vector<1x32xf32>
    %117 = arith.divf %115, %116 : vector<1x32xf32>
    %118 = vector.extract_strided_slice %107 {offsets = [0, 32], sizes = [1, 32], strides = [1, 1]} : vector<1x96xf32> to vector<1x32xf32>
    %119 = vector.extract_strided_slice %109 {offsets = [0, 32], sizes = [1, 32], strides = [1, 1]} : vector<1x96xf32> to vector<1x32xf32>
    %120 = arith.addf %118, %119 : vector<1x32xf32>
    %121 = arith.negf %120 : vector<1x32xf32>
    %122 = math.exp %121 : vector<1x32xf32>
    %cst_58 = arith.constant 1.000000e+00 : f32
    %123 = vector.broadcast %cst_58 : f32 to vector<1x32xf32>
    %124 = arith.addf %123, %122 : vector<1x32xf32>
    %125 = arith.divf %123, %124 : vector<1x32xf32>
    %126 = vector.extract_strided_slice %107 {offsets = [0, 64], sizes = [1, 32], strides = [1, 1]} : vector<1x96xf32> to vector<1x32xf32>
    %127 = vector.extract_strided_slice %109 {offsets = [0, 64], sizes = [1, 32], strides = [1, 1]} : vector<1x96xf32> to vector<1x32xf32>
    %128 = arith.mulf %117, %127 : vector<1x32xf32>
    %129 = arith.addf %126, %128 : vector<1x32xf32>
    %130 = math.tanh %129 : vector<1x32xf32>
    %cst_59 = arith.constant 1.000000e+00 : f32
    %131 = vector.broadcast %cst_59 : f32 to vector<1x32xf32>
    %132 = arith.subf %131, %125 : vector<1x32xf32>
    %133 = arith.mulf %132, %130 : vector<1x32xf32>
    %134 = arith.mulf %125, %48 : vector<1x32xf32>
    %135 = arith.addf %133, %134 : vector<1x32xf32>
    %cst_60 = arith.constant dense<0.000000e+00> : vector<1x96xf32>
    %136 = tpu.matmul %135, %6, %cst_60 {dimension_numbers = #tpu.dot_dimension_numbers<[1], [0], [0], [1], [0, 0, 1, 1], [], []>} : vector<1x32xf32>, vector<32x96xf32>, vector<1x96xf32> -> vector<1x96xf32>
    %137 = arith.addf %136, %7 : vector<1x96xf32>
    %cst_61 = arith.constant dense<0.000000e+00> : vector<1x96xf32>
    %138 = tpu.matmul %78, %8, %cst_61 {dimension_numbers = #tpu.dot_dimension_numbers<[1], [0], [0], [1], [0, 0, 1, 1], [], []>} : vector<1x32xf32>, vector<32x96xf32>, vector<1x96xf32> -> vector<1x96xf32>
    %139 = arith.addf %138, %9 : vector<1x96xf32>
    %140 = vector.extract_strided_slice %137 {offsets = [0, 0], sizes = [1, 32], strides = [1, 1]} : vector<1x96xf32> to vector<1x32xf32>
    %141 = vector.extract_strided_slice %139 {offsets = [0, 0], sizes = [1, 32], strides = [1, 1]} : vector<1x96xf32> to vector<1x32xf32>
    %142 = arith.addf %140, %141 : vector<1x32xf32>
    %143 = arith.negf %142 : vector<1x32xf32>
    %144 = math.exp %143 : vector<1x32xf32>
    %cst_62 = arith.constant 1.000000e+00 : f32
    %145 = vector.broadcast %cst_62 : f32 to vector<1x32xf32>
    %146 = arith.addf %145, %144 : vector<1x32xf32>
    %147 = arith.divf %145, %146 : vector<1x32xf32>
    %148 = vector.extract_strided_slice %137 {offsets = [0, 32], sizes = [1, 32], strides = [1, 1]} : vector<1x96xf32> to vector<1x32xf32>
    %149 = vector.extract_strided_slice %139 {offsets = [0, 32], sizes = [1, 32], strides = [1, 1]} : vector<1x96xf32> to vector<1x32xf32>
    %150 = arith.addf %148, %149 : vector<1x32xf32>
    %151 = arith.negf %150 : vector<1x32xf32>
    %152 = math.exp %151 : vector<1x32xf32>
    %cst_63 = arith.constant 1.000000e+00 : f32
    %153 = vector.broadcast %cst_63 : f32 to vector<1x32xf32>
    %154 = arith.addf %153, %152 : vector<1x32xf32>
    %155 = arith.divf %153, %154 : vector<1x32xf32>
    %156 = vector.extract_strided_slice %137 {offsets = [0, 64], sizes = [1, 32], strides = [1, 1]} : vector<1x96xf32> to vector<1x32xf32>
    %157 = vector.extract_strided_slice %139 {offsets = [0, 64], sizes = [1, 32], strides = [1, 1]} : vector<1x96xf32> to vector<1x32xf32>
    %158 = arith.mulf %147, %157 : vector<1x32xf32>
    %159 = arith.addf %156, %158 : vector<1x32xf32>
    %160 = math.tanh %159 : vector<1x32xf32>
    %cst_64 = arith.constant 1.000000e+00 : f32
    %161 = vector.broadcast %cst_64 : f32 to vector<1x32xf32>
    %162 = arith.subf %161, %155 : vector<1x32xf32>
    %163 = arith.mulf %162, %160 : vector<1x32xf32>
    %164 = arith.mulf %155, %78 : vector<1x32xf32>
    %165 = arith.addf %163, %164 : vector<1x32xf32>
    %166 = vector.extract_strided_slice %165 {offsets = [0, 0], sizes = [1, 1], strides = [1, 1]} : vector<1x32xf32> to vector<1x1xf32>
    %167 = vector.broadcast %166 : vector<1x1xf32> to vector<1x8xf32>
    %168 = arith.mulf %167, %11 : vector<1x8xf32>
    %cst_65 = arith.constant dense<0xFF800000> : vector<1xf32>
    %169 = vector.multi_reduction <maximumf>, %168, %cst_65 [1] : vector<1x8xf32> to vector<1xf32>
    %170 = vector.shape_cast %169 : vector<1xf32> to vector<1x1xf32>
    %171 = vector.broadcast %170 : vector<1x1xf32> to vector<1x8xf32>
    %172 = arith.subf %168, %171 : vector<1x8xf32>
    %173 = math.exp %172 : vector<1x8xf32>
    %cst_66 = arith.constant dense<0.000000e+00> : vector<1xf32>
    %174 = vector.multi_reduction <add>, %173, %cst_66 [1] : vector<1x8xf32> to vector<1xf32>
    %175 = vector.shape_cast %174 : vector<1xf32> to vector<1x1xf32>
    %176 = vector.broadcast %175 : vector<1x1xf32> to vector<1x8xf32>
    %177 = arith.divf %173, %176 : vector<1x8xf32>
    %cst_67 = arith.constant dense<0.000000e+00> : vector<1x32xf32>
    %178 = tpu.matmul %177, %10, %cst_67 {dimension_numbers = #tpu.dot_dimension_numbers<[1], [0], [0], [1], [0, 0, 1, 1], [], []>} : vector<1x8xf32>, vector<8x32xf32>, vector<1x32xf32> -> vector<1x32xf32>
    %c1_68 = arith.constant 1 : index
    %c0_69 = arith.constant 0 : index
    %c0_70 = arith.constant 0 : index
    %179 = vector.load %arg13[%c1_68, %c0_69, %c0_70] : memref<8x8x128xf32, #tpu.memory_space<vmem>>, vector<1x1x32xf32>
    %180 = vector.shape_cast %179 : vector<1x1x32xf32> to vector<1x32xf32>
    %181 = vector.shape_cast %178 : vector<1x32xf32> to vector<1x1x32xf32>
    tpu.vector_store %arg13[%c1_68, %c0_69, %c0_70], %181 {strides = array<i32>} : memref<8x8x128xf32, #tpu.memory_space<vmem>>, vector<1x1x32xf32>,
    %c1_71 = arith.constant 1 : index
    %c1_72 = arith.constant 1 : index
    %c0_73 = arith.constant 0 : index
    %182 = vector.load %arg13[%c1_71, %c1_72, %c0_73] : memref<8x8x128xf32, #tpu.memory_space<vmem>>, vector<1x1x32xf32>
    %183 = vector.shape_cast %182 : vector<1x1x32xf32> to vector<1x32xf32>
    %184 = vector.shape_cast %135 : vector<1x32xf32> to vector<1x1x32xf32>
    tpu.vector_store %arg13[%c1_71, %c1_72, %c0_73], %184 {strides = array<i32>} : memref<8x8x128xf32, #tpu.memory_space<vmem>>, vector<1x1x32xf32>,
    %c1_74 = arith.constant 1 : index
    %c2_75 = arith.constant 2 : index
    %c0_76 = arith.constant 0 : index
    %185 = vector.load %arg13[%c1_74, %c2_75, %c0_76] : memref<8x8x128xf32, #tpu.memory_space<vmem>>, vector<1x1x32xf32>
    %186 = vector.shape_cast %185 : vector<1x1x32xf32> to vector<1x32xf32>
    %187 = vector.shape_cast %165 : vector<1x32xf32> to vector<1x1x32xf32>
    tpu.vector_store %arg13[%c1_74, %c2_75, %c0_76], %187 {strides = array<i32>} : memref<8x8x128xf32, #tpu.memory_space<vmem>>, vector<1x1x32xf32>,
    %c1_77 = arith.constant 1 : index
    %c3_78 = arith.constant 3 : index
    %c0_79 = arith.constant 0 : index
    %188 = vector.load %arg13[%c1_77, %c3_78, %c0_79] : memref<8x8x128xf32, #tpu.memory_space<vmem>>, vector<1x1x8xf32>
    %189 = vector.shape_cast %188 : vector<1x1x8xf32> to vector<1x8xf32>
    %190 = vector.shape_cast %177 : vector<1x8xf32> to vector<1x1x8xf32>
    tpu.vector_store %arg13[%c1_77, %c3_78, %c0_79], %190 {strides = array<i32>} : memref<8x8x128xf32, #tpu.memory_space<vmem>>, vector<1x1x8xf32>,
    %c2_80 = arith.constant 2 : index
    %c0_81 = arith.constant 0 : index
    %c0_82 = arith.constant 0 : index
    %191 = vector.load %arg1[%c2_80, %c0_81, %c0_82] : memref<8x1x96xf32, #tpu.memory_space<vmem>>, vector<1x1x96xf32>
    %192 = vector.shape_cast %191 : vector<1x1x96xf32> to vector<1x96xf32>
    %cst_83 = arith.constant dense<0.000000e+00> : vector<1x96xf32>
    %193 = tpu.matmul %178, %3, %cst_83 {dimension_numbers = #tpu.dot_dimension_numbers<[1], [0], [0], [1], [0, 0, 1, 1], [], []>} : vector<1x32xf32>, vector<32x96xf32>, vector<1x96xf32> -> vector<1x96xf32>
    %194 = arith.addf %192, %193 : vector<1x96xf32>
    %cst_84 = arith.constant dense<0.000000e+00> : vector<1x96xf32>
    %195 = tpu.matmul %135, %4, %cst_84 {dimension_numbers = #tpu.dot_dimension_numbers<[1], [0], [0], [1], [0, 0, 1, 1], [], []>} : vector<1x32xf32>, vector<32x96xf32>, vector<1x96xf32> -> vector<1x96xf32>
    %196 = arith.addf %195, %5 : vector<1x96xf32>
    %197 = vector.extract_strided_slice %194 {offsets = [0, 0], sizes = [1, 32], strides = [1, 1]} : vector<1x96xf32> to vector<1x32xf32>
    %198 = vector.extract_strided_slice %196 {offsets = [0, 0], sizes = [1, 32], strides = [1, 1]} : vector<1x96xf32> to vector<1x32xf32>
    %199 = arith.addf %197, %198 : vector<1x32xf32>
    %200 = arith.negf %199 : vector<1x32xf32>
    %201 = math.exp %200 : vector<1x32xf32>
    %cst_85 = arith.constant 1.000000e+00 : f32
    %202 = vector.broadcast %cst_85 : f32 to vector<1x32xf32>
    %203 = arith.addf %202, %201 : vector<1x32xf32>
    %204 = arith.divf %202, %203 : vector<1x32xf32>
    %205 = vector.extract_strided_slice %194 {offsets = [0, 32], sizes = [1, 32], strides = [1, 1]} : vector<1x96xf32> to vector<1x32xf32>
    %206 = vector.extract_strided_slice %196 {offsets = [0, 32], sizes = [1, 32], strides = [1, 1]} : vector<1x96xf32> to vector<1x32xf32>
    %207 = arith.addf %205, %206 : vector<1x32xf32>
    %208 = arith.negf %207 : vector<1x32xf32>
    %209 = math.exp %208 : vector<1x32xf32>
    %cst_86 = arith.constant 1.000000e+00 : f32
    %210 = vector.broadcast %cst_86 : f32 to vector<1x32xf32>
    %211 = arith.addf %210, %209 : vector<1x32xf32>
    %212 = arith.divf %210, %211 : vector<1x32xf32>
    %213 = vector.extract_strided_slice %194 {offsets = [0, 64], sizes = [1, 32], strides = [1, 1]} : vector<1x96xf32> to vector<1x32xf32>
    %214 = vector.extract_strided_slice %196 {offsets = [0, 64], sizes = [1, 32], strides = [1, 1]} : vector<1x96xf32> to vector<1x32xf32>
    %215 = arith.mulf %204, %214 : vector<1x32xf32>
    %216 = arith.addf %213, %215 : vector<1x32xf32>
    %217 = math.tanh %216 : vector<1x32xf32>
    %cst_87 = arith.constant 1.000000e+00 : f32
    %218 = vector.broadcast %cst_87 : f32 to vector<1x32xf32>
    %219 = arith.subf %218, %212 : vector<1x32xf32>
    %220 = arith.mulf %219, %217 : vector<1x32xf32>
    %221 = arith.mulf %212, %135 : vector<1x32xf32>
    %222 = arith.addf %220, %221 : vector<1x32xf32>
    %cst_88 = arith.constant dense<0.000000e+00> : vector<1x96xf32>
    %223 = tpu.matmul %222, %6, %cst_88 {dimension_numbers = #tpu.dot_dimension_numbers<[1], [0], [0], [1], [0, 0, 1, 1], [], []>} : vector<1x32xf32>, vector<32x96xf32>, vector<1x96xf32> -> vector<1x96xf32>
    %224 = arith.addf %223, %7 : vector<1x96xf32>
    %cst_89 = arith.constant dense<0.000000e+00> : vector<1x96xf32>
    %225 = tpu.matmul %165, %8, %cst_89 {dimension_numbers = #tpu.dot_dimension_numbers<[1], [0], [0], [1], [0, 0, 1, 1], [], []>} : vector<1x32xf32>, vector<32x96xf32>, vector<1x96xf32> -> vector<1x96xf32>
    %226 = arith.addf %225, %9 : vector<1x96xf32>
    %227 = vector.extract_strided_slice %224 {offsets = [0, 0], sizes = [1, 32], strides = [1, 1]} : vector<1x96xf32> to vector<1x32xf32>
    %228 = vector.extract_strided_slice %226 {offsets = [0, 0], sizes = [1, 32], strides = [1, 1]} : vector<1x96xf32> to vector<1x32xf32>
    %229 = arith.addf %227, %228 : vector<1x32xf32>
    %230 = arith.negf %229 : vector<1x32xf32>
    %231 = math.exp %230 : vector<1x32xf32>
    %cst_90 = arith.constant 1.000000e+00 : f32
    %232 = vector.broadcast %cst_90 : f32 to vector<1x32xf32>
    %233 = arith.addf %232, %231 : vector<1x32xf32>
    %234 = arith.divf %232, %233 : vector<1x32xf32>
    %235 = vector.extract_strided_slice %224 {offsets = [0, 32], sizes = [1, 32], strides = [1, 1]} : vector<1x96xf32> to vector<1x32xf32>
    %236 = vector.extract_strided_slice %226 {offsets = [0, 32], sizes = [1, 32], strides = [1, 1]} : vector<1x96xf32> to vector<1x32xf32>
    %237 = arith.addf %235, %236 : vector<1x32xf32>
    %238 = arith.negf %237 : vector<1x32xf32>
    %239 = math.exp %238 : vector<1x32xf32>
    %cst_91 = arith.constant 1.000000e+00 : f32
    %240 = vector.broadcast %cst_91 : f32 to vector<1x32xf32>
    %241 = arith.addf %240, %239 : vector<1x32xf32>
    %242 = arith.divf %240, %241 : vector<1x32xf32>
    %243 = vector.extract_strided_slice %224 {offsets = [0, 64], sizes = [1, 32], strides = [1, 1]} : vector<1x96xf32> to vector<1x32xf32>
    %244 = vector.extract_strided_slice %226 {offsets = [0, 64], sizes = [1, 32], strides = [1, 1]} : vector<1x96xf32> to vector<1x32xf32>
    %245 = arith.mulf %234, %244 : vector<1x32xf32>
    %246 = arith.addf %243, %245 : vector<1x32xf32>
    %247 = math.tanh %246 : vector<1x32xf32>
    %cst_92 = arith.constant 1.000000e+00 : f32
    %248 = vector.broadcast %cst_92 : f32 to vector<1x32xf32>
    %249 = arith.subf %248, %242 : vector<1x32xf32>
    %250 = arith.mulf %249, %247 : vector<1x32xf32>
    %251 = arith.mulf %242, %165 : vector<1x32xf32>
    %252 = arith.addf %250, %251 : vector<1x32xf32>
    %253 = vector.extract_strided_slice %252 {offsets = [0, 0], sizes = [1, 1], strides = [1, 1]} : vector<1x32xf32> to vector<1x1xf32>
    %254 = vector.broadcast %253 : vector<1x1xf32> to vector<1x8xf32>
    %255 = arith.mulf %254, %11 : vector<1x8xf32>
    %cst_93 = arith.constant dense<0xFF800000> : vector<1xf32>
    %256 = vector.multi_reduction <maximumf>, %255, %cst_93 [1] : vector<1x8xf32> to vector<1xf32>
    %257 = vector.shape_cast %256 : vector<1xf32> to vector<1x1xf32>
    %258 = vector.broadcast %257 : vector<1x1xf32> to vector<1x8xf32>
    %259 = arith.subf %255, %258 : vector<1x8xf32>
    %260 = math.exp %259 : vector<1x8xf32>
    %cst_94 = arith.constant dense<0.000000e+00> : vector<1xf32>
    %261 = vector.multi_reduction <add>, %260, %cst_94 [1] : vector<1x8xf32> to vector<1xf32>
    %262 = vector.shape_cast %261 : vector<1xf32> to vector<1x1xf32>
    %263 = vector.broadcast %262 : vector<1x1xf32> to vector<1x8xf32>
    %264 = arith.divf %260, %263 : vector<1x8xf32>
    %cst_95 = arith.constant dense<0.000000e+00> : vector<1x32xf32>
    %265 = tpu.matmul %264, %10, %cst_95 {dimension_numbers = #tpu.dot_dimension_numbers<[1], [0], [0], [1], [0, 0, 1, 1], [], []>} : vector<1x8xf32>, vector<8x32xf32>, vector<1x32xf32> -> vector<1x32xf32>
    %c2_96 = arith.constant 2 : index
    %c0_97 = arith.constant 0 : index
    %c0_98 = arith.constant 0 : index
    %266 = vector.load %arg13[%c2_96, %c0_97, %c0_98] : memref<8x8x128xf32, #tpu.memory_space<vmem>>, vector<1x1x32xf32>
    %267 = vector.shape_cast %266 : vector<1x1x32xf32> to vector<1x32xf32>
    %268 = vector.shape_cast %265 : vector<1x32xf32> to vector<1x1x32xf32>
    tpu.vector_store %arg13[%c2_96, %c0_97, %c0_98], %268 {strides = array<i32>} : memref<8x8x128xf32, #tpu.memory_space<vmem>>, vector<1x1x32xf32>,
    %c2_99 = arith.constant 2 : index
    %c1_100 = arith.constant 1 : index
    %c0_101 = arith.constant 0 : index
    %269 = vector.load %arg13[%c2_99, %c1_100, %c0_101] : memref<8x8x128xf32, #tpu.memory_space<vmem>>, vector<1x1x32xf32>
    %270 = vector.shape_cast %269 : vector<1x1x32xf32> to vector<1x32xf32>
    %271 = vector.shape_cast %222 : vector<1x32xf32> to vector<1x1x32xf32>
    tpu.vector_store %arg13[%c2_99, %c1_100, %c0_101], %271 {strides = array<i32>} : memref<8x8x128xf32, #tpu.memory_space<vmem>>, vector<1x1x32xf32>,
    %c2_102 = arith.constant 2 : index
    %c2_103 = arith.constant 2 : index
    %c0_104 = arith.constant 0 : index
    %272 = vector.load %arg13[%c2_102, %c2_103, %c0_104] : memref<8x8x128xf32, #tpu.memory_space<vmem>>, vector<1x1x32xf32>
    %273 = vector.shape_cast %272 : vector<1x1x32xf32> to vector<1x32xf32>
    %274 = vector.shape_cast %252 : vector<1x32xf32> to vector<1x1x32xf32>
    tpu.vector_store %arg13[%c2_102, %c2_103, %c0_104], %274 {strides = array<i32>} : memref<8x8x128xf32, #tpu.memory_space<vmem>>, vector<1x1x32xf32>,
    %c2_105 = arith.constant 2 : index
    %c3_106 = arith.constant 3 : index
    %c0_107 = arith.constant 0 : index
    %275 = vector.load %arg13[%c2_105, %c3_106, %c0_107] : memref<8x8x128xf32, #tpu.memory_space<vmem>>, vector<1x1x8xf32>
    %276 = vector.shape_cast %275 : vector<1x1x8xf32> to vector<1x8xf32>
    %277 = vector.shape_cast %264 : vector<1x8xf32> to vector<1x1x8xf32>
    tpu.vector_store %arg13[%c2_105, %c3_106, %c0_107], %277 {strides = array<i32>} : memref<8x8x128xf32, #tpu.memory_space<vmem>>, vector<1x1x8xf32>,
    %c3_108 = arith.constant 3 : index
    %c0_109 = arith.constant 0 : index
    %c0_110 = arith.constant 0 : index
    %278 = vector.load %arg1[%c3_108, %c0_109, %c0_110] : memref<8x1x96xf32, #tpu.memory_space<vmem>>, vector<1x1x96xf32>
    %279 = vector.shape_cast %278 : vector<1x1x96xf32> to vector<1x96xf32>
    %cst_111 = arith.constant dense<0.000000e+00> : vector<1x96xf32>
    %280 = tpu.matmul %265, %3, %cst_111 {dimension_numbers = #tpu.dot_dimension_numbers<[1], [0], [0], [1], [0, 0, 1, 1], [], []>} : vector<1x32xf32>, vector<32x96xf32>, vector<1x96xf32> -> vector<1x96xf32>
    %281 = arith.addf %279, %280 : vector<1x96xf32>
    %cst_112 = arith.constant dense<0.000000e+00> : vector<1x96xf32>
    %282 = tpu.matmul %222, %4, %cst_112 {dimension_numbers = #tpu.dot_dimension_numbers<[1], [0], [0], [1], [0, 0, 1, 1], [], []>} : vector<1x32xf32>, vector<32x96xf32>, vector<1x96xf32> -> vector<1x96xf32>
    %283 = arith.addf %282, %5 : vector<1x96xf32>
    %284 = vector.extract_strided_slice %281 {offsets = [0, 0], sizes = [1, 32], strides = [1, 1]} : vector<1x96xf32> to vector<1x32xf32>
    %285 = vector.extract_strided_slice %283 {offsets = [0, 0], sizes = [1, 32], strides = [1, 1]} : vector<1x96xf32> to vector<1x32xf32>
    %286 = arith.addf %284, %285 : vector<1x32xf32>
    %287 = arith.negf %286 : vector<1x32xf32>
    %288 = math.exp %287 : vector<1x32xf32>
    %cst_113 = arith.constant 1.000000e+00 : f32
    %289 = vector.broadcast %cst_113 : f32 to vector<1x32xf32>
    %290 = arith.addf %289, %288 : vector<1x32xf32>
    %291 = arith.divf %289, %290 : vector<1x32xf32>
    %292 = vector.extract_strided_slice %281 {offsets = [0, 32], sizes = [1, 32], strides = [1, 1]} : vector<1x96xf32> to vector<1x32xf32>
    %293 = vector.extract_strided_slice %283 {offsets = [0, 32], sizes = [1, 32], strides = [1, 1]} : vector<1x96xf32> to vector<1x32xf32>
    %294 = arith.addf %292, %293 : vector<1x32xf32>
    %295 = arith.negf %294 : vector<1x32xf32>
    %296 = math.exp %295 : vector<1x32xf32>
    %cst_114 = arith.constant 1.000000e+00 : f32
    %297 = vector.broadcast %cst_114 : f32 to vector<1x32xf32>
    %298 = arith.addf %297, %296 : vector<1x32xf32>
    %299 = arith.divf %297, %298 : vector<1x32xf32>
    %300 = vector.extract_strided_slice %281 {offsets = [0, 64], sizes = [1, 32], strides = [1, 1]} : vector<1x96xf32> to vector<1x32xf32>
    %301 = vector.extract_strided_slice %283 {offsets = [0, 64], sizes = [1, 32], strides = [1, 1]} : vector<1x96xf32> to vector<1x32xf32>
    %302 = arith.mulf %291, %301 : vector<1x32xf32>
    %303 = arith.addf %300, %302 : vector<1x32xf32>
    %304 = math.tanh %303 : vector<1x32xf32>
    %cst_115 = arith.constant 1.000000e+00 : f32
    %305 = vector.broadcast %cst_115 : f32 to vector<1x32xf32>
    %306 = arith.subf %305, %299 : vector<1x32xf32>
    %307 = arith.mulf %306, %304 : vector<1x32xf32>
    %308 = arith.mulf %299, %222 : vector<1x32xf32>
    %309 = arith.addf %307, %308 : vector<1x32xf32>
    %cst_116 = arith.constant dense<0.000000e+00> : vector<1x96xf32>
    %310 = tpu.matmul %309, %6, %cst_116 {dimension_numbers = #tpu.dot_dimension_numbers<[1], [0], [0], [1], [0, 0, 1, 1], [], []>} : vector<1x32xf32>, vector<32x96xf32>, vector<1x96xf32> -> vector<1x96xf32>
    %311 = arith.addf %310, %7 : vector<1x96xf32>
    %cst_117 = arith.constant dense<0.000000e+00> : vector<1x96xf32>
    %312 = tpu.matmul %252, %8, %cst_117 {dimension_numbers = #tpu.dot_dimension_numbers<[1], [0], [0], [1], [0, 0, 1, 1], [], []>} : vector<1x32xf32>, vector<32x96xf32>, vector<1x96xf32> -> vector<1x96xf32>
    %313 = arith.addf %312, %9 : vector<1x96xf32>
    %314 = vector.extract_strided_slice %311 {offsets = [0, 0], sizes = [1, 32], strides = [1, 1]} : vector<1x96xf32> to vector<1x32xf32>
    %315 = vector.extract_strided_slice %313 {offsets = [0, 0], sizes = [1, 32], strides = [1, 1]} : vector<1x96xf32> to vector<1x32xf32>
    %316 = arith.addf %314, %315 : vector<1x32xf32>
    %317 = arith.negf %316 : vector<1x32xf32>
    %318 = math.exp %317 : vector<1x32xf32>
    %cst_118 = arith.constant 1.000000e+00 : f32
    %319 = vector.broadcast %cst_118 : f32 to vector<1x32xf32>
    %320 = arith.addf %319, %318 : vector<1x32xf32>
    %321 = arith.divf %319, %320 : vector<1x32xf32>
    %322 = vector.extract_strided_slice %311 {offsets = [0, 32], sizes = [1, 32], strides = [1, 1]} : vector<1x96xf32> to vector<1x32xf32>
    %323 = vector.extract_strided_slice %313 {offsets = [0, 32], sizes = [1, 32], strides = [1, 1]} : vector<1x96xf32> to vector<1x32xf32>
    %324 = arith.addf %322, %323 : vector<1x32xf32>
    %325 = arith.negf %324 : vector<1x32xf32>
    %326 = math.exp %325 : vector<1x32xf32>
    %cst_119 = arith.constant 1.000000e+00 : f32
    %327 = vector.broadcast %cst_119 : f32 to vector<1x32xf32>
    %328 = arith.addf %327, %326 : vector<1x32xf32>
    %329 = arith.divf %327, %328 : vector<1x32xf32>
    %330 = vector.extract_strided_slice %311 {offsets = [0, 64], sizes = [1, 32], strides = [1, 1]} : vector<1x96xf32> to vector<1x32xf32>
    %331 = vector.extract_strided_slice %313 {offsets = [0, 64], sizes = [1, 32], strides = [1, 1]} : vector<1x96xf32> to vector<1x32xf32>
    %332 = arith.mulf %321, %331 : vector<1x32xf32>
    %333 = arith.addf %330, %332 : vector<1x32xf32>
    %334 = math.tanh %333 : vector<1x32xf32>
    %cst_120 = arith.constant 1.000000e+00 : f32
    %335 = vector.broadcast %cst_120 : f32 to vector<1x32xf32>
    %336 = arith.subf %335, %329 : vector<1x32xf32>
    %337 = arith.mulf %336, %334 : vector<1x32xf32>
    %338 = arith.mulf %329, %252 : vector<1x32xf32>
    %339 = arith.addf %337, %338 : vector<1x32xf32>
    %340 = vector.extract_strided_slice %339 {offsets = [0, 0], sizes = [1, 1], strides = [1, 1]} : vector<1x32xf32> to vector<1x1xf32>
    %341 = vector.broadcast %340 : vector<1x1xf32> to vector<1x8xf32>
    %342 = arith.mulf %341, %11 : vector<1x8xf32>
    %cst_121 = arith.constant dense<0xFF800000> : vector<1xf32>
    %343 = vector.multi_reduction <maximumf>, %342, %cst_121 [1] : vector<1x8xf32> to vector<1xf32>
    %344 = vector.shape_cast %343 : vector<1xf32> to vector<1x1xf32>
    %345 = vector.broadcast %344 : vector<1x1xf32> to vector<1x8xf32>
    %346 = arith.subf %342, %345 : vector<1x8xf32>
    %347 = math.exp %346 : vector<1x8xf32>
    %cst_122 = arith.constant dense<0.000000e+00> : vector<1xf32>
    %348 = vector.multi_reduction <add>, %347, %cst_122 [1] : vector<1x8xf32> to vector<1xf32>
    %349 = vector.shape_cast %348 : vector<1xf32> to vector<1x1xf32>
    %350 = vector.broadcast %349 : vector<1x1xf32> to vector<1x8xf32>
    %351 = arith.divf %347, %350 : vector<1x8xf32>
    %cst_123 = arith.constant dense<0.000000e+00> : vector<1x32xf32>
    %352 = tpu.matmul %351, %10, %cst_123 {dimension_numbers = #tpu.dot_dimension_numbers<[1], [0], [0], [1], [0, 0, 1, 1], [], []>} : vector<1x8xf32>, vector<8x32xf32>, vector<1x32xf32> -> vector<1x32xf32>
    %c3_124 = arith.constant 3 : index
    %c0_125 = arith.constant 0 : index
    %c0_126 = arith.constant 0 : index
    %353 = vector.load %arg13[%c3_124, %c0_125, %c0_126] : memref<8x8x128xf32, #tpu.memory_space<vmem>>, vector<1x1x32xf32>
    %354 = vector.shape_cast %353 : vector<1x1x32xf32> to vector<1x32xf32>
    %355 = vector.shape_cast %352 : vector<1x32xf32> to vector<1x1x32xf32>
    tpu.vector_store %arg13[%c3_124, %c0_125, %c0_126], %355 {strides = array<i32>} : memref<8x8x128xf32, #tpu.memory_space<vmem>>, vector<1x1x32xf32>,
    %c3_127 = arith.constant 3 : index
    %c1_128 = arith.constant 1 : index
    %c0_129 = arith.constant 0 : index
    %356 = vector.load %arg13[%c3_127, %c1_128, %c0_129] : memref<8x8x128xf32, #tpu.memory_space<vmem>>, vector<1x1x32xf32>
    %357 = vector.shape_cast %356 : vector<1x1x32xf32> to vector<1x32xf32>
    %358 = vector.shape_cast %309 : vector<1x32xf32> to vector<1x1x32xf32>
    tpu.vector_store %arg13[%c3_127, %c1_128, %c0_129], %358 {strides = array<i32>} : memref<8x8x128xf32, #tpu.memory_space<vmem>>, vector<1x1x32xf32>,
    %c3_130 = arith.constant 3 : index
    %c2_131 = arith.constant 2 : index
    %c0_132 = arith.constant 0 : index
    %359 = vector.load %arg13[%c3_130, %c2_131, %c0_132] : memref<8x8x128xf32, #tpu.memory_space<vmem>>, vector<1x1x32xf32>
    %360 = vector.shape_cast %359 : vector<1x1x32xf32> to vector<1x32xf32>
    %361 = vector.shape_cast %339 : vector<1x32xf32> to vector<1x1x32xf32>
    tpu.vector_store %arg13[%c3_130, %c2_131, %c0_132], %361 {strides = array<i32>} : memref<8x8x128xf32, #tpu.memory_space<vmem>>, vector<1x1x32xf32>,
    %c3_133 = arith.constant 3 : index
    %c3_134 = arith.constant 3 : index
    %c0_135 = arith.constant 0 : index
    %362 = vector.load %arg13[%c3_133, %c3_134, %c0_135] : memref<8x8x128xf32, #tpu.memory_space<vmem>>, vector<1x1x8xf32>
    %363 = vector.shape_cast %362 : vector<1x1x8xf32> to vector<1x8xf32>
    %364 = vector.shape_cast %351 : vector<1x8xf32> to vector<1x1x8xf32>
    tpu.vector_store %arg13[%c3_133, %c3_134, %c0_135], %364 {strides = array<i32>} : memref<8x8x128xf32, #tpu.memory_space<vmem>>, vector<1x1x8xf32>,
    %c4 = arith.constant 4 : index
    %c0_136 = arith.constant 0 : index
    %c0_137 = arith.constant 0 : index
    %365 = vector.load %arg1[%c4, %c0_136, %c0_137] : memref<8x1x96xf32, #tpu.memory_space<vmem>>, vector<1x1x96xf32>
    %366 = vector.shape_cast %365 : vector<1x1x96xf32> to vector<1x96xf32>
    %cst_138 = arith.constant dense<0.000000e+00> : vector<1x96xf32>
    %367 = tpu.matmul %352, %3, %cst_138 {dimension_numbers = #tpu.dot_dimension_numbers<[1], [0], [0], [1], [0, 0, 1, 1], [], []>} : vector<1x32xf32>, vector<32x96xf32>, vector<1x96xf32> -> vector<1x96xf32>
    %368 = arith.addf %366, %367 : vector<1x96xf32>
    %cst_139 = arith.constant dense<0.000000e+00> : vector<1x96xf32>
    %369 = tpu.matmul %309, %4, %cst_139 {dimension_numbers = #tpu.dot_dimension_numbers<[1], [0], [0], [1], [0, 0, 1, 1], [], []>} : vector<1x32xf32>, vector<32x96xf32>, vector<1x96xf32> -> vector<1x96xf32>
    %370 = arith.addf %369, %5 : vector<1x96xf32>
    %371 = vector.extract_strided_slice %368 {offsets = [0, 0], sizes = [1, 32], strides = [1, 1]} : vector<1x96xf32> to vector<1x32xf32>
    %372 = vector.extract_strided_slice %370 {offsets = [0, 0], sizes = [1, 32], strides = [1, 1]} : vector<1x96xf32> to vector<1x32xf32>
    %373 = arith.addf %371, %372 : vector<1x32xf32>
    %374 = arith.negf %373 : vector<1x32xf32>
    %375 = math.exp %374 : vector<1x32xf32>
    %cst_140 = arith.constant 1.000000e+00 : f32
    %376 = vector.broadcast %cst_140 : f32 to vector<1x32xf32>
    %377 = arith.addf %376, %375 : vector<1x32xf32>
    %378 = arith.divf %376, %377 : vector<1x32xf32>
    %379 = vector.extract_strided_slice %368 {offsets = [0, 32], sizes = [1, 32], strides = [1, 1]} : vector<1x96xf32> to vector<1x32xf32>
    %380 = vector.extract_strided_slice %370 {offsets = [0, 32], sizes = [1, 32], strides = [1, 1]} : vector<1x96xf32> to vector<1x32xf32>
    %381 = arith.addf %379, %380 : vector<1x32xf32>
    %382 = arith.negf %381 : vector<1x32xf32>
    %383 = math.exp %382 : vector<1x32xf32>
    %cst_141 = arith.constant 1.000000e+00 : f32
    %384 = vector.broadcast %cst_141 : f32 to vector<1x32xf32>
    %385 = arith.addf %384, %383 : vector<1x32xf32>
    %386 = arith.divf %384, %385 : vector<1x32xf32>
    %387 = vector.extract_strided_slice %368 {offsets = [0, 64], sizes = [1, 32], strides = [1, 1]} : vector<1x96xf32> to vector<1x32xf32>
    %388 = vector.extract_strided_slice %370 {offsets = [0, 64], sizes = [1, 32], strides = [1, 1]} : vector<1x96xf32> to vector<1x32xf32>
    %389 = arith.mulf %378, %388 : vector<1x32xf32>
    %390 = arith.addf %387, %389 : vector<1x32xf32>
    %391 = math.tanh %390 : vector<1x32xf32>
    %cst_142 = arith.constant 1.000000e+00 : f32
    %392 = vector.broadcast %cst_142 : f32 to vector<1x32xf32>
    %393 = arith.subf %392, %386 : vector<1x32xf32>
    %394 = arith.mulf %393, %391 : vector<1x32xf32>
    %395 = arith.mulf %386, %309 : vector<1x32xf32>
    %396 = arith.addf %394, %395 : vector<1x32xf32>
    %cst_143 = arith.constant dense<0.000000e+00> : vector<1x96xf32>
    %397 = tpu.matmul %396, %6, %cst_143 {dimension_numbers = #tpu.dot_dimension_numbers<[1], [0], [0], [1], [0, 0, 1, 1], [], []>} : vector<1x32xf32>, vector<32x96xf32>, vector<1x96xf32> -> vector<1x96xf32>
    %398 = arith.addf %397, %7 : vector<1x96xf32>
    %cst_144 = arith.constant dense<0.000000e+00> : vector<1x96xf32>
    %399 = tpu.matmul %339, %8, %cst_144 {dimension_numbers = #tpu.dot_dimension_numbers<[1], [0], [0], [1], [0, 0, 1, 1], [], []>} : vector<1x32xf32>, vector<32x96xf32>, vector<1x96xf32> -> vector<1x96xf32>
    %400 = arith.addf %399, %9 : vector<1x96xf32>
    %401 = vector.extract_strided_slice %398 {offsets = [0, 0], sizes = [1, 32], strides = [1, 1]} : vector<1x96xf32> to vector<1x32xf32>
    %402 = vector.extract_strided_slice %400 {offsets = [0, 0], sizes = [1, 32], strides = [1, 1]} : vector<1x96xf32> to vector<1x32xf32>
    %403 = arith.addf %401, %402 : vector<1x32xf32>
    %404 = arith.negf %403 : vector<1x32xf32>
    %405 = math.exp %404 : vector<1x32xf32>
    %cst_145 = arith.constant 1.000000e+00 : f32
    %406 = vector.broadcast %cst_145 : f32 to vector<1x32xf32>
    %407 = arith.addf %406, %405 : vector<1x32xf32>
    %408 = arith.divf %406, %407 : vector<1x32xf32>
    %409 = vector.extract_strided_slice %398 {offsets = [0, 32], sizes = [1, 32], strides = [1, 1]} : vector<1x96xf32> to vector<1x32xf32>
    %410 = vector.extract_strided_slice %400 {offsets = [0, 32], sizes = [1, 32], strides = [1, 1]} : vector<1x96xf32> to vector<1x32xf32>
    %411 = arith.addf %409, %410 : vector<1x32xf32>
    %412 = arith.negf %411 : vector<1x32xf32>
    %413 = math.exp %412 : vector<1x32xf32>
    %cst_146 = arith.constant 1.000000e+00 : f32
    %414 = vector.broadcast %cst_146 : f32 to vector<1x32xf32>
    %415 = arith.addf %414, %413 : vector<1x32xf32>
    %416 = arith.divf %414, %415 : vector<1x32xf32>
    %417 = vector.extract_strided_slice %398 {offsets = [0, 64], sizes = [1, 32], strides = [1, 1]} : vector<1x96xf32> to vector<1x32xf32>
    %418 = vector.extract_strided_slice %400 {offsets = [0, 64], sizes = [1, 32], strides = [1, 1]} : vector<1x96xf32> to vector<1x32xf32>
    %419 = arith.mulf %408, %418 : vector<1x32xf32>
    %420 = arith.addf %417, %419 : vector<1x32xf32>
    %421 = math.tanh %420 : vector<1x32xf32>
    %cst_147 = arith.constant 1.000000e+00 : f32
    %422 = vector.broadcast %cst_147 : f32 to vector<1x32xf32>
    %423 = arith.subf %422, %416 : vector<1x32xf32>
    %424 = arith.mulf %423, %421 : vector<1x32xf32>
    %425 = arith.mulf %416, %339 : vector<1x32xf32>
    %426 = arith.addf %424, %425 : vector<1x32xf32>
    %427 = vector.extract_strided_slice %426 {offsets = [0, 0], sizes = [1, 1], strides = [1, 1]} : vector<1x32xf32> to vector<1x1xf32>
    %428 = vector.broadcast %427 : vector<1x1xf32> to vector<1x8xf32>
    %429 = arith.mulf %428, %11 : vector<1x8xf32>
    %cst_148 = arith.constant dense<0xFF800000> : vector<1xf32>
    %430 = vector.multi_reduction <maximumf>, %429, %cst_148 [1] : vector<1x8xf32> to vector<1xf32>
    %431 = vector.shape_cast %430 : vector<1xf32> to vector<1x1xf32>
    %432 = vector.broadcast %431 : vector<1x1xf32> to vector<1x8xf32>
    %433 = arith.subf %429, %432 : vector<1x8xf32>
    %434 = math.exp %433 : vector<1x8xf32>
    %cst_149 = arith.constant dense<0.000000e+00> : vector<1xf32>
    %435 = vector.multi_reduction <add>, %434, %cst_149 [1] : vector<1x8xf32> to vector<1xf32>
    %436 = vector.shape_cast %435 : vector<1xf32> to vector<1x1xf32>
    %437 = vector.broadcast %436 : vector<1x1xf32> to vector<1x8xf32>
    %438 = arith.divf %434, %437 : vector<1x8xf32>
    %cst_150 = arith.constant dense<0.000000e+00> : vector<1x32xf32>
    %439 = tpu.matmul %438, %10, %cst_150 {dimension_numbers = #tpu.dot_dimension_numbers<[1], [0], [0], [1], [0, 0, 1, 1], [], []>} : vector<1x8xf32>, vector<8x32xf32>, vector<1x32xf32> -> vector<1x32xf32>
    %c4_151 = arith.constant 4 : index
    %c0_152 = arith.constant 0 : index
    %c0_153 = arith.constant 0 : index
    %440 = vector.load %arg13[%c4_151, %c0_152, %c0_153] : memref<8x8x128xf32, #tpu.memory_space<vmem>>, vector<1x1x32xf32>
    %441 = vector.shape_cast %440 : vector<1x1x32xf32> to vector<1x32xf32>
    %442 = vector.shape_cast %439 : vector<1x32xf32> to vector<1x1x32xf32>
    tpu.vector_store %arg13[%c4_151, %c0_152, %c0_153], %442 {strides = array<i32>} : memref<8x8x128xf32, #tpu.memory_space<vmem>>, vector<1x1x32xf32>,
    %c4_154 = arith.constant 4 : index
    %c1_155 = arith.constant 1 : index
    %c0_156 = arith.constant 0 : index
    %443 = vector.load %arg13[%c4_154, %c1_155, %c0_156] : memref<8x8x128xf32, #tpu.memory_space<vmem>>, vector<1x1x32xf32>
    %444 = vector.shape_cast %443 : vector<1x1x32xf32> to vector<1x32xf32>
    %445 = vector.shape_cast %396 : vector<1x32xf32> to vector<1x1x32xf32>
    tpu.vector_store %arg13[%c4_154, %c1_155, %c0_156], %445 {strides = array<i32>} : memref<8x8x128xf32, #tpu.memory_space<vmem>>, vector<1x1x32xf32>,
    %c4_157 = arith.constant 4 : index
    %c2_158 = arith.constant 2 : index
    %c0_159 = arith.constant 0 : index
    %446 = vector.load %arg13[%c4_157, %c2_158, %c0_159] : memref<8x8x128xf32, #tpu.memory_space<vmem>>, vector<1x1x32xf32>
    %447 = vector.shape_cast %446 : vector<1x1x32xf32> to vector<1x32xf32>
    %448 = vector.shape_cast %426 : vector<1x32xf32> to vector<1x1x32xf32>
    tpu.vector_store %arg13[%c4_157, %c2_158, %c0_159], %448 {strides = array<i32>} : memref<8x8x128xf32, #tpu.memory_space<vmem>>, vector<1x1x32xf32>,
    %c4_160 = arith.constant 4 : index
    %c3_161 = arith.constant 3 : index
    %c0_162 = arith.constant 0 : index
    %449 = vector.load %arg13[%c4_160, %c3_161, %c0_162] : memref<8x8x128xf32, #tpu.memory_space<vmem>>, vector<1x1x8xf32>
    %450 = vector.shape_cast %449 : vector<1x1x8xf32> to vector<1x8xf32>
    %451 = vector.shape_cast %438 : vector<1x8xf32> to vector<1x1x8xf32>
    tpu.vector_store %arg13[%c4_160, %c3_161, %c0_162], %451 {strides = array<i32>} : memref<8x8x128xf32, #tpu.memory_space<vmem>>, vector<1x1x8xf32>,
    %c5 = arith.constant 5 : index
    %c0_163 = arith.constant 0 : index
    %c0_164 = arith.constant 0 : index
    %452 = vector.load %arg1[%c5, %c0_163, %c0_164] : memref<8x1x96xf32, #tpu.memory_space<vmem>>, vector<1x1x96xf32>
    %453 = vector.shape_cast %452 : vector<1x1x96xf32> to vector<1x96xf32>
    %cst_165 = arith.constant dense<0.000000e+00> : vector<1x96xf32>
    %454 = tpu.matmul %439, %3, %cst_165 {dimension_numbers = #tpu.dot_dimension_numbers<[1], [0], [0], [1], [0, 0, 1, 1], [], []>} : vector<1x32xf32>, vector<32x96xf32>, vector<1x96xf32> -> vector<1x96xf32>
    %455 = arith.addf %453, %454 : vector<1x96xf32>
    %cst_166 = arith.constant dense<0.000000e+00> : vector<1x96xf32>
    %456 = tpu.matmul %396, %4, %cst_166 {dimension_numbers = #tpu.dot_dimension_numbers<[1], [0], [0], [1], [0, 0, 1, 1], [], []>} : vector<1x32xf32>, vector<32x96xf32>, vector<1x96xf32> -> vector<1x96xf32>
    %457 = arith.addf %456, %5 : vector<1x96xf32>
    %458 = vector.extract_strided_slice %455 {offsets = [0, 0], sizes = [1, 32], strides = [1, 1]} : vector<1x96xf32> to vector<1x32xf32>
    %459 = vector.extract_strided_slice %457 {offsets = [0, 0], sizes = [1, 32], strides = [1, 1]} : vector<1x96xf32> to vector<1x32xf32>
    %460 = arith.addf %458, %459 : vector<1x32xf32>
    %461 = arith.negf %460 : vector<1x32xf32>
    %462 = math.exp %461 : vector<1x32xf32>
    %cst_167 = arith.constant 1.000000e+00 : f32
    %463 = vector.broadcast %cst_167 : f32 to vector<1x32xf32>
    %464 = arith.addf %463, %462 : vector<1x32xf32>
    %465 = arith.divf %463, %464 : vector<1x32xf32>
    %466 = vector.extract_strided_slice %455 {offsets = [0, 32], sizes = [1, 32], strides = [1, 1]} : vector<1x96xf32> to vector<1x32xf32>
    %467 = vector.extract_strided_slice %457 {offsets = [0, 32], sizes = [1, 32], strides = [1, 1]} : vector<1x96xf32> to vector<1x32xf32>
    %468 = arith.addf %466, %467 : vector<1x32xf32>
    %469 = arith.negf %468 : vector<1x32xf32>
    %470 = math.exp %469 : vector<1x32xf32>
    %cst_168 = arith.constant 1.000000e+00 : f32
    %471 = vector.broadcast %cst_168 : f32 to vector<1x32xf32>
    %472 = arith.addf %471, %470 : vector<1x32xf32>
    %473 = arith.divf %471, %472 : vector<1x32xf32>
    %474 = vector.extract_strided_slice %455 {offsets = [0, 64], sizes = [1, 32], strides = [1, 1]} : vector<1x96xf32> to vector<1x32xf32>
    %475 = vector.extract_strided_slice %457 {offsets = [0, 64], sizes = [1, 32], strides = [1, 1]} : vector<1x96xf32> to vector<1x32xf32>
    %476 = arith.mulf %465, %475 : vector<1x32xf32>
    %477 = arith.addf %474, %476 : vector<1x32xf32>
    %478 = math.tanh %477 : vector<1x32xf32>
    %cst_169 = arith.constant 1.000000e+00 : f32
    %479 = vector.broadcast %cst_169 : f32 to vector<1x32xf32>
    %480 = arith.subf %479, %473 : vector<1x32xf32>
    %481 = arith.mulf %480, %478 : vector<1x32xf32>
    %482 = arith.mulf %473, %396 : vector<1x32xf32>
    %483 = arith.addf %481, %482 : vector<1x32xf32>
    %cst_170 = arith.constant dense<0.000000e+00> : vector<1x96xf32>
    %484 = tpu.matmul %483, %6, %cst_170 {dimension_numbers = #tpu.dot_dimension_numbers<[1], [0], [0], [1], [0, 0, 1, 1], [], []>} : vector<1x32xf32>, vector<32x96xf32>, vector<1x96xf32> -> vector<1x96xf32>
    %485 = arith.addf %484, %7 : vector<1x96xf32>
    %cst_171 = arith.constant dense<0.000000e+00> : vector<1x96xf32>
    %486 = tpu.matmul %426, %8, %cst_171 {dimension_numbers = #tpu.dot_dimension_numbers<[1], [0], [0], [1], [0, 0, 1, 1], [], []>} : vector<1x32xf32>, vector<32x96xf32>, vector<1x96xf32> -> vector<1x96xf32>
    %487 = arith.addf %486, %9 : vector<1x96xf32>
    %488 = vector.extract_strided_slice %485 {offsets = [0, 0], sizes = [1, 32], strides = [1, 1]} : vector<1x96xf32> to vector<1x32xf32>
    %489 = vector.extract_strided_slice %487 {offsets = [0, 0], sizes = [1, 32], strides = [1, 1]} : vector<1x96xf32> to vector<1x32xf32>
    %490 = arith.addf %488, %489 : vector<1x32xf32>
    %491 = arith.negf %490 : vector<1x32xf32>
    %492 = math.exp %491 : vector<1x32xf32>
    %cst_172 = arith.constant 1.000000e+00 : f32
    %493 = vector.broadcast %cst_172 : f32 to vector<1x32xf32>
    %494 = arith.addf %493, %492 : vector<1x32xf32>
    %495 = arith.divf %493, %494 : vector<1x32xf32>
    %496 = vector.extract_strided_slice %485 {offsets = [0, 32], sizes = [1, 32], strides = [1, 1]} : vector<1x96xf32> to vector<1x32xf32>
    %497 = vector.extract_strided_slice %487 {offsets = [0, 32], sizes = [1, 32], strides = [1, 1]} : vector<1x96xf32> to vector<1x32xf32>
    %498 = arith.addf %496, %497 : vector<1x32xf32>
    %499 = arith.negf %498 : vector<1x32xf32>
    %500 = math.exp %499 : vector<1x32xf32>
    %cst_173 = arith.constant 1.000000e+00 : f32
    %501 = vector.broadcast %cst_173 : f32 to vector<1x32xf32>
    %502 = arith.addf %501, %500 : vector<1x32xf32>
    %503 = arith.divf %501, %502 : vector<1x32xf32>
    %504 = vector.extract_strided_slice %485 {offsets = [0, 64], sizes = [1, 32], strides = [1, 1]} : vector<1x96xf32> to vector<1x32xf32>
    %505 = vector.extract_strided_slice %487 {offsets = [0, 64], sizes = [1, 32], strides = [1, 1]} : vector<1x96xf32> to vector<1x32xf32>
    %506 = arith.mulf %495, %505 : vector<1x32xf32>
    %507 = arith.addf %504, %506 : vector<1x32xf32>
    %508 = math.tanh %507 : vector<1x32xf32>
    %cst_174 = arith.constant 1.000000e+00 : f32
    %509 = vector.broadcast %cst_174 : f32 to vector<1x32xf32>
    %510 = arith.subf %509, %503 : vector<1x32xf32>
    %511 = arith.mulf %510, %508 : vector<1x32xf32>
    %512 = arith.mulf %503, %426 : vector<1x32xf32>
    %513 = arith.addf %511, %512 : vector<1x32xf32>
    %514 = vector.extract_strided_slice %513 {offsets = [0, 0], sizes = [1, 1], strides = [1, 1]} : vector<1x32xf32> to vector<1x1xf32>
    %515 = vector.broadcast %514 : vector<1x1xf32> to vector<1x8xf32>
    %516 = arith.mulf %515, %11 : vector<1x8xf32>
    %cst_175 = arith.constant dense<0xFF800000> : vector<1xf32>
    %517 = vector.multi_reduction <maximumf>, %516, %cst_175 [1] : vector<1x8xf32> to vector<1xf32>
    %518 = vector.shape_cast %517 : vector<1xf32> to vector<1x1xf32>
    %519 = vector.broadcast %518 : vector<1x1xf32> to vector<1x8xf32>
    %520 = arith.subf %516, %519 : vector<1x8xf32>
    %521 = math.exp %520 : vector<1x8xf32>
    %cst_176 = arith.constant dense<0.000000e+00> : vector<1xf32>
    %522 = vector.multi_reduction <add>, %521, %cst_176 [1] : vector<1x8xf32> to vector<1xf32>
    %523 = vector.shape_cast %522 : vector<1xf32> to vector<1x1xf32>
    %524 = vector.broadcast %523 : vector<1x1xf32> to vector<1x8xf32>
    %525 = arith.divf %521, %524 : vector<1x8xf32>
    %cst_177 = arith.constant dense<0.000000e+00> : vector<1x32xf32>
    %526 = tpu.matmul %525, %10, %cst_177 {dimension_numbers = #tpu.dot_dimension_numbers<[1], [0], [0], [1], [0, 0, 1, 1], [], []>} : vector<1x8xf32>, vector<8x32xf32>, vector<1x32xf32> -> vector<1x32xf32>
    %c5_178 = arith.constant 5 : index
    %c0_179 = arith.constant 0 : index
    %c0_180 = arith.constant 0 : index
    %527 = vector.load %arg13[%c5_178, %c0_179, %c0_180] : memref<8x8x128xf32, #tpu.memory_space<vmem>>, vector<1x1x32xf32>
    %528 = vector.shape_cast %527 : vector<1x1x32xf32> to vector<1x32xf32>
    %529 = vector.shape_cast %526 : vector<1x32xf32> to vector<1x1x32xf32>
    tpu.vector_store %arg13[%c5_178, %c0_179, %c0_180], %529 {strides = array<i32>} : memref<8x8x128xf32, #tpu.memory_space<vmem>>, vector<1x1x32xf32>,
    %c5_181 = arith.constant 5 : index
    %c1_182 = arith.constant 1 : index
    %c0_183 = arith.constant 0 : index
    %530 = vector.load %arg13[%c5_181, %c1_182, %c0_183] : memref<8x8x128xf32, #tpu.memory_space<vmem>>, vector<1x1x32xf32>
    %531 = vector.shape_cast %530 : vector<1x1x32xf32> to vector<1x32xf32>
    %532 = vector.shape_cast %483 : vector<1x32xf32> to vector<1x1x32xf32>
    tpu.vector_store %arg13[%c5_181, %c1_182, %c0_183], %532 {strides = array<i32>} : memref<8x8x128xf32, #tpu.memory_space<vmem>>, vector<1x1x32xf32>,
    %c5_184 = arith.constant 5 : index
    %c2_185 = arith.constant 2 : index
    %c0_186 = arith.constant 0 : index
    %533 = vector.load %arg13[%c5_184, %c2_185, %c0_186] : memref<8x8x128xf32, #tpu.memory_space<vmem>>, vector<1x1x32xf32>
    %534 = vector.shape_cast %533 : vector<1x1x32xf32> to vector<1x32xf32>
    %535 = vector.shape_cast %513 : vector<1x32xf32> to vector<1x1x32xf32>
    tpu.vector_store %arg13[%c5_184, %c2_185, %c0_186], %535 {strides = array<i32>} : memref<8x8x128xf32, #tpu.memory_space<vmem>>, vector<1x1x32xf32>,
    %c5_187 = arith.constant 5 : index
    %c3_188 = arith.constant 3 : index
    %c0_189 = arith.constant 0 : index
    %536 = vector.load %arg13[%c5_187, %c3_188, %c0_189] : memref<8x8x128xf32, #tpu.memory_space<vmem>>, vector<1x1x8xf32>
    %537 = vector.shape_cast %536 : vector<1x1x8xf32> to vector<1x8xf32>
    %538 = vector.shape_cast %525 : vector<1x8xf32> to vector<1x1x8xf32>
    tpu.vector_store %arg13[%c5_187, %c3_188, %c0_189], %538 {strides = array<i32>} : memref<8x8x128xf32, #tpu.memory_space<vmem>>, vector<1x1x8xf32>,
    %c6 = arith.constant 6 : index
    %c0_190 = arith.constant 0 : index
    %c0_191 = arith.constant 0 : index
    %539 = vector.load %arg1[%c6, %c0_190, %c0_191] : memref<8x1x96xf32, #tpu.memory_space<vmem>>, vector<1x1x96xf32>
    %540 = vector.shape_cast %539 : vector<1x1x96xf32> to vector<1x96xf32>
    %cst_192 = arith.constant dense<0.000000e+00> : vector<1x96xf32>
    %541 = tpu.matmul %526, %3, %cst_192 {dimension_numbers = #tpu.dot_dimension_numbers<[1], [0], [0], [1], [0, 0, 1, 1], [], []>} : vector<1x32xf32>, vector<32x96xf32>, vector<1x96xf32> -> vector<1x96xf32>
    %542 = arith.addf %540, %541 : vector<1x96xf32>
    %cst_193 = arith.constant dense<0.000000e+00> : vector<1x96xf32>
    %543 = tpu.matmul %483, %4, %cst_193 {dimension_numbers = #tpu.dot_dimension_numbers<[1], [0], [0], [1], [0, 0, 1, 1], [], []>} : vector<1x32xf32>, vector<32x96xf32>, vector<1x96xf32> -> vector<1x96xf32>
    %544 = arith.addf %543, %5 : vector<1x96xf32>
    %545 = vector.extract_strided_slice %542 {offsets = [0, 0], sizes = [1, 32], strides = [1, 1]} : vector<1x96xf32> to vector<1x32xf32>
    %546 = vector.extract_strided_slice %544 {offsets = [0, 0], sizes = [1, 32], strides = [1, 1]} : vector<1x96xf32> to vector<1x32xf32>
    %547 = arith.addf %545, %546 : vector<1x32xf32>
    %548 = arith.negf %547 : vector<1x32xf32>
    %549 = math.exp %548 : vector<1x32xf32>
    %cst_194 = arith.constant 1.000000e+00 : f32
    %550 = vector.broadcast %cst_194 : f32 to vector<1x32xf32>
    %551 = arith.addf %550, %549 : vector<1x32xf32>
    %552 = arith.divf %550, %551 : vector<1x32xf32>
    %553 = vector.extract_strided_slice %542 {offsets = [0, 32], sizes = [1, 32], strides = [1, 1]} : vector<1x96xf32> to vector<1x32xf32>
    %554 = vector.extract_strided_slice %544 {offsets = [0, 32], sizes = [1, 32], strides = [1, 1]} : vector<1x96xf32> to vector<1x32xf32>
    %555 = arith.addf %553, %554 : vector<1x32xf32>
    %556 = arith.negf %555 : vector<1x32xf32>
    %557 = math.exp %556 : vector<1x32xf32>
    %cst_195 = arith.constant 1.000000e+00 : f32
    %558 = vector.broadcast %cst_195 : f32 to vector<1x32xf32>
    %559 = arith.addf %558, %557 : vector<1x32xf32>
    %560 = arith.divf %558, %559 : vector<1x32xf32>
    %561 = vector.extract_strided_slice %542 {offsets = [0, 64], sizes = [1, 32], strides = [1, 1]} : vector<1x96xf32> to vector<1x32xf32>
    %562 = vector.extract_strided_slice %544 {offsets = [0, 64], sizes = [1, 32], strides = [1, 1]} : vector<1x96xf32> to vector<1x32xf32>
    %563 = arith.mulf %552, %562 : vector<1x32xf32>
    %564 = arith.addf %561, %563 : vector<1x32xf32>
    %565 = math.tanh %564 : vector<1x32xf32>
    %cst_196 = arith.constant 1.000000e+00 : f32
    %566 = vector.broadcast %cst_196 : f32 to vector<1x32xf32>
    %567 = arith.subf %566, %560 : vector<1x32xf32>
    %568 = arith.mulf %567, %565 : vector<1x32xf32>
    %569 = arith.mulf %560, %483 : vector<1x32xf32>
    %570 = arith.addf %568, %569 : vector<1x32xf32>
    %cst_197 = arith.constant dense<0.000000e+00> : vector<1x96xf32>
    %571 = tpu.matmul %570, %6, %cst_197 {dimension_numbers = #tpu.dot_dimension_numbers<[1], [0], [0], [1], [0, 0, 1, 1], [], []>} : vector<1x32xf32>, vector<32x96xf32>, vector<1x96xf32> -> vector<1x96xf32>
    %572 = arith.addf %571, %7 : vector<1x96xf32>
    %cst_198 = arith.constant dense<0.000000e+00> : vector<1x96xf32>
    %573 = tpu.matmul %513, %8, %cst_198 {dimension_numbers = #tpu.dot_dimension_numbers<[1], [0], [0], [1], [0, 0, 1, 1], [], []>} : vector<1x32xf32>, vector<32x96xf32>, vector<1x96xf32> -> vector<1x96xf32>
    %574 = arith.addf %573, %9 : vector<1x96xf32>
    %575 = vector.extract_strided_slice %572 {offsets = [0, 0], sizes = [1, 32], strides = [1, 1]} : vector<1x96xf32> to vector<1x32xf32>
    %576 = vector.extract_strided_slice %574 {offsets = [0, 0], sizes = [1, 32], strides = [1, 1]} : vector<1x96xf32> to vector<1x32xf32>
    %577 = arith.addf %575, %576 : vector<1x32xf32>
    %578 = arith.negf %577 : vector<1x32xf32>
    %579 = math.exp %578 : vector<1x32xf32>
    %cst_199 = arith.constant 1.000000e+00 : f32
    %580 = vector.broadcast %cst_199 : f32 to vector<1x32xf32>
    %581 = arith.addf %580, %579 : vector<1x32xf32>
    %582 = arith.divf %580, %581 : vector<1x32xf32>
    %583 = vector.extract_strided_slice %572 {offsets = [0, 32], sizes = [1, 32], strides = [1, 1]} : vector<1x96xf32> to vector<1x32xf32>
    %584 = vector.extract_strided_slice %574 {offsets = [0, 32], sizes = [1, 32], strides = [1, 1]} : vector<1x96xf32> to vector<1x32xf32>
    %585 = arith.addf %583, %584 : vector<1x32xf32>
    %586 = arith.negf %585 : vector<1x32xf32>
    %587 = math.exp %586 : vector<1x32xf32>
    %cst_200 = arith.constant 1.000000e+00 : f32
    %588 = vector.broadcast %cst_200 : f32 to vector<1x32xf32>
    %589 = arith.addf %588, %587 : vector<1x32xf32>
    %590 = arith.divf %588, %589 : vector<1x32xf32>
    %591 = vector.extract_strided_slice %572 {offsets = [0, 64], sizes = [1, 32], strides = [1, 1]} : vector<1x96xf32> to vector<1x32xf32>
    %592 = vector.extract_strided_slice %574 {offsets = [0, 64], sizes = [1, 32], strides = [1, 1]} : vector<1x96xf32> to vector<1x32xf32>
    %593 = arith.mulf %582, %592 : vector<1x32xf32>
    %594 = arith.addf %591, %593 : vector<1x32xf32>
    %595 = math.tanh %594 : vector<1x32xf32>
    %cst_201 = arith.constant 1.000000e+00 : f32
    %596 = vector.broadcast %cst_201 : f32 to vector<1x32xf32>
    %597 = arith.subf %596, %590 : vector<1x32xf32>
    %598 = arith.mulf %597, %595 : vector<1x32xf32>
    %599 = arith.mulf %590, %513 : vector<1x32xf32>
    %600 = arith.addf %598, %599 : vector<1x32xf32>
    %601 = vector.extract_strided_slice %600 {offsets = [0, 0], sizes = [1, 1], strides = [1, 1]} : vector<1x32xf32> to vector<1x1xf32>
    %602 = vector.broadcast %601 : vector<1x1xf32> to vector<1x8xf32>
    %603 = arith.mulf %602, %11 : vector<1x8xf32>
    %cst_202 = arith.constant dense<0xFF800000> : vector<1xf32>
    %604 = vector.multi_reduction <maximumf>, %603, %cst_202 [1] : vector<1x8xf32> to vector<1xf32>
    %605 = vector.shape_cast %604 : vector<1xf32> to vector<1x1xf32>
    %606 = vector.broadcast %605 : vector<1x1xf32> to vector<1x8xf32>
    %607 = arith.subf %603, %606 : vector<1x8xf32>
    %608 = math.exp %607 : vector<1x8xf32>
    %cst_203 = arith.constant dense<0.000000e+00> : vector<1xf32>
    %609 = vector.multi_reduction <add>, %608, %cst_203 [1] : vector<1x8xf32> to vector<1xf32>
    %610 = vector.shape_cast %609 : vector<1xf32> to vector<1x1xf32>
    %611 = vector.broadcast %610 : vector<1x1xf32> to vector<1x8xf32>
    %612 = arith.divf %608, %611 : vector<1x8xf32>
    %cst_204 = arith.constant dense<0.000000e+00> : vector<1x32xf32>
    %613 = tpu.matmul %612, %10, %cst_204 {dimension_numbers = #tpu.dot_dimension_numbers<[1], [0], [0], [1], [0, 0, 1, 1], [], []>} : vector<1x8xf32>, vector<8x32xf32>, vector<1x32xf32> -> vector<1x32xf32>
    %c6_205 = arith.constant 6 : index
    %c0_206 = arith.constant 0 : index
    %c0_207 = arith.constant 0 : index
    %614 = vector.load %arg13[%c6_205, %c0_206, %c0_207] : memref<8x8x128xf32, #tpu.memory_space<vmem>>, vector<1x1x32xf32>
    %615 = vector.shape_cast %614 : vector<1x1x32xf32> to vector<1x32xf32>
    %616 = vector.shape_cast %613 : vector<1x32xf32> to vector<1x1x32xf32>
    tpu.vector_store %arg13[%c6_205, %c0_206, %c0_207], %616 {strides = array<i32>} : memref<8x8x128xf32, #tpu.memory_space<vmem>>, vector<1x1x32xf32>,
    %c6_208 = arith.constant 6 : index
    %c1_209 = arith.constant 1 : index
    %c0_210 = arith.constant 0 : index
    %617 = vector.load %arg13[%c6_208, %c1_209, %c0_210] : memref<8x8x128xf32, #tpu.memory_space<vmem>>, vector<1x1x32xf32>
    %618 = vector.shape_cast %617 : vector<1x1x32xf32> to vector<1x32xf32>
    %619 = vector.shape_cast %570 : vector<1x32xf32> to vector<1x1x32xf32>
    tpu.vector_store %arg13[%c6_208, %c1_209, %c0_210], %619 {strides = array<i32>} : memref<8x8x128xf32, #tpu.memory_space<vmem>>, vector<1x1x32xf32>,
    %c6_211 = arith.constant 6 : index
    %c2_212 = arith.constant 2 : index
    %c0_213 = arith.constant 0 : index
    %620 = vector.load %arg13[%c6_211, %c2_212, %c0_213] : memref<8x8x128xf32, #tpu.memory_space<vmem>>, vector<1x1x32xf32>
    %621 = vector.shape_cast %620 : vector<1x1x32xf32> to vector<1x32xf32>
    %622 = vector.shape_cast %600 : vector<1x32xf32> to vector<1x1x32xf32>
    tpu.vector_store %arg13[%c6_211, %c2_212, %c0_213], %622 {strides = array<i32>} : memref<8x8x128xf32, #tpu.memory_space<vmem>>, vector<1x1x32xf32>,
    %c6_214 = arith.constant 6 : index
    %c3_215 = arith.constant 3 : index
    %c0_216 = arith.constant 0 : index
    %623 = vector.load %arg13[%c6_214, %c3_215, %c0_216] : memref<8x8x128xf32, #tpu.memory_space<vmem>>, vector<1x1x8xf32>
    %624 = vector.shape_cast %623 : vector<1x1x8xf32> to vector<1x8xf32>
    %625 = vector.shape_cast %612 : vector<1x8xf32> to vector<1x1x8xf32>
    tpu.vector_store %arg13[%c6_214, %c3_215, %c0_216], %625 {strides = array<i32>} : memref<8x8x128xf32, #tpu.memory_space<vmem>>, vector<1x1x8xf32>,
    %c7 = arith.constant 7 : index
    %c0_217 = arith.constant 0 : index
    %c0_218 = arith.constant 0 : index
    %626 = vector.load %arg1[%c7, %c0_217, %c0_218] : memref<8x1x96xf32, #tpu.memory_space<vmem>>, vector<1x1x96xf32>
    %627 = vector.shape_cast %626 : vector<1x1x96xf32> to vector<1x96xf32>
    %cst_219 = arith.constant dense<0.000000e+00> : vector<1x96xf32>
    %628 = tpu.matmul %613, %3, %cst_219 {dimension_numbers = #tpu.dot_dimension_numbers<[1], [0], [0], [1], [0, 0, 1, 1], [], []>} : vector<1x32xf32>, vector<32x96xf32>, vector<1x96xf32> -> vector<1x96xf32>
    %629 = arith.addf %627, %628 : vector<1x96xf32>
    %cst_220 = arith.constant dense<0.000000e+00> : vector<1x96xf32>
    %630 = tpu.matmul %570, %4, %cst_220 {dimension_numbers = #tpu.dot_dimension_numbers<[1], [0], [0], [1], [0, 0, 1, 1], [], []>} : vector<1x32xf32>, vector<32x96xf32>, vector<1x96xf32> -> vector<1x96xf32>
    %631 = arith.addf %630, %5 : vector<1x96xf32>
    %632 = vector.extract_strided_slice %629 {offsets = [0, 0], sizes = [1, 32], strides = [1, 1]} : vector<1x96xf32> to vector<1x32xf32>
    %633 = vector.extract_strided_slice %631 {offsets = [0, 0], sizes = [1, 32], strides = [1, 1]} : vector<1x96xf32> to vector<1x32xf32>
    %634 = arith.addf %632, %633 : vector<1x32xf32>
    %635 = arith.negf %634 : vector<1x32xf32>
    %636 = math.exp %635 : vector<1x32xf32>
    %cst_221 = arith.constant 1.000000e+00 : f32
    %637 = vector.broadcast %cst_221 : f32 to vector<1x32xf32>
    %638 = arith.addf %637, %636 : vector<1x32xf32>
    %639 = arith.divf %637, %638 : vector<1x32xf32>
    %640 = vector.extract_strided_slice %629 {offsets = [0, 32], sizes = [1, 32], strides = [1, 1]} : vector<1x96xf32> to vector<1x32xf32>
    %641 = vector.extract_strided_slice %631 {offsets = [0, 32], sizes = [1, 32], strides = [1, 1]} : vector<1x96xf32> to vector<1x32xf32>
    %642 = arith.addf %640, %641 : vector<1x32xf32>
    %643 = arith.negf %642 : vector<1x32xf32>
    %644 = math.exp %643 : vector<1x32xf32>
    %cst_222 = arith.constant 1.000000e+00 : f32
    %645 = vector.broadcast %cst_222 : f32 to vector<1x32xf32>
    %646 = arith.addf %645, %644 : vector<1x32xf32>
    %647 = arith.divf %645, %646 : vector<1x32xf32>
    %648 = vector.extract_strided_slice %629 {offsets = [0, 64], sizes = [1, 32], strides = [1, 1]} : vector<1x96xf32> to vector<1x32xf32>
    %649 = vector.extract_strided_slice %631 {offsets = [0, 64], sizes = [1, 32], strides = [1, 1]} : vector<1x96xf32> to vector<1x32xf32>
    %650 = arith.mulf %639, %649 : vector<1x32xf32>
    %651 = arith.addf %648, %650 : vector<1x32xf32>
    %652 = math.tanh %651 : vector<1x32xf32>
    %cst_223 = arith.constant 1.000000e+00 : f32
    %653 = vector.broadcast %cst_223 : f32 to vector<1x32xf32>
    %654 = arith.subf %653, %647 : vector<1x32xf32>
    %655 = arith.mulf %654, %652 : vector<1x32xf32>
    %656 = arith.mulf %647, %570 : vector<1x32xf32>
    %657 = arith.addf %655, %656 : vector<1x32xf32>
    %cst_224 = arith.constant dense<0.000000e+00> : vector<1x96xf32>
    %658 = tpu.matmul %657, %6, %cst_224 {dimension_numbers = #tpu.dot_dimension_numbers<[1], [0], [0], [1], [0, 0, 1, 1], [], []>} : vector<1x32xf32>, vector<32x96xf32>, vector<1x96xf32> -> vector<1x96xf32>
    %659 = arith.addf %658, %7 : vector<1x96xf32>
    %cst_225 = arith.constant dense<0.000000e+00> : vector<1x96xf32>
    %660 = tpu.matmul %600, %8, %cst_225 {dimension_numbers = #tpu.dot_dimension_numbers<[1], [0], [0], [1], [0, 0, 1, 1], [], []>} : vector<1x32xf32>, vector<32x96xf32>, vector<1x96xf32> -> vector<1x96xf32>
    %661 = arith.addf %660, %9 : vector<1x96xf32>
    %662 = vector.extract_strided_slice %659 {offsets = [0, 0], sizes = [1, 32], strides = [1, 1]} : vector<1x96xf32> to vector<1x32xf32>
    %663 = vector.extract_strided_slice %661 {offsets = [0, 0], sizes = [1, 32], strides = [1, 1]} : vector<1x96xf32> to vector<1x32xf32>
    %664 = arith.addf %662, %663 : vector<1x32xf32>
    %665 = arith.negf %664 : vector<1x32xf32>
    %666 = math.exp %665 : vector<1x32xf32>
    %cst_226 = arith.constant 1.000000e+00 : f32
    %667 = vector.broadcast %cst_226 : f32 to vector<1x32xf32>
    %668 = arith.addf %667, %666 : vector<1x32xf32>
    %669 = arith.divf %667, %668 : vector<1x32xf32>
    %670 = vector.extract_strided_slice %659 {offsets = [0, 32], sizes = [1, 32], strides = [1, 1]} : vector<1x96xf32> to vector<1x32xf32>
    %671 = vector.extract_strided_slice %661 {offsets = [0, 32], sizes = [1, 32], strides = [1, 1]} : vector<1x96xf32> to vector<1x32xf32>
    %672 = arith.addf %670, %671 : vector<1x32xf32>
    %673 = arith.negf %672 : vector<1x32xf32>
    %674 = math.exp %673 : vector<1x32xf32>
    %cst_227 = arith.constant 1.000000e+00 : f32
    %675 = vector.broadcast %cst_227 : f32 to vector<1x32xf32>
    %676 = arith.addf %675, %674 : vector<1x32xf32>
    %677 = arith.divf %675, %676 : vector<1x32xf32>
    %678 = vector.extract_strided_slice %659 {offsets = [0, 64], sizes = [1, 32], strides = [1, 1]} : vector<1x96xf32> to vector<1x32xf32>
    %679 = vector.extract_strided_slice %661 {offsets = [0, 64], sizes = [1, 32], strides = [1, 1]} : vector<1x96xf32> to vector<1x32xf32>
    %680 = arith.mulf %669, %679 : vector<1x32xf32>
    %681 = arith.addf %678, %680 : vector<1x32xf32>
    %682 = math.tanh %681 : vector<1x32xf32>
    %cst_228 = arith.constant 1.000000e+00 : f32
    %683 = vector.broadcast %cst_228 : f32 to vector<1x32xf32>
    %684 = arith.subf %683, %677 : vector<1x32xf32>
    %685 = arith.mulf %684, %682 : vector<1x32xf32>
    %686 = arith.mulf %677, %600 : vector<1x32xf32>
    %687 = arith.addf %685, %686 : vector<1x32xf32>
    %688 = vector.extract_strided_slice %687 {offsets = [0, 0], sizes = [1, 1], strides = [1, 1]} : vector<1x32xf32> to vector<1x1xf32>
    %689 = vector.broadcast %688 : vector<1x1xf32> to vector<1x8xf32>
    %690 = arith.mulf %689, %11 : vector<1x8xf32>
    %cst_229 = arith.constant dense<0xFF800000> : vector<1xf32>
    %691 = vector.multi_reduction <maximumf>, %690, %cst_229 [1] : vector<1x8xf32> to vector<1xf32>
    %692 = vector.shape_cast %691 : vector<1xf32> to vector<1x1xf32>
    %693 = vector.broadcast %692 : vector<1x1xf32> to vector<1x8xf32>
    %694 = arith.subf %690, %693 : vector<1x8xf32>
    %695 = math.exp %694 : vector<1x8xf32>
    %cst_230 = arith.constant dense<0.000000e+00> : vector<1xf32>
    %696 = vector.multi_reduction <add>, %695, %cst_230 [1] : vector<1x8xf32> to vector<1xf32>
    %697 = vector.shape_cast %696 : vector<1xf32> to vector<1x1xf32>
    %698 = vector.broadcast %697 : vector<1x1xf32> to vector<1x8xf32>
    %699 = arith.divf %695, %698 : vector<1x8xf32>
    %cst_231 = arith.constant dense<0.000000e+00> : vector<1x32xf32>
    %700 = tpu.matmul %699, %10, %cst_231 {dimension_numbers = #tpu.dot_dimension_numbers<[1], [0], [0], [1], [0, 0, 1, 1], [], []>} : vector<1x8xf32>, vector<8x32xf32>, vector<1x32xf32> -> vector<1x32xf32>
    %c7_232 = arith.constant 7 : index
    %c0_233 = arith.constant 0 : index
    %c0_234 = arith.constant 0 : index
    %701 = vector.load %arg13[%c7_232, %c0_233, %c0_234] : memref<8x8x128xf32, #tpu.memory_space<vmem>>, vector<1x1x32xf32>
    %702 = vector.shape_cast %701 : vector<1x1x32xf32> to vector<1x32xf32>
    %703 = vector.shape_cast %700 : vector<1x32xf32> to vector<1x1x32xf32>
    tpu.vector_store %arg13[%c7_232, %c0_233, %c0_234], %703 {strides = array<i32>} : memref<8x8x128xf32, #tpu.memory_space<vmem>>, vector<1x1x32xf32>,
    %c7_235 = arith.constant 7 : index
    %c1_236 = arith.constant 1 : index
    %c0_237 = arith.constant 0 : index
    %704 = vector.load %arg13[%c7_235, %c1_236, %c0_237] : memref<8x8x128xf32, #tpu.memory_space<vmem>>, vector<1x1x32xf32>
    %705 = vector.shape_cast %704 : vector<1x1x32xf32> to vector<1x32xf32>
    %706 = vector.shape_cast %657 : vector<1x32xf32> to vector<1x1x32xf32>
    tpu.vector_store %arg13[%c7_235, %c1_236, %c0_237], %706 {strides = array<i32>} : memref<8x8x128xf32, #tpu.memory_space<vmem>>, vector<1x1x32xf32>,
    %c7_238 = arith.constant 7 : index
    %c2_239 = arith.constant 2 : index
    %c0_240 = arith.constant 0 : index
    %707 = vector.load %arg13[%c7_238, %c2_239, %c0_240] : memref<8x8x128xf32, #tpu.memory_space<vmem>>, vector<1x1x32xf32>
    %708 = vector.shape_cast %707 : vector<1x1x32xf32> to vector<1x32xf32>
    %709 = vector.shape_cast %687 : vector<1x32xf32> to vector<1x1x32xf32>
    tpu.vector_store %arg13[%c7_238, %c2_239, %c0_240], %709 {strides = array<i32>} : memref<8x8x128xf32, #tpu.memory_space<vmem>>, vector<1x1x32xf32>,
    %c7_241 = arith.constant 7 : index
    %c3_242 = arith.constant 3 : index
    %c0_243 = arith.constant 0 : index
    %710 = vector.load %arg13[%c7_241, %c3_242, %c0_243] : memref<8x8x128xf32, #tpu.memory_space<vmem>>, vector<1x1x8xf32>
    %711 = vector.shape_cast %710 : vector<1x1x8xf32> to vector<1x8xf32>
    %712 = vector.shape_cast %699 : vector<1x8xf32> to vector<1x1x8xf32>
    tpu.vector_store %arg13[%c7_241, %c3_242, %c0_243], %712 {strides = array<i32>} : memref<8x8x128xf32, #tpu.memory_space<vmem>>, vector<1x1x8xf32>,
    %c0_244 = arith.constant 0 : index
    %c0_245 = arith.constant 0 : index
    %713 = vector.load %arg14[%c0_244, %c0_245] : memref<1x32xf32, #tpu.memory_space<vmem>>, vector<1x32xf32>
    tpu.vector_store %arg14[%c0_244, %c0_245], %657 {strides = array<i32>} : memref<1x32xf32, #tpu.memory_space<vmem>>, vector<1x32xf32>,
    %c0_246 = arith.constant 0 : index
    %c0_247 = arith.constant 0 : index
    %714 = vector.load %arg15[%c0_246, %c0_247] : memref<1x32xf32, #tpu.memory_space<vmem>>, vector<1x32xf32>
    tpu.vector_store %arg15[%c0_246, %c0_247], %687 {strides = array<i32>} : memref<1x32xf32, #tpu.memory_space<vmem>>, vector<1x32xf32>,
    %c0_248 = arith.constant 0 : index
    %c0_249 = arith.constant 0 : index
    %715 = vector.load %arg16[%c0_248, %c0_249] : memref<1x32xf32, #tpu.memory_space<vmem>>, vector<1x32xf32>
    tpu.vector_store %arg16[%c0_248, %c0_249], %700 {strides = array<i32>} : memref<1x32xf32, #tpu.memory_space<vmem>>, vector<1x32xf32>,
    return
  }
  func.func @transform_0(%arg0: i32) -> (i32, i32, i32) {
    %c0_i32 = arith.constant 0 : i32
    %c0_i32_0 = arith.constant 0 : i32
    %c0_i32_1 = arith.constant 0 : i32
    return %arg0, %c0_i32, %c0_i32_0 : i32, i32, i32
  }
  func.func @transform_1(%arg0: i32) -> (i32, i32) {
    %c0_i32 = arith.constant 0 : i32
    %c0_i32_0 = arith.constant 0 : i32
    %c0_i32_1 = arith.constant 0 : i32
    return %c0_i32, %c0_i32_0 : i32, i32
  }
  func.func @transform_2(%arg0: i32) -> (i32, i32, i32) {
    %c0_i32 = arith.constant 0 : i32
    %c0_i32_0 = arith.constant 0 : i32
    %c0_i32_1 = arith.constant 0 : i32
    %c0_i32_2 = arith.constant 0 : i32
    return %c0_i32, %c0_i32_0, %c0_i32_1 : i32, i32, i32
  }
  func.func @transform_3(%arg0: i32) -> (i32, i32) {
    %c0_i32 = arith.constant 0 : i32
    %c0_i32_0 = arith.constant 0 : i32
    %c0_i32_1 = arith.constant 0 : i32
    return %c0_i32, %c0_i32_0 : i32, i32
  }
  func.func @transform_4(%arg0: i32) -> (i32, i32) {
    %c0_i32 = arith.constant 0 : i32
    %c0_i32_0 = arith.constant 0 : i32
    %c0_i32_1 = arith.constant 0 : i32
    return %c0_i32, %c0_i32_0 : i32, i32
  }
  func.func @transform_5(%arg0: i32) -> (i32, i32) {
    %c0_i32 = arith.constant 0 : i32
    %c0_i32_0 = arith.constant 0 : i32
    %c0_i32_1 = arith.constant 0 : i32
    return %c0_i32, %c0_i32_0 : i32, i32
  }
  func.func @transform_6(%arg0: i32) -> (i32, i32) {
    %c0_i32 = arith.constant 0 : i32
    %c0_i32_0 = arith.constant 0 : i32
    %c0_i32_1 = arith.constant 0 : i32
    return %c0_i32, %c0_i32_0 : i32, i32
  }
  func.func @transform_7(%arg0: i32) -> (i32, i32) {
    %c0_i32 = arith.constant 0 : i32
    %c0_i32_0 = arith.constant 0 : i32
    %c0_i32_1 = arith.constant 0 : i32
    return %c0_i32, %c0_i32_0 : i32, i32
  }
  func.func @transform_8(%arg0: i32) -> (i32, i32) {
    %c0_i32 = arith.constant 0 : i32
    %c0_i32_0 = arith.constant 0 : i32
    %c0_i32_1 = arith.constant 0 : i32
    return %c0_i32, %c0_i32_0 : i32, i32
  }
  func.func @transform_9(%arg0: i32) -> (i32, i32) {
    %c0_i32 = arith.constant 0 : i32
    %c0_i32_0 = arith.constant 0 : i32
    %c0_i32_1 = arith.constant 0 : i32
    return %c0_i32, %c0_i32_0 : i32, i32
  }
  func.func @transform_10(%arg0: i32) -> (i32, i32) {
    %c0_i32 = arith.constant 0 : i32
    %c0_i32_0 = arith.constant 0 : i32
    %c0_i32_1 = arith.constant 0 : i32
    return %c0_i32, %c0_i32_0 : i32, i32
  }
  func.func @transform_11(%arg0: i32) -> (i32, i32) {
    %c0_i32 = arith.constant 0 : i32
    %c0_i32_0 = arith.constant 0 : i32
    %c0_i32_1 = arith.constant 0 : i32
    return %c0_i32, %c0_i32_0 : i32, i32
  }
  func.func @transform_12(%arg0: i32) -> (i32, i32, i32) {
    %c0_i32 = arith.constant 0 : i32
    %c0_i32_0 = arith.constant 0 : i32
    %c0_i32_1 = arith.constant 0 : i32
    return %arg0, %c0_i32, %c0_i32_0 : i32, i32, i32
  }
}

</mosaic_0001>

<llo_original>
// kernel: tpu_custom_call.1
$region0: #{tpu_custom_call.1}
  #allocation0 [shape = 'u32[]', space=smem, size = 0x4, offset = 0x4, fixed_abs, tag = 'smem constant byte address 0x4 - core index']
  #allocation1 [shape = 'u32[144,128]{1,0:T(1,128)}', space=vmem, size = 0x12000, scoped, tag = 'internal scratch']
  #allocation2 [shape = 'f32[1,32]{1,0:T(1,128)}', space=vmem, size = 0x200, scoped, tag = 'scratch operand']
  #allocation3 [shape = 'f32[1,32]{1,0:T(1,128)}', space=vmem, size = 0x200, scoped, tag = 'scratch operand']
  #allocation4 [shape = 'f32[1,32]{1,0:T(1,128)}', space=vmem, size = 0x200, scoped, tag = 'scratch operand']
  %s0 = inlined_call_operand.hbm [shape: f32[8,1,96], index: 0, kind: input, shape index: {}]
  %s1 = inlined_call_operand.vmem [shape: f32[1,32], index: 1, kind: input, shape index: {}]
  %s2 = inlined_call_operand.vmem [shape: f32[2,1,32], index: 2, kind: input, shape index: {}]
  %s3 = inlined_call_operand.hbm [shape: f32[8,32], index: 3, kind: input, shape index: {}]
  %s4 = inlined_call_operand.vmem [shape: f32[1,8], index: 4, kind: input, shape index: {}]
  %s5 = inlined_call_operand.hbm [shape: f32[32,96], index: 5, kind: input, shape index: {}]
  %s6 = inlined_call_operand.hbm [shape: f32[32,96], index: 6, kind: input, shape index: {}]
  %s7 = inlined_call_operand.vmem [shape: f32[1,96], index: 7, kind: input, shape index: {}]
  %s8 = inlined_call_operand.hbm [shape: f32[32,96], index: 8, kind: input, shape index: {}]
  %s9 = inlined_call_operand.hbm [shape: f32[1,96], index: 9, kind: input, shape index: {}]
  %s10 = inlined_call_operand.vmem [shape: f32[32,96], index: 10, kind: input, shape index: {}]
  %s11 = inlined_call_operand.vmem [shape: f32[1,96], index: 11, kind: input, shape index: {}]
  %s12 = inlined_call_operand.hbm [shape: f32[8,8,128], index: 12, kind: output, shape index: {}]
  %s13 = sld [smem:[#allocation0]]
  $region86: #{tpu_custom_call.1} parent=0
    _
  %s15 = ssub.s32 1, %s13
  %s16 = scalar_select 0, %s15, %s13
  $region1: #{tpu_custom_call.1} parent=0
    #allocation5 [shape = 'u8[4096]{0}', space=vmem, size = 0x1000, scoped, tag = 'input window, operand 0, single buffered']
    #allocation6 [shape = 's32[1]{0}', space=sflag, size = 0x4, scoped, tag = 'scoped memory for tpu_custom_call.1']
    #allocation7 [shape = 's32[1]{0}', space=sflag, size = 0x4, scoped, tag = 'scoped memory for tpu_custom_call.1']
    #allocation8 [shape = 'u8[4096]{0}', space=vmem, size = 0x1000, scoped, tag = 'input window, operand 3, single buffered']
    #allocation9 [shape = 's32[1]{0}', space=sflag, size = 0x4, scoped, tag = 'scoped memory for tpu_custom_call.1']
    #allocation10 [shape = 'u8[16384]{0}', space=vmem, size = 0x4000, scoped, tag = 'input window, operand 5, single buffered']
    #allocation11 [shape = 'u8[16384]{0}', space=vmem, size = 0x4000, scoped, tag = 'input window, operand 6, single buffered']
    #allocation12 [shape = 's32[1]{0}', space=sflag, size = 0x4, scoped, tag = 'scoped memory for tpu_custom_call.1']
    #allocation13 [shape = 'u8[16384]{0}', space=vmem, size = 0x4000, scoped, tag = 'input window, operand 8, single buffered']
    #allocation14 [shape = 'u8[512]{0}', space=vmem, size = 0x400, scoped, tag = 'input window, operand 9, single buffered']
    #allocation15 [shape = 's32[1]{0}', space=sflag, size = 0x4, scoped, tag = 'scoped memory for tpu_custom_call.1']
    #allocation16 [shape = 'u8[32768]{0}', space=vmem, size = 0x8000, scoped, tag = 'output window, operand 0, single buffered']
    %17 = vsyncpa [#allocation6], 0
    %18 = vsyncpa [#allocation9], 0
    %19 = vsyncpa [#allocation12], 0
    %20 = vsyncpa [#allocation15], 0
    %21 = vsyncpa [#allocation7], 0
    // Predicated region
    $region2: #{tpu_custom_call.1} parent=1 // pred_check
      _
    $region3: #{tpu_custom_call.1} parent=1 // pred_check_branch
      %23 = sbr.rel (0) target = $region5
    $region4: #{tpu_custom_call.1} parent=1 // pred_region
      %s25 = ssub.s32 128, 128
      %26 = vsyncadd [#allocation6], %s25
      %s27 = sshll.u32 [#allocation5], 4
      %s28 = int_to_ptr.vmem [resolvable:$true] %s27
      %33 = dma.hbm_to_vmem [thread:$0]  %s0, 128, %s28, [#allocation6], 16, 16, 1
    $region5: #{tpu_custom_call.1} parent=1 // pred_fallthru
      _
    // Predicated region
    $region6: #{tpu_custom_call.1} parent=1 // pred_check
      _
    $region7: #{tpu_custom_call.1} parent=1 // pred_check_branch
      %35 = sbr.rel (0) target = $region9
    $region8: #{tpu_custom_call.1} parent=1 // pred_region
      _
    $region9: #{tpu_custom_call.1} parent=1 // pred_fallthru
      _
    // Predicated region
    $region10: #{tpu_custom_call.1} parent=1 // pred_check
      _
    $region11: #{tpu_custom_call.1} parent=1 // pred_check_branch
      %37 = sbr.rel (0) target = $region13
    $region12: #{tpu_custom_call.1} parent=1 // pred_region
      _
    $region13: #{tpu_custom_call.1} parent=1 // pred_fallthru
      _
    // Predicated region
    $region14: #{tpu_custom_call.1} parent=1 // pred_check
      _
    $region15: #{tpu_custom_call.1} parent=1 // pred_check_branch
      %39 = sbr.rel (0) target = $region17
    $region16: #{tpu_custom_call.1} parent=1 // pred_region
      %s41 = ssub.s32 128, 128
      %42 = vsyncadd [#allocation9], %s41
      %s44 = sshll.u32 [#allocation8], 4
      %s45 = int_to_ptr.vmem [resolvable:$true] %s44
      %47 = dma.hbm_to_vmem [thread:$0]  %s3, 128, %s45, [#allocation9]
    $region17: #{tpu_custom_call.1} parent=1 // pred_fallthru
      _
    // Predicated region
    $region18: #{tpu_custom_call.1} parent=1 // pred_check
      _
    $region19: #{tpu_custom_call.1} parent=1 // pred_check_branch
      %49 = sbr.rel (0) target = $region21
    $region20: #{tpu_custom_call.1} parent=1 // pred_region
      _
    $region21: #{tpu_custom_call.1} parent=1 // pred_fallthru
      _
    // Predicated region
    $region22: #{tpu_custom_call.1} parent=1 // pred_check
      _
    $region23: #{tpu_custom_call.1} parent=1 // pred_check_branch
      %51 = sbr.rel (0) target = $region25
    $region24: #{tpu_custom_call.1} parent=1 // pred_region
      %s53 = ssub.s32 512, 512
      %54 = vsyncadd [#allocation9], %s53
      %s55 = sshll.u32 [#allocation10], 4
      %s56 = int_to_ptr.vmem [resolvable:$true] %s55
      %61 = dma.hbm_to_vmem [thread:$0]  %s5, 512, %s56, [#allocation9], 128, 128, 8
    $region25: #{tpu_custom_call.1} parent=1 // pred_fallthru
      _
    // Predicated region
    $region26: #{tpu_custom_call.1} parent=1 // pred_check
      _
    $region27: #{tpu_custom_call.1} parent=1 // pred_check_branch
      %63 = sbr.rel (0) target = $region29
    $region28: #{tpu_custom_call.1} parent=1 // pred_region
      %s65 = ssub.s32 512, 512
      %66 = vsyncadd [#allocation12], %s65
      %s67 = sshll.u32 [#allocation11], 4
      %s68 = int_to_ptr.vmem [resolvable:$true] %s67
      %73 = dma.hbm_to_vmem [thread:$0]  %s6, 512, %s68, [#allocation12], 128, 128, 8
    $region29: #{tpu_custom_call.1} parent=1 // pred_fallthru
      _
    // Predicated region
    $region30: #{tpu_custom_call.1} parent=1 // pred_check
      _
    $region31: #{tpu_custom_call.1} parent=1 // pred_check_branch
      %75 = sbr.rel (0) target = $region33
    $region32: #{tpu_custom_call.1} parent=1 // pred_region
      _
    $region33: #{tpu_custom_call.1} parent=1 // pred_fallthru
      _
    // Predicated region
    $region34: #{tpu_custom_call.1} parent=1 // pred_check
      _
    $region35: #{tpu_custom_call.1} parent=1 // pred_check_branch
      %77 = sbr.rel (0) target = $region37
    $region36: #{tpu_custom_call.1} parent=1 // pred_region
      %s79 = ssub.s32 512, 512
      %80 = vsyncadd [#allocation12], %s79
      %s81 = sshll.u32 [#allocation13], 4
      %s82 = int_to_ptr.vmem [resolvable:$true] %s81
      %87 = dma.hbm_to_vmem [thread:$0]  %s8, 512, %s82, [#allocation12], 128, 128, 8
    $region37: #{tpu_custom_call.1} parent=1 // pred_fallthru
      _
    // Predicated region
    $region38: #{tpu_custom_call.1} parent=1 // pred_check
      _
    $region39: #{tpu_custom_call.1} parent=1 // pred_check_branch
      %89 = sbr.rel (0) target = $region41
    $region40: #{tpu_custom_call.1} parent=1 // pred_region
      %s91 = ssub.s32 16, 16
      %92 = vsyncadd [#allocation15], %s91
      %s94 = sshll.u32 [#allocation14], 4
      %s95 = int_to_ptr.vmem [resolvable:$true] %s94
      %97 = dma.hbm_to_vmem [thread:$0]  %s9, 16, %s95, [#allocation15]
    $region41: #{tpu_custom_call.1} parent=1 // pred_fallthru
      _
    // Predicated region
    $region42: #{tpu_custom_call.1} parent=1 // pred_check
      _
    $region43: #{tpu_custom_call.1} parent=1 // pred_check_branch
      %99 = sbr.rel (0) target = $region45
    $region44: #{tpu_custom_call.1} parent=1 // pred_region
      _
    $region45: #{tpu_custom_call.1} parent=1 // pred_fallthru
      _
    // Predicated region
    $region46: #{tpu_custom_call.1} parent=1 // pred_check
      _
    $region47: #{tpu_custom_call.1} parent=1 // pred_check_branch
      %101 = sbr.rel (0) target = $region49
    $region48: #{tpu_custom_call.1} parent=1 // pred_region
      _
    $region49: #{tpu_custom_call.1} parent=1 // pred_fallthru
      _
    // Predicated region
    $region50: #{tpu_custom_call.1} parent=1 // pred_check
      _
    $region51: #{tpu_custom_call.1} parent=1 // pred_check_branch
      %103 = sbr.rel (0) target = $region53
    $region52: #{tpu_custom_call.1} parent=1 // pred_region
      %104 = dma.done [#allocation6], 128
    $region53: #{tpu_custom_call.1} parent=1 // pred_fallthru
      _
    // Predicated region
    $region54: #{tpu_custom_call.1} parent=1 // pred_check
      _
    $region55: #{tpu_custom_call.1} parent=1 // pred_check_branch
      %106 = sbr.rel (0) target = $region57
    $region56: #{tpu_custom_call.1} parent=1 // pred_region
      %107 = dma.done [#allocation9], 128
    $region57: #{tpu_custom_call.1} parent=1 // pred_fallthru
      _
    // Predicated region
    $region58: #{tpu_custom_call.1} parent=1 // pred_check
      _
    $region59: #{tpu_custom_call.1} parent=1 // pred_check_branch
      %109 = sbr.rel (0) target = $region61
    $region60: #{tpu_custom_call.1} parent=1 // pred_region
      %110 = dma.done [#allocation9], 512
    $region61: #{tpu_custom_call.1} parent=1 // pred_fallthru
      _
    // Predicated region
    $region62: #{tpu_custom_call.1} parent=1 // pred_check
      _
    $region63: #{tpu_custom_call.1} parent=1 // pred_check_branch
      %112 = sbr.rel (0) target = $region65
    $region64: #{tpu_custom_call.1} parent=1 // pred_region
      %113 = dma.done [#allocation12], 512
    $region65: #{tpu_custom_call.1} parent=1 // pred_fallthru
      _
    // Predicated region
    $region66: #{tpu_custom_call.1} parent=1 // pred_check
      _
    $region67: #{tpu_custom_call.1} parent=1 // pred_check_branch
      %115 = sbr.rel (0) target = $region69
    $region68: #{tpu_custom_call.1} parent=1 // pred_region
      %116 = dma.done [#allocation12], 512
    $region69: #{tpu_custom_call.1} parent=1 // pred_fallthru
      _
    // Predicated region
    $region70: #{tpu_custom_call.1} parent=1 // pred_check
      _
    $region71: #{tpu_custom_call.1} parent=1 // pred_check_branch
      %118 = sbr.rel (0) target = $region73
    $region72: #{tpu_custom_call.1} parent=1 // pred_region
      %119 = dma.done [#allocation15], 16
    $region73: #{tpu_custom_call.1} parent=1 // pred_fallthru
      _
    %p120 = scmp.eq.s32.totalorder 0, 0
    // Predicated region
    $region74: #{tpu_custom_call.1} parent=1 // pred_check
      %p121 = pneg %p120
    $region75: #{tpu_custom_call.1} parent=1 // pred_check_branch
      %123 = sbr.rel (%p121) target = $region77
    $region76: #{tpu_custom_call.1} parent=1 // pred_region
      %v124 = vld [vmem:[%s2] sm:$0x1]
      %vm125 = vcmask 253952
      %126 = vst.msk [vmem:[#allocation2] sm:$0x1] %vm125, %v124
      %s127 = scalar_lea.vmem %s2, 1
      %v128 = vld [vmem:[%s127] sm:$0x1]
      %129 = vst.msk [vmem:[#allocation3] sm:$0x1] %vm125, %v128
      %v130 = vld [vmem:[%s1] sm:$0x1]
      %131 = vst.msk [vmem:[#allocation4] sm:$0x1] %vm125, %v130
    $region77: #{tpu_custom_call.1} parent=1 // pred_fallthru
      _
    %v132 = vld [vmem:[#allocation10] sm:$0xff]
    %v133 = vld [vmem:[#allocation10 + $0x8] sm:$0xff]
    %v134 = vld [vmem:[#allocation10 + $0x10] sm:$0xff]
    %v135 = vld [vmem:[#allocation10 + $0x18] sm:$0xff]
    %v136 = vld [vmem:[#allocation11] sm:$0xff]
    %v137 = vld [vmem:[#allocation11 + $0x8] sm:$0xff]
    %v138 = vld [vmem:[#allocation11 + $0x10] sm:$0xff]
    %v139 = vld [vmem:[#allocation11 + $0x18] sm:$0xff]
    %v140 = vld [vmem:[%s7] sm:$0x1]
    %v141 = vld [vmem:[#allocation13] sm:$0xff]
    %v142 = vld [vmem:[#allocation13 + $0x8] sm:$0xff]
    %v143 = vld [vmem:[#allocation13 + $0x10] sm:$0xff]
    %v144 = vld [vmem:[#allocation13 + $0x18] sm:$0xff]
    %v145 = vld [vmem:[#allocation14] sm:$0x1]
    %v146 = vld [vmem:[%s10] sm:$0xff]
    %v147 = vld [vmem:[%s10 + $0x8] sm:$0xff]
    %v148 = vld [vmem:[%s10 + $0x10] sm:$0xff]
    %v149 = vld [vmem:[%s10 + $0x18] sm:$0xff]
    %v150 = vld [vmem:[%s11] sm:$0x1]
    %v151 = vld [vmem:[#allocation8] sm:$0xff]
    %v152 = vld [vmem:[%s4] sm:$0x1]
    %153 = vst [vmem:[#allocation16] sm:$0xff] 0.0
    %154 = vst [vmem:[#allocation16 + $0x8] sm:$0xff] 0.0
    %155 = vst [vmem:[#allocation16 + $0x10] sm:$0xff] 0.0
    %156 = vst [vmem:[#allocation16 + $0x18] sm:$0xff] 0.0
    %157 = vst [vmem:[#allocation16 + $0x20] sm:$0xff] 0.0
    %158 = vst [vmem:[#allocation16 + $0x28] sm:$0xff] 0.0
    %159 = vst [vmem:[#allocation16 + $0x30] sm:$0xff] 0.0
    %160 = vst [vmem:[#allocation16 + $0x38] sm:$0xff] 0.0
    %v161 = vld [vmem:[#allocation2] sm:$0x1]
    %v162 = vld [vmem:[#allocation3] sm:$0x1]
    %v163 = vld [vmem:[#allocation4] sm:$0x1]
    %v164 = vld [vmem:[#allocation5] sm:$0x1]
    %vm165 = vcmask 261120
    %v167 = vsel %vm165, %v163, 0
    %169 = vmatprep.subr.mxu0 0.0
    %170 = vmatpush1.msra.mxu0 %v132
    %171 = vmatprep.subr.mxu0 0.0
    %172 = vmatpush1.msra.mxu0 %v133
    %173 = vmatprep.subr.mxu0 0.0
    %174 = vmatpush1.msra.mxu0 %v134
    %175 = vmatprep.subr.mxu0 0.0
    %176 = vmatpush1.msra.mxu0 %v135
    %177 = vmatprep.subr.mxu0 0.0
    %178 = vmatpush1.msra.mxu0 0.0
    %179 = vmatprep.subr.mxu0 0.0
    %180 = vmatpush1.msra.mxu0 0.0
    %181 = vmatprep.subr.mxu0 0.0
    %182 = vmatpush1.msra.mxu0 0.0
    %183 = vmatprep.subr.mxu0 0.0
    %184 = vmatpush1.msra.mxu0 0.0
    %185 = vmatprep.subr.mxu0 0.0
    %186 = vmatpush1.msra.mxu0 0.0
    %187 = vmatprep.subr.mxu0 0.0
    %188 = vmatpush1.msra.mxu0 0.0
    %189 = vmatprep.subr.mxu0 0.0
    %190 = vmatpush1.msra.mxu0 0.0
    %191 = vmatprep.subr.mxu0 0.0
    %192 = vmatpush1.msra.mxu0 0.0
    %193 = vmatprep.subr.mxu0 0.0
    %194 = vmatpush1.msra.mxu0 0.0
    %195 = vmatprep.subr.mxu0 0.0
    %196 = vmatpush1.msra.mxu0 0.0
    %197 = vmatprep.subr.mxu0 0.0
    %198 = vmatpush1.msra.mxu0 0.0
    %199 = vmatprep.subr.mxu0 0.0
    %200 = vmatpush1.msra.mxu0 0.0
    %201 = vmatprep.subr.mxu0 0.0
    %202 = vmatpush1.msra.mxu0 0.0
    %203 = vmatprep.subr.mxu0 0.0
    %204 = vmatpush1.msra.mxu0 0.0
    %205 = vmatprep.subr.mxu0 0.0
    %206 = vmatpush1.msra.mxu0 0.0
    %207 = vmatprep.subr.mxu0 0.0
    %208 = vmatpush1.msra.mxu0 0.0
    %209 = vmatprep.subr.mxu0 0.0
    %210 = vmatpush1.msra.mxu0 0.0
    %211 = vmatprep.subr.mxu0 0.0
    %212 = vmatpush1.msra.mxu0 0.0
    %213 = vmatprep.subr.mxu0 0.0
    %214 = vmatpush1.msra.mxu0 0.0
    %215 = vmatprep.subr.mxu0 0.0
    %216 = vmatpush1.msra.mxu0 0.0
    %217 = vmatprep.subr.mxu0 0.0
    %218 = vmatpush1.msra.mxu0 0.0
    %219 = vmatprep.subr.mxu0 0.0
    %220 = vmatpush1.msra.mxu0 0.0
    %221 = vmatprep.subr.mxu0 0.0
    %222 = vmatpush1.msra.mxu0 0.0
    %223 = vmatprep.subr.mxu0 0.0
    %224 = vmatpush1.msra.mxu0 0.0
    %225 = vmatprep.subr.mxu0 0.0
    %226 = vmatpush1.msra.mxu0 0.0
    %227 = vmatprep.subr.mxu0 0.0
    %228 = vmatpush1.msra.mxu0 0.0
    %229 = vmatprep.subr.mxu0 0.0
    %230 = vmatpush1.msra.mxu0 0.0
    %231 = vmatprep.subr.mxu0 0.0
    %232 = vmatpush1.msra.mxu0 0.0
    %233 = vmatprep.mubr.f32.mxu0 0.0
    %234 = vmatmul.mubr.f32.gmra.mrb[0].mxu0 %v167
    %v235 = vpop.f32.mrb[0].mxu0
    %v236 = vadd.f32 0.0, %v235
    %v237 = vpop.f32.mrb[0].mxu0
    %238 = vdwg.mxu0
    %v239 = vadd.f32 %v164, %v236
    %v241 = vsel %vm165, %v161, 0
    %243 = vmatprep.subr.mxu0 0.0
    %244 = vmatpush1.msra.mxu0 %v136
    %245 = vmatprep.subr.mxu0 0.0
    %246 = vmatpush1.msra.mxu0 %v137
    %247 = vmatprep.subr.mxu0 0.0
    %248 = vmatpush1.msra.mxu0 %v138
    %249 = vmatprep.subr.mxu0 0.0
    %250 = vmatpush1.msra.mxu0 %v139
    %251 = vmatprep.subr.mxu0 0.0
    %252 = vmatpush1.msra.mxu0 0.0
    %253 = vmatprep.subr.mxu0 0.0
    %254 = vmatpush1.msra.mxu0 0.0
    %255 = vmatprep.subr.mxu0 0.0
    %256 = vmatpush1.msra.mxu0 0.0
    %257 = vmatprep.subr.mxu0 0.0
    %258 = vmatpush1.msra.mxu0 0.0
    %259 = vmatprep.subr.mxu0 0.0
    %260 = vmatpush1.msra.mxu0 0.0
    %261 = vmatprep.subr.mxu0 0.0
    %262 = vmatpush1.msra.mxu0 0.0
    %263 = vmatprep.subr.mxu0 0.0
    %264 = vmatpush1.msra.mxu0 0.0
    %265 = vmatprep.subr.mxu0 0.0
    %266 = vmatpush1.msra.mxu0 0.0
    %267 = vmatprep.subr.mxu0 0.0
    %268 = vmatpush1.msra.mxu0 0.0
    %269 = vmatprep.subr.mxu0 0.0
    %270 = vmatpush1.msra.mxu0 0.0
    %271 = vmatprep.subr.mxu0 0.0
    %272 = vmatpush1.msra.mxu0 0.0
    %273 = vmatprep.subr.mxu0 0.0
    %274 = vmatpush1.msra.mxu0 0.0
    %275 = vmatprep.subr.mxu0 0.0
    %276 = vmatpush1.msra.mxu0 0.0
    %277 = vmatprep.subr.mxu0 0.0
    %278 = vmatpush1.msra.mxu0 0.0
    %279 = vmatprep.subr.mxu0 0.0
    %280 = vmatpush1.msra.mxu0 0.0
    %281 = vmatprep.subr.mxu0 0.0
    %282 = vmatpush1.msra.mxu0 0.0
    %283 = vmatprep.subr.mxu0 0.0
    %284 = vmatpush1.msra.mxu0 0.0
    %285 = vmatprep.subr.mxu0 0.0
    %286 = vmatpush1.msra.mxu0 0.0
    %287 = vmatprep.subr.mxu0 0.0
    %288 = vmatpush1.msra.mxu0 0.0
    %289 = vmatprep.subr.mxu0 0.0
    %290 = vmatpush1.msra.mxu0 0.0
    %291 = vmatprep.subr.mxu0 0.0
    %292 = vmatpush1.msra.mxu0 0.0
    %293 = vmatprep.subr.mxu0 0.0
    %294 = vmatpush1.msra.mxu0 0.0
    %295 = vmatprep.subr.mxu0 0.0
    %296 = vmatpush1.msra.mxu0 0.0
    %297 = vmatprep.subr.mxu0 0.0
    %298 = vmatpush1.msra.mxu0 0.0
    %299 = vmatprep.subr.mxu0 0.0
    %300 = vmatpush1.msra.mxu0 0.0
    %301 = vmatprep.subr.mxu0 0.0
    %302 = vmatpush1.msra.mxu0 0.0
    %303 = vmatprep.subr.mxu0 0.0
    %304 = vmatpush1.msra.mxu0 0.0
    %305 = vmatprep.subr.mxu0 0.0
    %306 = vmatpush1.msra.mxu0 0.0
    %307 = vmatprep.mubr.f32.mxu0 0.0
    %308 = vmatmul.mubr.f32.gmra.mrb[0].mxu0 %v241
    %v309 = vpop.f32.mrb[0].mxu0
    %v310 = vadd.f32 %v140, %v309
    %v311 = vpop.f32.mrb[0].mxu0
    %312 = vdwg.mxu0
    %v313 = vadd.f32 %v239, %v310
    %v314 = vxor.u32 %v313, 2147483648
    %v315 = vmul.f32 %v314, 1.442695
    %v316 = vpow.pop %v315
    %v317 = vadd.f32 %v316, 1.0
    %v318 = vrcp.pop %v317
    %v319 = vmul.f32 1.0, %v318
    %v322 = vunpack.c.l.s4 1966171168
    %v323 = vunpack.c.0.s8 %v322
    %v324 = vlaneseq
    %v325 = vshrl.u32 %v324, 7
    %v326 = vsub.s32 %v323, %v325
    %v327 = vrot.slane %v310, %v326
    %v329 = vunpack.c.l.s4 1966171168
    %v330 = vunpack.c.0.s8 %v329
    %v331 = vlaneseq
    %v332 = vshrl.u32 %v331, 7
    %v333 = vsub.s32 %v330, %v332
    %v334 = vrot.slane %v327, %v333
    %335 = vrot.lane.b32.xlu0 %v334, 64
    %v336 = vpop.permute.xlu0 %335
    %v338 = vmul.f32 %v319, %v336
    %340 = vrot.lane.b32.xlu0 %v338, 64
    %v341 = vpop.permute.xlu0 %340
    %v343 = vadd.f32 %v239, %v341
    %v344 = vtanh.pop %v343
    %v345 = vsub.f32 1.0, %v319
    %347 = vrot.lane.b32.xlu0 %v344, 96
    %v348 = vpop.permute.xlu0 %347
    %v350 = vmul.f32 %v345, %v348
    %351 = vrot.lane.b32.xlu0 %v161, 32
    %v352 = vpop.permute.xlu0 %351
    %v354 = vmul.f32 %v319, %v352
    %v355 = vadd.f32 %v350, %v354
    %v357 = vlaneseq
    %v358 = vshrl.u32 %v357, 7
    %v359 = vsub.s32 0, %v358
    %v360 = vrot.slane %v355, %v359
    %361 = vrot.lane.b32.xlu0 %v360, 96
    %v362 = vpop.permute.xlu0 %361
    %v363 = vsel %vm165, %v362, 0
    %365 = vmatprep.subr.mxu0 0.0
    %366 = vmatpush1.msra.mxu0 %v141
    %367 = vmatprep.subr.mxu0 0.0
    %368 = vmatpush1.msra.mxu0 %v142
    %369 = vmatprep.subr.mxu0 0.0
    %370 = vmatpush1.msra.mxu0 %v143
    %371 = vmatprep.subr.mxu0 0.0
    %372 = vmatpush1.msra.mxu0 %v144
    %373 = vmatprep.subr.mxu0 0.0
    %374 = vmatpush1.msra.mxu0 0.0
    %375 = vmatprep.subr.mxu0 0.0
    %376 = vmatpush1.msra.mxu0 0.0
    %377 = vmatprep.subr.mxu0 0.0
    %378 = vmatpush1.msra.mxu0 0.0
    %379 = vmatprep.subr.mxu0 0.0
    %380 = vmatpush1.msra.mxu0 0.0
    %381 = vmatprep.subr.mxu0 0.0
    %382 = vmatpush1.msra.mxu0 0.0
    %383 = vmatprep.subr.mxu0 0.0
    %384 = vmatpush1.msra.mxu0 0.0
    %385 = vmatprep.subr.mxu0 0.0
    %386 = vmatpush1.msra.mxu0 0.0
    %387 = vmatprep.subr.mxu0 0.0
    %388 = vmatpush1.msra.mxu0 0.0
    %389 = vmatprep.subr.mxu0 0.0
    %390 = vmatpush1.msra.mxu0 0.0
    %391 = vmatprep.subr.mxu0 0.0
    %392 = vmatpush1.msra.mxu0 0.0
    %393 = vmatprep.subr.mxu0 0.0
    %394 = vmatpush1.msra.mxu0 0.0
    %395 = vmatprep.subr.mxu0 0.0
    %396 = vmatpush1.msra.mxu0 0.0
    %397 = vmatprep.subr.mxu0 0.0
    %398 = vmatpush1.msra.mxu0 0.0
    %399 = vmatprep.subr.mxu0 0.0
    %400 = vmatpush1.msra.mxu0 0.0
    %401 = vmatprep.subr.mxu0 0.0
    %402 = vmatpush1.msra.mxu0 0.0
    %403 = vmatprep.subr.mxu0 0.0
    %404 = vmatpush1.msra.mxu0 0.0
    %405 = vmatprep.subr.mxu0 0.0
    %406 = vmatpush1.msra.mxu0 0.0
    %407 = vmatprep.subr.mxu0 0.0
    %408 = vmatpush1.msra.mxu0 0.0
    %409 = vmatprep.subr.mxu0 0.0
    %410 = vmatpush1.msra.mxu0 0.0
    %411 = vmatprep.subr.mxu0 0.0
    %412 = vmatpush1.msra.mxu0 0.0
    %413 = vmatprep.subr.mxu0 0.0
    %414 = vmatpush1.msra.mxu0 0.0
    %415 = vmatprep.subr.mxu0 0.0
    %416 = vmatpush1.msra.mxu0 0.0
    %417 = vmatprep.subr.mxu0 0.0
    %418 = vmatpush1.msra.mxu0 0.0
    %419 = vmatprep.subr.mxu0 0.0
    %420 = vmatpush1.msra.mxu0 0.0
    %421 = vmatprep.subr.mxu0 0.0
    %422 = vmatpush1.msra.mxu0 0.0
    %423 = vmatprep.subr.mxu0 0.0
    %424 = vmatpush1.msra.mxu0 0.0
    %425 = vmatprep.subr.mxu0 0.0
    %426 = vmatpush1.msra.mxu0 0.0
    %427 = vmatprep.subr.mxu0 0.0
    %428 = vmatpush1.msra.mxu0 0.0
    %429 = vmatprep.mubr.f32.mxu0 0.0
    %430 = vmatmul.mubr.f32.gmra.mrb[0].mxu0 %v363
    %v431 = vpop.f32.mrb[0].mxu0
    %v432 = vadd.f32 %v145, %v431
    %v433 = vpop.f32.mrb[0].mxu0
    %434 = vdwg.mxu0
    %v436 = vsel %vm165, %v162, 0
    %438 = vmatprep.subr.mxu0 0.0
    %439 = vmatpush1.msra.mxu0 %v146
    %440 = vmatprep.subr.mxu0 0.0
    %441 = vmatpush1.msra.mxu0 %v147
    %442 = vmatprep.subr.mxu0 0.0
    %443 = vmatpush1.msra.mxu0 %v148
    %444 = vmatprep.subr.mxu0 0.0
    %445 = vmatpush1.msra.mxu0 %v149
    %446 = vmatprep.subr.mxu0 0.0
    %447 = vmatpush1.msra.mxu0 0.0
    %448 = vmatprep.subr.mxu0 0.0
    %449 = vmatpush1.msra.mxu0 0.0
    %450 = vmatprep.subr.mxu0 0.0
    %451 = vmatpush1.msra.mxu0 0.0
    %452 = vmatprep.subr.mxu0 0.0
    %453 = vmatpush1.msra.mxu0 0.0
    %454 = vmatprep.subr.mxu0 0.0
    %455 = vmatpush1.msra.mxu0 0.0
    %456 = vmatprep.subr.mxu0 0.0
    %457 = vmatpush1.msra.mxu0 0.0
    %458 = vmatprep.subr.mxu0 0.0
    %459 = vmatpush1.msra.mxu0 0.0
    %460 = vmatprep.subr.mxu0 0.0
    %461 = vmatpush1.msra.mxu0 0.0
    %462 = vmatprep.subr.mxu0 0.0
    %463 = vmatpush1.msra.mxu0 0.0
    %464 = vmatprep.subr.mxu0 0.0
    %465 = vmatpush1.msra.mxu0 0.0
    %466 = vmatprep.subr.mxu0 0.0
    %467 = vmatpush1.msra.mxu0 0.0
    %468 = vmatprep.subr.mxu0 0.0
    %469 = vmatpush1.msra.mxu0 0.0
    %470 = vmatprep.subr.mxu0 0.0
    %471 = vmatpush1.msra.mxu0 0.0
    %472 = vmatprep.subr.mxu0 0.0
    %473 = vmatpush1.msra.mxu0 0.0
    %474 = vmatprep.subr.mxu0 0.0
    %475 = vmatpush1.msra.mxu0 0.0
    %476 = vmatprep.subr.mxu0 0.0
    %477 = vmatpush1.msra.mxu0 0.0
    %478 = vmatprep.subr.mxu0 0.0
    %479 = vmatpush1.msra.mxu0 0.0
    %480 = vmatprep.subr.mxu0 0.0
    %481 = vmatpush1.msra.mxu0 0.0
    %482 = vmatprep.subr.mxu0 0.0
    %483 = vmatpush1.msra.mxu0 0.0
    %484 = vmatprep.subr.mxu0 0.0
    %485 = vmatpush1.msra.mxu0 0.0
    %486 = vmatprep.subr.mxu0 0.0
    %487 = vmatpush1.msra.mxu0 0.0
    %488 = vmatprep.subr.mxu0 0.0
    %489 = vmatpush1.msra.mxu0 0.0
    %490 = vmatprep.subr.mxu0 0.0
    %491 = vmatpush1.msra.mxu0 0.0
    %492 = vmatprep.subr.mxu0 0.0
    %493 = vmatpush1.msra.mxu0 0.0
    %494 = vmatprep.subr.mxu0 0.0
    %495 = vmatpush1.msra.mxu0 0.0
    %496 = vmatprep.subr.mxu0 0.0
    %497 = vmatpush1.msra.mxu0 0.0
    %498 = vmatprep.subr.mxu0 0.0
    %499 = vmatpush1.msra.mxu0 0.0
    %500 = vmatprep.subr.mxu0 0.0
    %501 = vmatpush1.msra.mxu0 0.0
    %502 = vmatprep.mubr.f32.mxu0 0.0
    %503 = vmatmul.mubr.f32.gmra.mrb[0].mxu0 %v436
    %v504 = vpop.f32.mrb[0].mxu0
    %v505 = vadd.f32 %v150, %v504
    %v506 = vpop.f32.mrb[0].mxu0
    %507 = vdwg.mxu0
    %v508 = vadd.f32 %v432, %v505
    %v509 = vxor.u32 %v508, 2147483648
    %v510 = vmul.f32 %v509, 1.442695
    %v511 = vpow.pop %v510
    %v512 = vadd.f32 %v511, 1.0
    %v513 = vrcp.pop %v512
    %v514 = vmul.f32 1.0, %v513
    %516 = vrot.lane.b32.xlu0 %v505, 64
    %v517 = vpop.permute.xlu0 %516
    %v519 = vmul.f32 %v514, %v517
    %521 = vrot.lane.b32.xlu0 %v519, 64
    %v522 = vpop.permute.xlu0 %521
    %v524 = vadd.f32 %v432, %v522
    %v525 = vtanh.pop %v524
    %v526 = vsub.f32 1.0, %v514
    %528 = vrot.lane.b32.xlu0 %v525, 96
    %v529 = vpop.permute.xlu0 %528
    %v531 = vmul.f32 %v526, %v529
    %v532 = vlaneseq
    %v533 = vshrl.u32 %v532, 7
    %v534 = vsub.s32 0, %v533
    %v535 = vrot.slane %v162, %v534
    %536 = vrot.lane.b32.xlu0 %v535, 32
    %v537 = vpop.permute.xlu0 %536
    %v539 = vmul.f32 %v514, %v537
    %v540 = vadd.f32 %v531, %v539
    %542 = vset.pattern.permute.xlu0 32
    %543 = vperm.xlu0 %542, %v540
    %v544 = vpop.permute.xlu0 %543
    %v546 = vmul.f32 %v544, %v152
    %vm547 = vcmask 57344
    %v548 = vsel %vm547, %v546, -inf
    %549 = vmax.xlane.f32.xlu0 %v548
    %v550 = vpop.xlane.xlu0 %549
    %v551 = vsub.f32 %v546, %v550
    %v552 = vmul.f32 %v551, 1.442695
    %v553 = vpow.pop %v552
    %v554 = vsel %vm547, %v553, 0.0
    %555 = vadd.xlane.f32.xlu0 %v554
    %v556 = vpop.xlane.xlu0 %555
    %v557 = vrcp.pop %v556
    %v558 = vmul.f32 %v553, %v557
    %vm559 = vcmask 64512
    %v561 = vsel %vm559, %v558, 0
    %563 = vmatprep.subr.mxu0 0.0
    %564 = vmatpush1.msra.mxu0 %v151
    %565 = vmatprep.subr.mxu0 0.0
    %566 = vmatpush1.msra.mxu0 0.0
    %567 = vmatprep.subr.mxu0 0.0
    %568 = vmatpush1.msra.mxu0 0.0
    %569 = vmatprep.subr.mxu0 0.0
    %570 = vmatpush1.msra.mxu0 0.0
    %571 = vmatprep.subr.mxu0 0.0
    %572 = vmatpush1.msra.mxu0 0.0
    %573 = vmatprep.subr.mxu0 0.0
    %574 = vmatpush1.msra.mxu0 0.0
    %575 = vmatprep.subr.mxu0 0.0
    %576 = vmatpush1.msra.mxu0 0.0
    %577 = vmatprep.subr.mxu0 0.0
    %578 = vmatpush1.msra.mxu0 0.0
    %579 = vmatprep.subr.mxu0 0.0
    %580 = vmatpush1.msra.mxu0 0.0
    %581 = vmatprep.subr.mxu0 0.0
    %582 = vmatpush1.msra.mxu0 0.0
    %583 = vmatprep.subr.mxu0 0.0
    %584 = vmatpush1.msra.mxu0 0.0
    %585 = vmatprep.subr.mxu0 0.0
    %586 = vmatpush1.msra.mxu0 0.0
    %587 = vmatprep.subr.mxu0 0.0
    %588 = vmatpush1.msra.mxu0 0.0
    %589 = vmatprep.subr.mxu0 0.0
    %590 = vmatpush1.msra.mxu0 0.0
    %591 = vmatprep.subr.mxu0 0.0
    %592 = vmatpush1.msra.mxu0 0.0
    %593 = vmatprep.subr.mxu0 0.0
    %594 = vmatpush1.msra.mxu0 0.0
    %595 = vmatprep.subr.mxu0 0.0
    %596 = vmatpush1.msra.mxu0 0.0
    %597 = vmatprep.subr.mxu0 0.0
    %598 = vmatpush1.msra.mxu0 0.0
    %599 = vmatprep.subr.mxu0 0.0
    %600 = vmatpush1.msra.mxu0 0.0
    %601 = vmatprep.subr.mxu0 0.0
    %602 = vmatpush1.msra.mxu0 0.0
    %603 = vmatprep.subr.mxu0 0.0
    %604 = vmatpush1.msra.mxu0 0.0
    %605 = vmatprep.subr.mxu0 0.0
    %606 = vmatpush1.msra.mxu0 0.0
    %607 = vmatprep.subr.mxu0 0.0
    %608 = vmatpush1.msra.mxu0 0.0
    %609 = vmatprep.subr.mxu0 0.0
    %610 = vmatpush1.msra.mxu0 0.0
    %611 = vmatprep.subr.mxu0 0.0
    %612 = vmatpush1.msra.mxu0 0.0
    %613 = vmatprep.subr.mxu0 0.0
    %614 = vmatpush1.msra.mxu0 0.0
    %615 = vmatprep.subr.mxu0 0.0
    %616 = vmatpush1.msra.mxu0 0.0
    %617 = vmatprep.subr.mxu0 0.0
    %618 = vmatpush1.msra.mxu0 0.0
    %619 = vmatprep.subr.mxu0 0.0
    %620 = vmatpush1.msra.mxu0 0.0
    %621 = vmatprep.subr.mxu0 0.0
    %622 = vmatpush1.msra.mxu0 0.0
    %623 = vmatprep.subr.mxu0 0.0
    %624 = vmatpush1.msra.mxu0 0.0
    %625 = vmatprep.subr.mxu0 0.0
    %626 = vmatpush1.msra.mxu0 0.0
    %627 = vmatprep.mubr.f32.mxu0 0.0
    %628 = vmatmul.mubr.f32.gmra.mrb[0].mxu0 %v561
    %v629 = vpop.f32.mrb[0].mxu0
    %v630 = vadd.f32 0.0, %v629
    %v631 = vpop.f32.mrb[0].mxu0
    %632 = vdwg.mxu0
    %vm633 = vcmask 253952
    %634 = vst.msk [vmem:[#allocation16] sm:$0x1] %vm633, %v630
    %636 = vst.msk [vmem:[#allocation16 + $0x1] sm:$0x1] %vm633, %v362
    %637 = vrot.lane.b32.xlu0 %v540, 96
    %v638 = vpop.permute.xlu0 %637
    %640 = vst.msk [vmem:[#allocation16 + $0x2] sm:$0x1] %vm633, %v638
    %641 = vst.msk [vmem:[#allocation16 + $0x3] sm:$0x1] %vm547, %v558
    %s642 = scalar_lea.vmem [#allocation5], 1
    %v643 = vld [vmem:[%s642] sm:$0x1]
    %v645 = vsel %vm165, %v630, 0
    %647 = vmatprep.subr.mxu0 0.0
    %648 = vmatpush1.msra.mxu0 %v132
    %649 = vmatprep.subr.mxu0 0.0
    %650 = vmatpush1.msra.mxu0 %v133
    %651 = vmatprep.subr.mxu0 0.0
    %652 = vmatpush1.msra.mxu0 %v134
    %653 = vmatprep.subr.mxu0 0.0
    %654 = vmatpush1.msra.mxu0 %v135
    %655 = vmatprep.subr.mxu0 0.0
    %656 = vmatpush1.msra.mxu0 0.0
    %657 = vmatprep.subr.mxu0 0.0
    %658 = vmatpush1.msra.mxu0 0.0
    %659 = vmatprep.subr.mxu0 0.0
    %660 = vmatpush1.msra.mxu0 0.0
    %661 = vmatprep.subr.mxu0 0.0
    %662 = vmatpush1.msra.mxu0 0.0
    %663 = vmatprep.subr.mxu0 0.0
    %664 = vmatpush1.msra.mxu0 0.0
    %665 = vmatprep.subr.mxu0 0.0
    %666 = vmatpush1.msra.mxu0 0.0
    %667 = vmatprep.subr.mxu0 0.0
    %668 = vmatpush1.msra.mxu0 0.0
    %669 = vmatprep.subr.mxu0 0.0
    %670 = vmatpush1.msra.mxu0 0.0
    %671 = vmatprep.subr.mxu0 0.0
    %672 = vmatpush1.msra.mxu0 0.0
    %673 = vmatprep.subr.mxu0 0.0
    %674 = vmatpush1.msra.mxu0 0.0
    %675 = vmatprep.subr.mxu0 0.0
    %676 = vmatpush1.msra.mxu0 0.0
    %677 = vmatprep.subr.mxu0 0.0
    %678 = vmatpush1.msra.mxu0 0.0
    %679 = vmatprep.subr.mxu0 0.0
    %680 = vmatpush1.msra.mxu0 0.0
    %681 = vmatprep.subr.mxu0 0.0
    %682 = vmatpush1.msra.mxu0 0.0
    %683 = vmatprep.subr.mxu0 0.0
    %684 = vmatpush1.msra.mxu0 0.0
    %685 = vmatprep.subr.mxu0 0.0
    %686 = vmatpush1.msra.mxu0 0.0
    %687 = vmatprep.subr.mxu0 0.0
    %688 = vmatpush1.msra.mxu0 0.0
    %689 = vmatprep.subr.mxu0 0.0
    %690 = vmatpush1.msra.mxu0 0.0
    %691 = vmatprep.subr.mxu0 0.0
    %692 = vmatpush1.msra.mxu0 0.0
    %693 = vmatprep.subr.mxu0 0.0
    %694 = vmatpush1.msra.mxu0 0.0
    %695 = vmatprep.subr.mxu0 0.0
    %696 = vmatpush1.msra.mxu0 0.0
    %697 = vmatprep.subr.mxu0 0.0
    %698 = vmatpush1.msra.mxu0 0.0
    %699 = vmatprep.subr.mxu0 0.0
    %700 = vmatpush1.msra.mxu0 0.0
    %701 = vmatprep.subr.mxu0 0.0
    %702 = vmatpush1.msra.mxu0 0.0
    %703 = vmatprep.subr.mxu0 0.0
    %704 = vmatpush1.msra.mxu0 0.0
    %705 = vmatprep.subr.mxu0 0.0
    %706 = vmatpush1.msra.mxu0 0.0
    %707 = vmatprep.subr.mxu0 0.0
    %708 = vmatpush1.msra.mxu0 0.0
    %709 = vmatprep.subr.mxu0 0.0
    %710 = vmatpush1.msra.mxu0 0.0
    %711 = vmatprep.mubr.f32.mxu0 0.0
    %712 = vmatmul.mubr.f32.gmra.mrb[0].mxu0 %v645
    %v713 = vpop.f32.mrb[0].mxu0
    %v714 = vadd.f32 0.0, %v713
    %v715 = vpop.f32.mrb[0].mxu0
    %716 = vdwg.mxu0
    %v717 = vadd.f32 %v643, %v714
    %718 = vmatprep.subr.mxu0 0.0
    %719 = vmatpush1.msra.mxu0 %v136
    %720 = vmatprep.subr.mxu0 0.0
    %721 = vmatpush1.msra.mxu0 %v137
    %722 = vmatprep.subr.mxu0 0.0
    %723 = vmatpush1.msra.mxu0 %v138
    %724 = vmatprep.subr.mxu0 0.0
    %725 = vmatpush1.msra.mxu0 %v139
    %726 = vmatprep.subr.mxu0 0.0
    %727 = vmatpush1.msra.mxu0 0.0
    %728 = vmatprep.subr.mxu0 0.0
    %729 = vmatpush1.msra.mxu0 0.0
    %730 = vmatprep.subr.mxu0 0.0
    %731 = vmatpush1.msra.mxu0 0.0
    %732 = vmatprep.subr.mxu0 0.0
    %733 = vmatpush1.msra.mxu0 0.0
    %734 = vmatprep.subr.mxu0 0.0
    %735 = vmatpush1.msra.mxu0 0.0
    %736 = vmatprep.subr.mxu0 0.0
    %737 = vmatpush1.msra.mxu0 0.0
    %738 = vmatprep.subr.mxu0 0.0
    %739 = vmatpush1.msra.mxu0 0.0
    %740 = vmatprep.subr.mxu0 0.0
    %741 = vmatpush1.msra.mxu0 0.0
    %742 = vmatprep.subr.mxu0 0.0
    %743 = vmatpush1.msra.mxu0 0.0
    %744 = vmatprep.subr.mxu0 0.0
    %745 = vmatpush1.msra.mxu0 0.0
    %746 = vmatprep.subr.mxu0 0.0
    %747 = vmatpush1.msra.mxu0 0.0
    %748 = vmatprep.subr.mxu0 0.0
    %749 = vmatpush1.msra.mxu0 0.0
    %750 = vmatprep.subr.mxu0 0.0
    %751 = vmatpush1.msra.mxu0 0.0
    %752 = vmatprep.subr.mxu0 0.0
    %753 = vmatpush1.msra.mxu0 0.0
    %754 = vmatprep.subr.mxu0 0.0
    %755 = vmatpush1.msra.mxu0 0.0
    %756 = vmatprep.subr.mxu0 0.0
    %757 = vmatpush1.msra.mxu0 0.0
    %758 = vmatprep.subr.mxu0 0.0
    %759 = vmatpush1.msra.mxu0 0.0
    %760 = vmatprep.subr.mxu0 0.0
    %761 = vmatpush1.msra.mxu0 0.0
    %762 = vmatprep.subr.mxu0 0.0
    %763 = vmatpush1.msra.mxu0 0.0
    %764 = vmatprep.subr.mxu0 0.0
    %765 = vmatpush1.msra.mxu0 0.0
    %766 = vmatprep.subr.mxu0 0.0
    %767 = vmatpush1.msra.mxu0 0.0
    %768 = vmatprep.subr.mxu0 0.0
    %769 = vmatpush1.msra.mxu0 0.0
    %770 = vmatprep.subr.mxu0 0.0
    %771 = vmatpush1.msra.mxu0 0.0
    %772 = vmatprep.subr.mxu0 0.0
    %773 = vmatpush1.msra.mxu0 0.0
    %774 = vmatprep.subr.mxu0 0.0
    %775 = vmatpush1.msra.mxu0 0.0
    %776 = vmatprep.subr.mxu0 0.0
    %777 = vmatpush1.msra.mxu0 0.0
    %778 = vmatprep.subr.mxu0 0.0
    %779 = vmatpush1.msra.mxu0 0.0
    %780 = vmatprep.subr.mxu0 0.0
    %781 = vmatpush1.msra.mxu0 0.0
    %782 = vmatprep.mubr.f32.mxu0 0.0
    %783 = vmatmul.mubr.f32.gmra.mrb[0].mxu0 %v363
    %v784 = vpop.f32.mrb[0].mxu0
    %v785 = vadd.f32 %v140, %v784
    %v786 = vpop.f32.mrb[0].mxu0
    %787 = vdwg.mxu0
    %v788 = vadd.f32 %v717, %v785
    %v789 = vxor.u32 %v788, 2147483648
    %v790 = vmul.f32 %v789, 1.442695
    %v791 = vpow.pop %v790
    %v792 = vadd.f32 %v791, 1.0
    %v793 = vrcp.pop %v792
    %v794 = vmul.f32 1.0, %v793
    %v797 = vunpack.c.l.s4 1966171168
    %v798 = vunpack.c.0.s8 %v797
    %v799 = vlaneseq
    %v800 = vshrl.u32 %v799, 7
    %v801 = vsub.s32 %v798, %v800
    %v802 = vrot.slane %v785, %v801
    %v804 = vunpack.c.l.s4 1966171168
    %v805 = vunpack.c.0.s8 %v804
    %v806 = vlaneseq
    %v807 = vshrl.u32 %v806, 7
    %v808 = vsub.s32 %v805, %v807
    %v809 = vrot.slane %v802, %v808
    %810 = vrot.lane.b32.xlu0 %v809, 64
    %v811 = vpop.permute.xlu0 %810
    %v813 = vmul.f32 %v794, %v811
    %815 = vrot.lane.b32.xlu0 %v813, 64
    %v816 = vpop.permute.xlu0 %815
    %v818 = vadd.f32 %v717, %v816
    %v819 = vtanh.pop %v818
    %v820 = vsub.f32 1.0, %v794
    %822 = vrot.lane.b32.xlu0 %v819, 96
    %v823 = vpop.permute.xlu0 %822
    %v825 = vmul.f32 %v820, %v823
    %v826 = vmul.f32 %v794, %v355
    %v827 = vadd.f32 %v825, %v826
    %v829 = vlaneseq
    %v830 = vshrl.u32 %v829, 7
    %v831 = vsub.s32 0, %v830
    %v832 = vrot.slane %v827, %v831
    %833 = vrot.lane.b32.xlu0 %v832, 96
    %v834 = vpop.permute.xlu0 %833
    %v835 = vsel %vm165, %v834, 0
    %837 = vmatprep.subr.mxu0 0.0
    %838 = vmatpush1.msra.mxu0 %v141
    %839 = vmatprep.subr.mxu0 0.0
    %840 = vmatpush1.msra.mxu0 %v142
    %841 = vmatprep.subr.mxu0 0.0
    %842 = vmatpush1.msra.mxu0 %v143
    %843 = vmatprep.subr.mxu0 0.0
    %844 = vmatpush1.msra.mxu0 %v144
    %845 = vmatprep.subr.mxu0 0.0
    %846 = vmatpush1.msra.mxu0 0.0
    %847 = vmatprep.subr.mxu0 0.0
    %848 = vmatpush1.msra.mxu0 0.0
    %849 = vmatprep.subr.mxu0 0.0
    %850 = vmatpush1.msra.mxu0 0.0
    %851 = vmatprep.subr.mxu0 0.0
    %852 = vmatpush1.msra.mxu0 0.0
    %853 = vmatprep.subr.mxu0 0.0
    %854 = vmatpush1.msra.mxu0 0.0
    %855 = vmatprep.subr.mxu0 0.0
    %856 = vmatpush1.msra.mxu0 0.0
    %857 = vmatprep.subr.mxu0 0.0
    %858 = vmatpush1.msra.mxu0 0.0
    %859 = vmatprep.subr.mxu0 0.0
    %860 = vmatpush1.msra.mxu0 0.0
    %861 = vmatprep.subr.mxu0 0.0
    %862 = vmatpush1.msra.mxu0 0.0
    %863 = vmatprep.subr.mxu0 0.0
    %864 = vmatpush1.msra.mxu0 0.0
    %865 = vmatprep.subr.mxu0 0.0
    %866 = vmatpush1.msra.mxu0 0.0
    %867 = vmatprep.subr.mxu0 0.0
    %868 = vmatpush1.msra.mxu0 0.0
    %869 = vmatprep.subr.mxu0 0.0
    %870 = vmatpush1.msra.mxu0 0.0
    %871 = vmatprep.subr.mxu0 0.0
    %872 = vmatpush1.msra.mxu0 0.0
    %873 = vmatprep.subr.mxu0 0.0
    %874 = vmatpush1.msra.mxu0 0.0
    %875 = vmatprep.subr.mxu0 0.0
    %876 = vmatpush1.msra.mxu0 0.0
    %877 = vmatprep.subr.mxu0 0.0
    %878 = vmatpush1.msra.mxu0 0.0
    %879 = vmatprep.subr.mxu0 0.0
    %880 = vmatpush1.msra.mxu0 0.0
    %881 = vmatprep.subr.mxu0 0.0
    %882 = vmatpush1.msra.mxu0 0.0
    %883 = vmatprep.subr.mxu0 0.0
    %884 = vmatpush1.msra.mxu0 0.0
    %885 = vmatprep.subr.mxu0 0.0
    %886 = vmatpush1.msra.mxu0 0.0
    %887 = vmatprep.subr.mxu0 0.0
    %888 = vmatpush1.msra.mxu0 0.0
    %889 = vmatprep.subr.mxu0 0.0
    %890 = vmatpush1.msra.mxu0 0.0
    %891 = vmatprep.subr.mxu0 0.0
    %892 = vmatpush1.msra.mxu0 0.0
    %893 = vmatprep.subr.mxu0 0.0
    %894 = vmatpush1.msra.mxu0 0.0
    %895 = vmatprep.subr.mxu0 0.0
    %896 = vmatpush1.msra.mxu0 0.0
    %897 = vmatprep.subr.mxu0 0.0
    %898 = vmatpush1.msra.mxu0 0.0
    %899 = vmatprep.subr.mxu0 0.0
    %900 = vmatpush1.msra.mxu0 0.0
    %901 = vmatprep.mubr.f32.mxu0 0.0
    %902 = vmatmul.mubr.f32.gmra.mrb[0].mxu0 %v835
    %v903 = vpop.f32.mrb[0].mxu0
    %v904 = vadd.f32 %v145, %v903
    %v905 = vpop.f32.mrb[0].mxu0
    %906 = vdwg.mxu0
    %v907 = vsel %vm165, %v638, 0
    %909 = vmatprep.subr.mxu0 0.0
    %910 = vmatpush1.msra.mxu0 %v146
    %911 = vmatprep.subr.mxu0 0.0
    %912 = vmatpush1.msra.mxu0 %v147
    %913 = vmatprep.subr.mxu0 0.0
    %914 = vmatpush1.msra.mxu0 %v148
    %915 = vmatprep.subr.mxu0 0.0
    %916 = vmatpush1.msra.mxu0 %v149
    %917 = vmatprep.subr.mxu0 0.0
    %918 = vmatpush1.msra.mxu0 0.0
    %919 = vmatprep.subr.mxu0 0.0
    %920 = vmatpush1.msra.mxu0 0.0
    %921 = vmatprep.subr.mxu0 0.0
    %922 = vmatpush1.msra.mxu0 0.0
    %923 = vmatprep.subr.mxu0 0.0
    %924 = vmatpush1.msra.mxu0 0.0
    %925 = vmatprep.subr.mxu0 0.0
    %926 = vmatpush1.msra.mxu0 0.0
    %927 = vmatprep.subr.mxu0 0.0
    %928 = vmatpush1.msra.mxu0 0.0
    %929 = vmatprep.subr.mxu0 0.0
    %930 = vmatpush1.msra.mxu0 0.0
    %931 = vmatprep.subr.mxu0 0.0
    %932 = vmatpush1.msra.mxu0 0.0
    %933 = vmatprep.subr.mxu0 0.0
    %934 = vmatpush1.msra.mxu0 0.0
    %935 = vmatprep.subr.mxu0 0.0
    %936 = vmatpush1.msra.mxu0 0.0
    %937 = vmatprep.subr.mxu0 0.0
    %938 = vmatpush1.msra.mxu0 0.0
    %939 = vmatprep.subr.mxu0 0.0
    %940 = vmatpush1.msra.mxu0 0.0
    %941 = vmatprep.subr.mxu0 0.0
    %942 = vmatpush1.msra.mxu0 0.0
    %943 = vmatprep.subr.mxu0 0.0
    %944 = vmatpush1.msra.mxu0 0.0
    %945 = vmatprep.subr.mxu0 0.0
    %946 = vmatpush1.msra.mxu0 0.0
    %947 = vmatprep.subr.mxu0 0.0
    %948 = vmatpush1.msra.mxu0 0.0
    %949 = vmatprep.subr.mxu0 0.0
    %950 = vmatpush1.msra.mxu0 0.0
    %951 = vmatprep.subr.mxu0 0.0
    %952 = vmatpush1.msra.mxu0 0.0
    %953 = vmatprep.subr.mxu0 0.0
    %954 = vmatpush1.msra.mxu0 0.0
    %955 = vmatprep.subr.mxu0 0.0
    %956 = vmatpush1.msra.mxu0 0.0
    %957 = vmatprep.subr.mxu0 0.0
    %958 = vmatpush1.msra.mxu0 0.0
    %959 = vmatprep.subr.mxu0 0.0
    %960 = vmatpush1.msra.mxu0 0.0
    %961 = vmatprep.subr.mxu0 0.0
    %962 = vmatpush1.msra.mxu0 0.0
    %963 = vmatprep.subr.mxu0 0.0
    %964 = vmatpush1.msra.mxu0 0.0
    %965 = vmatprep.subr.mxu0 0.0
    %966 = vmatpush1.msra.mxu0 0.0
    %967 = vmatprep.subr.mxu0 0.0
    %968 = vmatpush1.msra.mxu0 0.0
    %969 = vmatprep.subr.mxu0 0.0
    %970 = vmatpush1.msra.mxu0 0.0
    %971 = vmatprep.subr.mxu0 0.0
    %972 = vmatpush1.msra.mxu0 0.0
    %973 = vmatprep.mubr.f32.mxu0 0.0
    %974 = vmatmul.mubr.f32.gmra.mrb[0].mxu0 %v907
    %v975 = vpop.f32.mrb[0].mxu0
    %v976 = vadd.f32 %v150, %v975
    %v977 = vpop.f32.mrb[0].mxu0
    %978 = vdwg.mxu0
    %v979 = vadd.f32 %v904, %v976
    %v980 = vxor.u32 %v979, 2147483648
    %v981 = vmul.f32 %v980, 1.442695
    %v982 = vpow.pop %v981
    %v983 = vadd.f32 %v982, 1.0
    %v984 = vrcp.pop %v983
    %v985 = vmul.f32 1.0, %v984
    %987 = vrot.lane.b32.xlu0 %v976, 64
    %v988 = vpop.permute.xlu0 %987
    %v990 = vmul.f32 %v985, %v988
    %992 = vrot.lane.b32.xlu0 %v990, 64
    %v993 = vpop.permute.xlu0 %992
    %v995 = vadd.f32 %v904, %v993
    %v996 = vtanh.pop %v995
    %v997 = vsub.f32 1.0, %v985
    %999 = vrot.lane.b32.xlu0 %v996, 96
    %v1000 = vpop.permute.xlu0 %999
    %v1002 = vmul.f32 %v997, %v1000
    %v1003 = vmul.f32 %v985, %v540
    %v1004 = vadd.f32 %v1002, %v1003
    %1006 = vset.pattern.permute.xlu0 32
    %1007 = vperm.xlu0 %1006, %v1004
    %v1008 = vpop.permute.xlu0 %1007
    %v1010 = vmul.f32 %v1008, %v152
    %v1011 = vsel %vm547, %v1010, -inf
    %1012 = vmax.xlane.f32.xlu0 %v1011
    %v1013 = vpop.xlane.xlu0 %1012
    %v1014 = vsub.f32 %v1010, %v1013
    %v1015 = vmul.f32 %v1014, 1.442695
    %v1016 = vpow.pop %v1015
    %v1017 = vsel %vm547, %v1016, 0.0
    %1018 = vadd.xlane.f32.xlu0 %v1017
    %v1019 = vpop.xlane.xlu0 %1018
    %v1020 = vrcp.pop %v1019
    %v1021 = vmul.f32 %v1016, %v1020
    %v1023 = vsel %vm559, %v1021, 0
    %1025 = vmatprep.subr.mxu0 0.0
    %1026 = vmatpush1.msra.mxu0 %v151
    %1027 = vmatprep.subr.mxu0 0.0
    %1028 = vmatpush1.msra.mxu0 0.0
    %1029 = vmatprep.subr.mxu0 0.0
    %1030 = vmatpush1.msra.mxu0 0.0
    %1031 = vmatprep.subr.mxu0 0.0
    %1032 = vmatpush1.msra.mxu0 0.0
    %1033 = vmatprep.subr.mxu0 0.0
    %1034 = vmatpush1.msra.mxu0 0.0
    %1035 = vmatprep.subr.mxu0 0.0
    %1036 = vmatpush1.msra.mxu0 0.0
    %1037 = vmatprep.subr.mxu0 0.0
    %1038 = vmatpush1.msra.mxu0 0.0
    %1039 = vmatprep.subr.mxu0 0.0
    %1040 = vmatpush1.msra.mxu0 0.0
    %1041 = vmatprep.subr.mxu0 0.0
    %1042 = vmatpush1.msra.mxu0 0.0
    %1043 = vmatprep.subr.mxu0 0.0
    %1044 = vmatpush1.msra.mxu0 0.0
    %1045 = vmatprep.subr.mxu0 0.0
    %1046 = vmatpush1.msra.mxu0 0.0
    %1047 = vmatprep.subr.mxu0 0.0
    %1048 = vmatpush1.msra.mxu0 0.0
    %1049 = vmatprep.subr.mxu0 0.0
    %1050 = vmatpush1.msra.mxu0 0.0
    %1051 = vmatprep.subr.mxu0 0.0
    %1052 = vmatpush1.msra.mxu0 0.0
    %1053 = vmatprep.subr.mxu0 0.0
    %1054 = vmatpush1.msra.mxu0 0.0
    %1055 = vmatprep.subr.mxu0 0.0
    %1056 = vmatpush1.msra.mxu0 0.0
    %1057 = vmatprep.subr.mxu0 0.0
    %1058 = vmatpush1.msra.mxu0 0.0
    %1059 = vmatprep.subr.mxu0 0.0
    %1060 = vmatpush1.msra.mxu0 0.0
    %1061 = vmatprep.subr.mxu0 0.0
    %1062 = vmatpush1.msra.mxu0 0.0
    %1063 = vmatprep.subr.mxu0 0.0
    %1064 = vmatpush1.msra.mxu0 0.0
    %1065 = vmatprep.subr.mxu0 0.0
    %1066 = vmatpush1.msra.mxu0 0.0
    %1067 = vmatprep.subr.mxu0 0.0
    %1068 = vmatpush1.msra.mxu0 0.0
    %1069 = vmatprep.subr.mxu0 0.0
    %1070 = vmatpush1.msra.mxu0 0.0
    %1071 = vmatprep.subr.mxu0 0.0
    %1072 = vmatpush1.msra.mxu0 0.0
    %1073 = vmatprep.subr.mxu0 0.0
    %1074 = vmatpush1.msra.mxu0 0.0
    %1075 = vmatprep.subr.mxu0 0.0
    %1076 = vmatpush1.msra.mxu0 0.0
    %1077 = vmatprep.subr.mxu0 0.0
    %1078 = vmatpush1.msra.mxu0 0.0
    %1079 = vmatprep.subr.mxu0 0.0
    %1080 = vmatpush1.msra.mxu0 0.0
    %1081 = vmatprep.subr.mxu0 0.0
    %1082 = vmatpush1.msra.mxu0 0.0
    %1083 = vmatprep.subr.mxu0 0.0
    %1084 = vmatpush1.msra.mxu0 0.0
    %1085 = vmatprep.subr.mxu0 0.0
    %1086 = vmatpush1.msra.mxu0 0.0
    %1087 = vmatprep.subr.mxu0 0.0
    %1088 = vmatpush1.msra.mxu0 0.0
    %1089 = vmatprep.mubr.f32.mxu0 0.0
    %1090 = vmatmul.mubr.f32.gmra.mrb[0].mxu0 %v1023
    %v1091 = vpop.f32.mrb[0].mxu0
    %v1092 = vadd.f32 0.0, %v1091
    %v1093 = vpop.f32.mrb[0].mxu0
    %1094 = vdwg.mxu0
    %s1095 = scalar_lea.vmem [#allocation16], 8
    %1096 = vst.msk [vmem:[%s1095] sm:$0x1] %vm633, %v1092
    %1098 = vst.msk [vmem:[%s1095 + $0x1] sm:$0x1] %vm633, %v834
    %1099 = vrot.lane.b32.xlu0 %v1004, 96
    %v1100 = vpop.permute.xlu0 %1099
    %1102 = vst.msk [vmem:[%s1095 + $0x2] sm:$0x1] %vm633, %v1100
    %1103 = vst.msk [vmem:[%s1095 + $0x3] sm:$0x1] %vm547, %v1021
    %s1104 = scalar_lea.vmem [#allocation5], 2
    %v1105 = vld [vmem:[%s1104] sm:$0x1]
    %v1107 = vsel %vm165, %v1092, 0
    %1109 = vmatprep.subr.mxu0 0.0
    %1110 = vmatpush1.msra.mxu0 %v132
    %1111 = vmatprep.subr.mxu0 0.0
    %1112 = vmatpush1.msra.mxu0 %v133
    %1113 = vmatprep.subr.mxu0 0.0
    %1114 = vmatpush1.msra.mxu0 %v134
    %1115 = vmatprep.subr.mxu0 0.0
    %1116 = vmatpush1.msra.mxu0 %v135
    %1117 = vmatprep.subr.mxu0 0.0
    %1118 = vmatpush1.msra.mxu0 0.0
    %1119 = vmatprep.subr.mxu0 0.0
    %1120 = vmatpush1.msra.mxu0 0.0
    %1121 = vmatprep.subr.mxu0 0.0
    %1122 = vmatpush1.msra.mxu0 0.0
    %1123 = vmatprep.subr.mxu0 0.0
    %1124 = vmatpush1.msra.mxu0 0.0
    %1125 = vmatprep.subr.mxu0 0.0
    %1126 = vmatpush1.msra.mxu0 0.0
    %1127 = vmatprep.subr.mxu0 0.0
    %1128 = vmatpush1.msra.mxu0 0.0
    %1129 = vmatprep.subr.mxu0 0.0
    %1130 = vmatpush1.msra.mxu0 0.0
    %1131 = vmatprep.subr.mxu0 0.0
    %1132 = vmatpush1.msra.mxu0 0.0
    %1133 = vmatprep.subr.mxu0 0.0
    %1134 = vmatpush1.msra.mxu0 0.0
    %1135 = vmatprep.subr.mxu0 0.0
    %1136 = vmatpush1.msra.mxu0 0.0
    %1137 = vmatprep.subr.mxu0 0.0
    %1138 = vmatpush1.msra.mxu0 0.0
    %1139 = vmatprep.subr.mxu0 0.0
    %1140 = vmatpush1.msra.mxu0 0.0
    %1141 = vmatprep.subr.mxu0 0.0
    %1142 = vmatpush1.msra.mxu0 0.0
    %1143 = vmatprep.subr.mxu0 0.0
    %1144 = vmatpush1.msra.mxu0 0.0
    %1145 = vmatprep.subr.mxu0 0.0
    %1146 = vmatpush1.msra.mxu0 0.0
    %1147 = vmatprep.subr.mxu0 0.0
    %1148 = vmatpush1.msra.mxu0 0.0
    %1149 = vmatprep.subr.mxu0 0.0
    %1150 = vmatpush1.msra.mxu0 0.0
    %1151 = vmatprep.subr.mxu0 0.0
    %1152 = vmatpush1.msra.mxu0 0.0
    %1153 = vmatprep.subr.mxu0 0.0
    %1154 = vmatpush1.msra.mxu0 0.0
    %1155 = vmatprep.subr.mxu0 0.0
    %1156 = vmatpush1.msra.mxu0 0.0
    %1157 = vmatprep.subr.mxu0 0.0
    %1158 = vmatpush1.msra.mxu0 0.0
    %1159 = vmatprep.subr.mxu0 0.0
    %1160 = vmatpush1.msra.mxu0 0.0
    %1161 = vmatprep.subr.mxu0 0.0
    %1162 = vmatpush1.msra.mxu0 0.0
    %1163 = vmatprep.subr.mxu0 0.0
    %1164 = vmatpush1.msra.mxu0 0.0
    %1165 = vmatprep.subr.mxu0 0.0
    %1166 = vmatpush1.msra.mxu0 0.0
    %1167 = vmatprep.subr.mxu0 0.0
    %1168 = vmatpush1.msra.mxu0 0.0
    %1169 = vmatprep.subr.mxu0 0.0
    %1170 = vmatpush1.msra.mxu0 0.0
    %1171 = vmatprep.subr.mxu0 0.0
    %1172 = vmatpush1.msra.mxu0 0.0
    %1173 = vmatprep.mubr.f32.mxu0 0.0
    %1174 = vmatmul.mubr.f32.gmra.mrb[0].mxu0 %v1107
    %v1175 = vpop.f32.mrb[0].mxu0
    %v1176 = vadd.f32 0.0, %v1175
    %v1177 = vpop.f32.mrb[0].mxu0
    %1178 = vdwg.mxu0
    %v1179 = vadd.f32 %v1105, %v1176
    %1180 = vmatprep.subr.mxu0 0.0
    %1181 = vmatpush1.msra.mxu0 %v136
    %1182 = vmatprep.subr.mxu0 0.0
    %1183 = vmatpush1.msra.mxu0 %v137
    %1184 = vmatprep.subr.mxu0 0.0
    %1185 = vmatpush1.msra.mxu0 %v138
    %1186 = vmatprep.subr.mxu0 0.0
    %1187 = vmatpush1.msra.mxu0 %v139
    %1188 = vmatprep.subr.mxu0 0.0
    %1189 = vmatpush1.msra.mxu0 0.0
    %1190 = vmatprep.subr.mxu0 0.0
    %1191 = vmatpush1.msra.mxu0 0.0
    %1192 = vmatprep.subr.mxu0 0.0
    %1193 = vmatpush1.msra.mxu0 0.0
    %1194 = vmatprep.subr.mxu0 0.0
    %1195 = vmatpush1.msra.mxu0 0.0
    %1196 = vmatprep.subr.mxu0 0.0
    %1197 = vmatpush1.msra.mxu0 0.0
    %1198 = vmatprep.subr.mxu0 0.0
    %1199 = vmatpush1.msra.mxu0 0.0
    %1200 = vmatprep.subr.mxu0 0.0
    %1201 = vmatpush1.msra.mxu0 0.0
    %1202 = vmatprep.subr.mxu0 0.0
    %1203 = vmatpush1.msra.mxu0 0.0
    %1204 = vmatprep.subr.mxu0 0.0
    %1205 = vmatpush1.msra.mxu0 0.0
    %1206 = vmatprep.subr.mxu0 0.0
    %1207 = vmatpush1.msra.mxu0 0.0
    %1208 = vmatprep.subr.mxu0 0.0
    %1209 = vmatpush1.msra.mxu0 0.0
    %1210 = vmatprep.subr.mxu0 0.0
    %1211 = vmatpush1.msra.mxu0 0.0
    %1212 = vmatprep.subr.mxu0 0.0
    %1213 = vmatpush1.msra.mxu0 0.0
    %1214 = vmatprep.subr.mxu0 0.0
    %1215 = vmatpush1.msra.mxu0 0.0
    %1216 = vmatprep.subr.mxu0 0.0
    %1217 = vmatpush1.msra.mxu0 0.0
    %1218 = vmatprep.subr.mxu0 0.0
    %1219 = vmatpush1.msra.mxu0 0.0
    %1220 = vmatprep.subr.mxu0 0.0
    %1221 = vmatpush1.msra.mxu0 0.0
    %1222 = vmatprep.subr.mxu0 0.0
    %1223 = vmatpush1.msra.mxu0 0.0
    %1224 = vmatprep.subr.mxu0 0.0
    %1225 = vmatpush1.msra.mxu0 0.0
    %1226 = vmatprep.subr.mxu0 0.0
    %1227 = vmatpush1.msra.mxu0 0.0
    %1228 = vmatprep.subr.mxu0 0.0
    %1229 = vmatpush1.msra.mxu0 0.0
    %1230 = vmatprep.subr.mxu0 0.0
    %1231 = vmatpush1.msra.mxu0 0.0
    %1232 = vmatprep.subr.mxu0 0.0
    %1233 = vmatpush1.msra.mxu0 0.0
    %1234 = vmatprep.subr.mxu0 0.0
    %1235 = vmatpush1.msra.mxu0 0.0
    %1236 = vmatprep.subr.mxu0 0.0
    %1237 = vmatpush1.msra.mxu0 0.0
    %1238 = vmatprep.subr.mxu0 0.0
    %1239 = vmatpush1.msra.mxu0 0.0
    %1240 = vmatprep.subr.mxu0 0.0
    %1241 = vmatpush1.msra.mxu0 0.0
    %1242 = vmatprep.subr.mxu0 0.0
    %1243 = vmatpush1.msra.mxu0 0.0
    %1244 = vmatprep.mubr.f32.mxu0 0.0
    %1245 = vmatmul.mubr.f32.gmra.mrb[0].mxu0 %v835
    %v1246 = vpop.f32.mrb[0].mxu0
    %v1247 = vadd.f32 %v140, %v1246
    %v1248 = vpop.f32.mrb[0].mxu0
    %1249 = vdwg.mxu0
    %v1250 = vadd.f32 %v1179, %v1247
    %v1251 = vxor.u32 %v1250, 2147483648
    %v1252 = vmul.f32 %v1251, 1.442695
    %v1253 = vpow.pop %v1252
    %v1254 = vadd.f32 %v1253, 1.0
    %v1255 = vrcp.pop %v1254
    %v1256 = vmul.f32 1.0, %v1255
    %v1259 = vunpack.c.l.s4 1966171168
    %v1260 = vunpack.c.0.s8 %v1259
    %v1261 = vlaneseq
    %v1262 = vshrl.u32 %v1261, 7
    %v1263 = vsub.s32 %v1260, %v1262
    %v1264 = vrot.slane %v1247, %v1263
    %v1266 = vunpack.c.l.s4 1966171168
    %v1267 = vunpack.c.0.s8 %v1266
    %v1268 = vlaneseq
    %v1269 = vshrl.u32 %v1268, 7
    %v1270 = vsub.s32 %v1267, %v1269
    %v1271 = vrot.slane %v1264, %v1270
    %1272 = vrot.lane.b32.xlu0 %v1271, 64
    %v1273 = vpop.permute.xlu0 %1272
    %v1275 = vmul.f32 %v1256, %v1273
    %1277 = vrot.lane.b32.xlu0 %v1275, 64
    %v1278 = vpop.permute.xlu0 %1277
    %v1280 = vadd.f32 %v1179, %v1278
    %v1281 = vtanh.pop %v1280
    %v1282 = vsub.f32 1.0, %v1256
    %1284 = vrot.lane.b32.xlu0 %v1281, 96
    %v1285 = vpop.permute.xlu0 %1284
    %v1287 = vmul.f32 %v1282, %v1285
    %v1288 = vmul.f32 %v1256, %v827
    %v1289 = vadd.f32 %v1287, %v1288
    %v1291 = vlaneseq
    %v1292 = vshrl.u32 %v1291, 7
    %v1293 = vsub.s32 0, %v1292
    %v1294 = vrot.slane %v1289, %v1293
    %1295 = vrot.lane.b32.xlu0 %v1294, 96
    %v1296 = vpop.permute.xlu0 %1295
    %v1297 = vsel %vm165, %v1296, 0
    %1299 = vmatprep.subr.mxu0 0.0
    %1300 = vmatpush1.msra.mxu0 %v141
    %1301 = vmatprep.subr.mxu0 0.0
    %1302 = vmatpush1.msra.mxu0 %v142
    %1303 = vmatprep.subr.mxu0 0.0
    %1304 = vmatpush1.msra.mxu0 %v143
    %1305 = vmatprep.subr.mxu0 0.0
    %1306 = vmatpush1.msra.mxu0 %v144
    %1307 = vmatprep.subr.mxu0 0.0
    %1308 = vmatpush1.msra.mxu0 0.0
    %1309 = vmatprep.subr.mxu0 0.0
    %1310 = vmatpush1.msra.mxu0 0.0
    %1311 = vmatprep.subr.mxu0 0.0
    %1312 = vmatpush1.msra.mxu0 0.0
    %1313 = vmatprep.subr.mxu0 0.0
    %1314 = vmatpush1.msra.mxu0 0.0
    %1315 = vmatprep.subr.mxu0 0.0
    %1316 = vmatpush1.msra.mxu0 0.0
    %1317 = vmatprep.subr.mxu0 0.0
    %1318 = vmatpush1.msra.mxu0 0.0
    %1319 = vmatprep.subr.mxu0 0.0
    %1320 = vmatpush1.msra.mxu0 0.0
    %1321 = vmatprep.subr.mxu0 0.0
    %1322 = vmatpush1.msra.mxu0 0.0
    %1323 = vmatprep.subr.mxu0 0.0
    %1324 = vmatpush1.msra.mxu0 0.0
    %1325 = vmatprep.subr.mxu0 0.0
    %1326 = vmatpush1.msra.mxu0 0.0
    %1327 = vmatprep.subr.mxu0 0.0
    %1328 = vmatpush1.msra.mxu0 0.0
    %1329 = vmatprep.subr.mxu0 0.0
    %1330 = vmatpush1.msra.mxu0 0.0
    %1331 = vmatprep.subr.mxu0 0.0
    %1332 = vmatpush1.msra.mxu0 0.0
    %1333 = vmatprep.subr.mxu0 0.0
    %1334 = vmatpush1.msra.mxu0 0.0
    %1335 = vmatprep.subr.mxu0 0.0
    %1336 = vmatpush1.msra.mxu0 0.0
    %1337 = vmatprep.subr.mxu0 0.0
    %1338 = vmatpush1.msra.mxu0 0.0
    %1339 = vmatprep.subr.mxu0 0.0
    %1340 = vmatpush1.msra.mxu0 0.0
    %1341 = vmatprep.subr.mxu0 0.0
    %1342 = vmatpush1.msra.mxu0 0.0
    %1343 = vmatprep.subr.mxu0 0.0
    %1344 = vmatpush1.msra.mxu0 0.0
    %1345 = vmatprep.subr.mxu0 0.0
    %1346 = vmatpush1.msra.mxu0 0.0
    %1347 = vmatprep.subr.mxu0 0.0
    %1348 = vmatpush1.msra.mxu0 0.0
    %1349 = vmatprep.subr.mxu0 0.0
    %1350 = vmatpush1.msra.mxu0 0.0
    %1351 = vmatprep.subr.mxu0 0.0
    %1352 = vmatpush1.msra.mxu0 0.0
    %1353 = vmatprep.subr.mxu0 0.0
    %1354 = vmatpush1.msra.mxu0 0.0
    %1355 = vmatprep.subr.mxu0 0.0
    %1356 = vmatpush1.msra.mxu0 0.0
    %1357 = vmatprep.subr.mxu0 0.0
    %1358 = vmatpush1.msra.mxu0 0.0
    %1359 = vmatprep.subr.mxu0 0.0
    %1360 = vmatpush1.msra.mxu0 0.0
    %1361 = vmatprep.subr.mxu0 0.0
    %1362 = vmatpush1.msra.mxu0 0.0
    %1363 = vmatprep.mubr.f32.mxu0 0.0
    %1364 = vmatmul.mubr.f32.gmra.mrb[0].mxu0 %v1297
    %v1365 = vpop.f32.mrb[0].mxu0
    %v1366 = vadd.f32 %v145, %v1365
    %v1367 = vpop.f32.mrb[0].mxu0
    %1368 = vdwg.mxu0
    %v1369 = vsel %vm165, %v1100, 0
    %1371 = vmatprep.subr.mxu0 0.0
    %1372 = vmatpush1.msra.mxu0 %v146
    %1373 = vmatprep.subr.mxu0 0.0
    %1374 = vmatpush1.msra.mxu0 %v147
    %1375 = vmatprep.subr.mxu0 0.0
    %1376 = vmatpush1.msra.mxu0 %v148
    %1377 = vmatprep.subr.mxu0 0.0
    %1378 = vmatpush1.msra.mxu0 %v149
    %1379 = vmatprep.subr.mxu0 0.0
    %1380 = vmatpush1.msra.mxu0 0.0
    %1381 = vmatprep.subr.mxu0 0.0
    %1382 = vmatpush1.msra.mxu0 0.0
    %1383 = vmatprep.subr.mxu0 0.0
    %1384 = vmatpush1.msra.mxu0 0.0
    %1385 = vmatprep.subr.mxu0 0.0
    %1386 = vmatpush1.msra.mxu0 0.0
    %1387 = vmatprep.subr.mxu0 0.0
    %1388 = vmatpush1.msra.mxu0 0.0
    %1389 = vmatprep.subr.mxu0 0.0
    %1390 = vmatpush1.msra.mxu0 0.0
    %1391 = vmatprep.subr.mxu0 0.0
    %1392 = vmatpush1.msra.mxu0 0.0
    %1393 = vmatprep.subr.mxu0 0.0
    %1394 = vmatpush1.msra.mxu0 0.0
    %1395 = vmatprep.subr.mxu0 0.0
    %1396 = vmatpush1.msra.mxu0 0.0
    %1397 = vmatprep.subr.mxu0 0.0
    %1398 = vmatpush1.msra.mxu0 0.0
    %1399 = vmatprep.subr.mxu0 0.0
    %1400 = vmatpush1.msra.mxu0 0.0
    %1401 = vmatprep.subr.mxu0 0.0
    %1402 = vmatpush1.msra.mxu0 0.0
    %1403 = vmatprep.subr.mxu0 0.0
    %1404 = vmatpush1.msra.mxu0 0.0
    %1405 = vmatprep.subr.mxu0 0.0
    %1406 = vmatpush1.msra.mxu0 0.0
    %1407 = vmatprep.subr.mxu0 0.0
    %1408 = vmatpush1.msra.mxu0 0.0
    %1409 = vmatprep.subr.mxu0 0.0
    %1410 = vmatpush1.msra.mxu0 0.0
    %1411 = vmatprep.subr.mxu0 0.0
    %1412 = vmatpush1.msra.mxu0 0.0
    %1413 = vmatprep.subr.mxu0 0.0
    %1414 = vmatpush1.msra.mxu0 0.0
    %1415 = vmatprep.subr.mxu0 0.0
    %1416 = vmatpush1.msra.mxu0 0.0
    %1417 = vmatprep.subr.mxu0 0.0
    %1418 = vmatpush1.msra.mxu0 0.0
    %1419 = vmatprep.subr.mxu0 0.0
    %1420 = vmatpush1.msra.mxu0 0.0
    %1421 = vmatprep.subr.mxu0 0.0
    %1422 = vmatpush1.msra.mxu0 0.0
    %1423 = vmatprep.subr.mxu0 0.0
    %1424 = vmatpush1.msra.mxu0 0.0
    %1425 = vmatprep.subr.mxu0 0.0
    %1426 = vmatpush1.msra.mxu0 0.0
    %1427 = vmatprep.subr.mxu0 0.0
    %1428 = vmatpush1.msra.mxu0 0.0
    %1429 = vmatprep.subr.mxu0 0.0
    %1430 = vmatpush1.msra.mxu0 0.0
    %1431 = vmatprep.subr.mxu0 0.0
    %1432 = vmatpush1.msra.mxu0 0.0
    %1433 = vmatprep.subr.mxu0 0.0
    %1434 = vmatpush1.msra.mxu0 0.0
    %1435 = vmatprep.mubr.f32.mxu0 0.0
    %1436 = vmatmul.mubr.f32.gmra.mrb[0].mxu0 %v1369
    %v1437 = vpop.f32.mrb[0].mxu0
    %v1438 = vadd.f32 %v150, %v1437
    %v1439 = vpop.f32.mrb[0].mxu0
    %1440 = vdwg.mxu0
    %v1441 = vadd.f32 %v1366, %v1438
    %v1442 = vxor.u32 %v1441, 2147483648
    %v1443 = vmul.f32 %v1442, 1.442695
    %v1444 = vpow.pop %v1443
    %v1445 = vadd.f32 %v1444, 1.0
    %v1446 = vrcp.pop %v1445
    %v1447 = vmul.f32 1.0, %v1446
    %1449 = vrot.lane.b32.xlu0 %v1438, 64
    %v1450 = vpop.permute.xlu0 %1449
    %v1452 = vmul.f32 %v1447, %v1450
    %1454 = vrot.lane.b32.xlu0 %v1452, 64
    %v1455 = vpop.permute.xlu0 %1454
    %v1457 = vadd.f32 %v1366, %v1455
    %v1458 = vtanh.pop %v1457
    %v1459 = vsub.f32 1.0, %v1447
    %1461 = vrot.lane.b32.xlu0 %v1458, 96
    %v1462 = vpop.permute.xlu0 %1461
    %v1464 = vmul.f32 %v1459, %v1462
    %v1465 = vmul.f32 %v1447, %v1004
    %v1466 = vadd.f32 %v1464, %v1465
    %1468 = vset.pattern.permute.xlu0 32
    %1469 = vperm.xlu0 %1468, %v1466
    %v1470 = vpop.permute.xlu0 %1469
    %v1472 = vmul.f32 %v1470, %v152
    %v1473 = vsel %vm547, %v1472, -inf
    %1474 = vmax.xlane.f32.xlu0 %v1473
    %v1475 = vpop.xlane.xlu0 %1474
    %v1476 = vsub.f32 %v1472, %v1475
    %v1477 = vmul.f32 %v1476, 1.442695
    %v1478 = vpow.pop %v1477
    %v1479 = vsel %vm547, %v1478, 0.0
    %1480 = vadd.xlane.f32.xlu0 %v1479
    %v1481 = vpop.xlane.xlu0 %1480
    %v1482 = vrcp.pop %v1481
    %v1483 = vmul.f32 %v1478, %v1482
    %v1485 = vsel %vm559, %v1483, 0
    %1487 = vmatprep.subr.mxu0 0.0
    %1488 = vmatpush1.msra.mxu0 %v151
    %1489 = vmatprep.subr.mxu0 0.0
    %1490 = vmatpush1.msra.mxu0 0.0
    %1491 = vmatprep.subr.mxu0 0.0
    %1492 = vmatpush1.msra.mxu0 0.0
    %1493 = vmatprep.subr.mxu0 0.0
    %1494 = vmatpush1.msra.mxu0 0.0
    %1495 = vmatprep.subr.mxu0 0.0
    %1496 = vmatpush1.msra.mxu0 0.0
    %1497 = vmatprep.subr.mxu0 0.0
    %1498 = vmatpush1.msra.mxu0 0.0
    %1499 = vmatprep.subr.mxu0 0.0
    %1500 = vmatpush1.msra.mxu0 0.0
    %1501 = vmatprep.subr.mxu0 0.0
    %1502 = vmatpush1.msra.mxu0 0.0
    %1503 = vmatprep.subr.mxu0 0.0
    %1504 = vmatpush1.msra.mxu0 0.0
    %1505 = vmatprep.subr.mxu0 0.0
    %1506 = vmatpush1.msra.mxu0 0.0
    %1507 = vmatprep.subr.mxu0 0.0
    %1508 = vmatpush1.msra.mxu0 0.0
    %1509 = vmatprep.subr.mxu0 0.0
    %1510 = vmatpush1.msra.mxu0 0.0
    %1511 = vmatprep.subr.mxu0 0.0
    %1512 = vmatpush1.msra.mxu0 0.0
    %1513 = vmatprep.subr.mxu0 0.0
    %1514 = vmatpush1.msra.mxu0 0.0
    %1515 = vmatprep.subr.mxu0 0.0
    %1516 = vmatpush1.msra.mxu0 0.0
    %1517 = vmatprep.subr.mxu0 0.0
    %1518 = vmatpush1.msra.mxu0 0.0
    %1519 = vmatprep.subr.mxu0 0.0
    %1520 = vmatpush1.msra.mxu0 0.0
    %1521 = vmatprep.subr.mxu0 0.0
    %1522 = vmatpush1.msra.mxu0 0.0
    %1523 = vmatprep.subr.mxu0 0.0
    %1524 = vmatpush1.msra.mxu0 0.0
    %1525 = vmatprep.subr.mxu0 0.0
    %1526 = vmatpush1.msra.mxu0 0.0
    %1527 = vmatprep.subr.mxu0 0.0
    %1528 = vmatpush1.msra.mxu0 0.0
    %1529 = vmatprep.subr.mxu0 0.0
    %1530 = vmatpush1.msra.mxu0 0.0
    %1531 = vmatprep.subr.mxu0 0.0
    %1532 = vmatpush1.msra.mxu0 0.0
    %1533 = vmatprep.subr.mxu0 0.0
    %1534 = vmatpush1.msra.mxu0 0.0
    %1535 = vmatprep.subr.mxu0 0.0
    %1536 = vmatpush1.msra.mxu0 0.0
    %1537 = vmatprep.subr.mxu0 0.0
    %1538 = vmatpush1.msra.mxu0 0.0
    %1539 = vmatprep.subr.mxu0 0.0
    %1540 = vmatpush1.msra.mxu0 0.0
    %1541 = vmatprep.subr.mxu0 0.0
    %1542 = vmatpush1.msra.mxu0 0.0
    %1543 = vmatprep.subr.mxu0 0.0
    %1544 = vmatpush1.msra.mxu0 0.0
    %1545 = vmatprep.subr.mxu0 0.0
    %1546 = vmatpush1.msra.mxu0 0.0
    %1547 = vmatprep.subr.mxu0 0.0
    %1548 = vmatpush1.msra.mxu0 0.0
    %1549 = vmatprep.subr.mxu0 0.0
    %1550 = vmatpush1.msra.mxu0 0.0
    %1551 = vmatprep.mubr.f32.mxu0 0.0
    %1552 = vmatmul.mubr.f32.gmra.mrb[0].mxu0 %v1485
    %v1553 = vpop.f32.mrb[0].mxu0
    %v1554 = vadd.f32 0.0, %v1553
    %v1555 = vpop.f32.mrb[0].mxu0
    %1556 = vdwg.mxu0
    %s1557 = scalar_lea.vmem [#allocation16], 16
    %1558 = vst.msk [vmem:[%s1557] sm:$0x1] %vm633, %v1554
    %1560 = vst.msk [vmem:[%s1557 + $0x1] sm:$0x1] %vm633, %v1296
    %1561 = vrot.lane.b32.xlu0 %v1466, 96
    %v1562 = vpop.permute.xlu0 %1561
    %1564 = vst.msk [vmem:[%s1557 + $0x2] sm:$0x1] %vm633, %v1562
    %1565 = vst.msk [vmem:[%s1557 + $0x3] sm:$0x1] %vm547, %v1483
    %s1566 = scalar_lea.vmem [#allocation5], 3
    %v1567 = vld [vmem:[%s1566] sm:$0x1]
    %v1569 = vsel %vm165, %v1554, 0
    %1571 = vmatprep.subr.mxu0 0.0
    %1572 = vmatpush1.msra.mxu0 %v132
    %1573 = vmatprep.subr.mxu0 0.0
    %1574 = vmatpush1.msra.mxu0 %v133
    %1575 = vmatprep.subr.mxu0 0.0
    %1576 = vmatpush1.msra.mxu0 %v134
    %1577 = vmatprep.subr.mxu0 0.0
    %1578 = vmatpush1.msra.mxu0 %v135
    %1579 = vmatprep.subr.mxu0 0.0
    %1580 = vmatpush1.msra.mxu0 0.0
    %1581 = vmatprep.subr.mxu0 0.0
    %1582 = vmatpush1.msra.mxu0 0.0
    %1583 = vmatprep.subr.mxu0 0.0
    %1584 = vmatpush1.msra.mxu0 0.0
    %1585 = vmatprep.subr.mxu0 0.0
    %1586 = vmatpush1.msra.mxu0 0.0
    %1587 = vmatprep.subr.mxu0 0.0
    %1588 = vmatpush1.msra.mxu0 0.0
    %1589 = vmatprep.subr.mxu0 0.0
    %1590 = vmatpush1.msra.mxu0 0.0
    %1591 = vmatprep.subr.mxu0 0.0
    %1592 = vmatpush1.msra.mxu0 0.0
    %1593 = vmatprep.subr.mxu0 0.0
    %1594 = vmatpush1.msra.mxu0 0.0
    %1595 = vmatprep.subr.mxu0 0.0
    %1596 = vmatpush1.msra.mxu0 0.0
    %1597 = vmatprep.subr.mxu0 0.0
    %1598 = vmatpush1.msra.mxu0 0.0
    %1599 = vmatprep.subr.mxu0 0.0
    %1600 = vmatpush1.msra.mxu0 0.0
    %1601 = vmatprep.subr.mxu0 0.0
    %1602 = vmatpush1.msra.mxu0 0.0
    %1603 = vmatprep.subr.mxu0 0.0
    %1604 = vmatpush1.msra.mxu0 0.0
    %1605 = vmatprep.subr.mxu0 0.0
    %1606 = vmatpush1.msra.mxu0 0.0
    %1607 = vmatprep.subr.mxu0 0.0
    %1608 = vmatpush1.msra.mxu0 0.0
    %1609 = vmatprep.subr.mxu0 0.0
    %1610 = vmatpush1.msra.mxu0 0.0
    %1611 = vmatprep.subr.mxu0 0.0
    %1612 = vmatpush1.msra.mxu0 0.0
    %1613 = vmatprep.subr.mxu0 0.0
    %1614 = vmatpush1.msra.mxu0 0.0
    %1615 = vmatprep.subr.mxu0 0.0
    %1616 = vmatpush1.msra.mxu0 0.0
    %1617 = vmatprep.subr.mxu0 0.0
    %1618 = vmatpush1.msra.mxu0 0.0
    %1619 = vmatprep.subr.mxu0 0.0
    %1620 = vmatpush1.msra.mxu0 0.0
    %1621 = vmatprep.subr.mxu0 0.0
    %1622 = vmatpush1.msra.mxu0 0.0
    %1623 = vmatprep.subr.mxu0 0.0
    %1624 = vmatpush1.msra.mxu0 0.0
    %1625 = vmatprep.subr.mxu0 0.0
    %1626 = vmatpush1.msra.mxu0 0.0
    %1627 = vmatprep.subr.mxu0 0.0
    %1628 = vmatpush1.msra.mxu0 0.0
    %1629 = vmatprep.subr.mxu0 0.0
    %1630 = vmatpush1.msra.mxu0 0.0
    %1631 = vmatprep.subr.mxu0 0.0
    %1632 = vmatpush1.msra.mxu0 0.0
    %1633 = vmatprep.subr.mxu0 0.0
    %1634 = vmatpush1.msra.mxu0 0.0
    %1635 = vmatprep.mubr.f32.mxu0 0.0
    %1636 = vmatmul.mubr.f32.gmra.mrb[0].mxu0 %v1569
    %v1637 = vpop.f32.mrb[0].mxu0
    %v1638 = vadd.f32 0.0, %v1637
    %v1639 = vpop.f32.mrb[0].mxu0
    %1640 = vdwg.mxu0
    %v1641 = vadd.f32 %v1567, %v1638
    %1642 = vmatprep.subr.mxu0 0.0
    %1643 = vmatpush1.msra.mxu0 %v136
    %1644 = vmatprep.subr.mxu0 0.0
    %1645 = vmatpush1.msra.mxu0 %v137
    %1646 = vmatprep.subr.mxu0 0.0
    %1647 = vmatpush1.msra.mxu0 %v138
    %1648 = vmatprep.subr.mxu0 0.0
    %1649 = vmatpush1.msra.mxu0 %v139
    %1650 = vmatprep.subr.mxu0 0.0
    %1651 = vmatpush1.msra.mxu0 0.0
    %1652 = vmatprep.subr.mxu0 0.0
    %1653 = vmatpush1.msra.mxu0 0.0
    %1654 = vmatprep.subr.mxu0 0.0
    %1655 = vmatpush1.msra.mxu0 0.0
    %1656 = vmatprep.subr.mxu0 0.0
    %1657 = vmatpush1.msra.mxu0 0.0
    %1658 = vmatprep.subr.mxu0 0.0
    %1659 = vmatpush1.msra.mxu0 0.0
    %1660 = vmatprep.subr.mxu0 0.0
    %1661 = vmatpush1.msra.mxu0 0.0
    %1662 = vmatprep.subr.mxu0 0.0
    %1663 = vmatpush1.msra.mxu0 0.0
    %1664 = vmatprep.subr.mxu0 0.0
    %1665 = vmatpush1.msra.mxu0 0.0
    %1666 = vmatprep.subr.mxu0 0.0
    %1667 = vmatpush1.msra.mxu0 0.0
    %1668 = vmatprep.subr.mxu0 0.0
    %1669 = vmatpush1.msra.mxu0 0.0
    %1670 = vmatprep.subr.mxu0 0.0
    %1671 = vmatpush1.msra.mxu0 0.0
    %1672 = vmatprep.subr.mxu0 0.0
    %1673 = vmatpush1.msra.mxu0 0.0
    %1674 = vmatprep.subr.mxu0 0.0
    %1675 = vmatpush1.msra.mxu0 0.0
    %1676 = vmatprep.subr.mxu0 0.0
    %1677 = vmatpush1.msra.mxu0 0.0
    %1678 = vmatprep.subr.mxu0 0.0
    %1679 = vmatpush1.msra.mxu0 0.0
    %1680 = vmatprep.subr.mxu0 0.0
    %1681 = vmatpush1.msra.mxu0 0.0
    %1682 = vmatprep.subr.mxu0 0.0
    %1683 = vmatpush1.msra.mxu0 0.0
    %1684 = vmatprep.subr.mxu0 0.0
    %1685 = vmatpush1.msra.mxu0 0.0
    %1686 = vmatprep.subr.mxu0 0.0
    %1687 = vmatpush1.msra.mxu0 0.0
    %1688 = vmatprep.subr.mxu0 0.0
    %1689 = vmatpush1.msra.mxu0 0.0
    %1690 = vmatprep.subr.mxu0 0.0
    %1691 = vmatpush1.msra.mxu0 0.0
    %1692 = vmatprep.subr.mxu0 0.0
    %1693 = vmatpush1.msra.mxu0 0.0
    %1694 = vmatprep.subr.mxu0 0.0
    %1695 = vmatpush1.msra.mxu0 0.0
    %1696 = vmatprep.subr.mxu0 0.0
    %1697 = vmatpush1.msra.mxu0 0.0
    %1698 = vmatprep.subr.mxu0 0.0
    %1699 = vmatpush1.msra.mxu0 0.0
    %1700 = vmatprep.subr.mxu0 0.0
    %1701 = vmatpush1.msra.mxu0 0.0
    %1702 = vmatprep.subr.mxu0 0.0
    %1703 = vmatpush1.msra.mxu0 0.0
    %1704 = vmatprep.subr.mxu0 0.0
    %1705 = vmatpush1.msra.mxu0 0.0
    %1706 = vmatprep.mubr.f32.mxu0 0.0
    %1707 = vmatmul.mubr.f32.gmra.mrb[0].mxu0 %v1297
    %v1708 = vpop.f32.mrb[0].mxu0
    %v1709 = vadd.f32 %v140, %v1708
    %v1710 = vpop.f32.mrb[0].mxu0
    %1711 = vdwg.mxu0
    %v1712 = vadd.f32 %v1641, %v1709
    %v1713 = vxor.u32 %v1712, 2147483648
    %v1714 = vmul.f32 %v1713, 1.442695
    %v1715 = vpow.pop %v1714
    %v1716 = vadd.f32 %v1715, 1.0
    %v1717 = vrcp.pop %v1716
    %v1718 = vmul.f32 1.0, %v1717
    %v1721 = vunpack.c.l.s4 1966171168
    %v1722 = vunpack.c.0.s8 %v1721
    %v1723 = vlaneseq
    %v1724 = vshrl.u32 %v1723, 7
    %v1725 = vsub.s32 %v1722, %v1724
    %v1726 = vrot.slane %v1709, %v1725
    %v1728 = vunpack.c.l.s4 1966171168
    %v1729 = vunpack.c.0.s8 %v1728
    %v1730 = vlaneseq
    %v1731 = vshrl.u32 %v1730, 7
    %v1732 = vsub.s32 %v1729, %v1731
    %v1733 = vrot.slane %v1726, %v1732
    %1734 = vrot.lane.b32.xlu0 %v1733, 64
    %v1735 = vpop.permute.xlu0 %1734
    %v1737 = vmul.f32 %v1718, %v1735
    %1739 = vrot.lane.b32.xlu0 %v1737, 64
    %v1740 = vpop.permute.xlu0 %1739
    %v1742 = vadd.f32 %v1641, %v1740
    %v1743 = vtanh.pop %v1742
    %v1744 = vsub.f32 1.0, %v1718
    %1746 = vrot.lane.b32.xlu0 %v1743, 96
    %v1747 = vpop.permute.xlu0 %1746
    %v1749 = vmul.f32 %v1744, %v1747
    %v1750 = vmul.f32 %v1718, %v1289
    %v1751 = vadd.f32 %v1749, %v1750
    %v1753 = vlaneseq
    %v1754 = vshrl.u32 %v1753, 7
    %v1755 = vsub.s32 0, %v1754
    %v1756 = vrot.slane %v1751, %v1755
    %1757 = vrot.lane.b32.xlu0 %v1756, 96
    %v1758 = vpop.permute.xlu0 %1757
    %v1759 = vsel %vm165, %v1758, 0
    %1761 = vmatprep.subr.mxu0 0.0
    %1762 = vmatpush1.msra.mxu0 %v141
    %1763 = vmatprep.subr.mxu0 0.0
    %1764 = vmatpush1.msra.mxu0 %v142
    %1765 = vmatprep.subr.mxu0 0.0
    %1766 = vmatpush1.msra.mxu0 %v143
    %1767 = vmatprep.subr.mxu0 0.0
    %1768 = vmatpush1.msra.mxu0 %v144
    %1769 = vmatprep.subr.mxu0 0.0
    %1770 = vmatpush1.msra.mxu0 0.0
    %1771 = vmatprep.subr.mxu0 0.0
    %1772 = vmatpush1.msra.mxu0 0.0
    %1773 = vmatprep.subr.mxu0 0.0
    %1774 = vmatpush1.msra.mxu0 0.0
    %1775 = vmatprep.subr.mxu0 0.0
    %1776 = vmatpush1.msra.mxu0 0.0
    %1777 = vmatprep.subr.mxu0 0.0
    %1778 = vmatpush1.msra.mxu0 0.0
    %1779 = vmatprep.subr.mxu0 0.0
    %1780 = vmatpush1.msra.mxu0 0.0
    %1781 = vmatprep.subr.mxu0 0.0
    %1782 = vmatpush1.msra.mxu0 0.0
    %1783 = vmatprep.subr.mxu0 0.0
    %1784 = vmatpush1.msra.mxu0 0.0
    %1785 = vmatprep.subr.mxu0 0.0
    %1786 = vmatpush1.msra.mxu0 0.0
    %1787 = vmatprep.subr.mxu0 0.0
    %1788 = vmatpush1.msra.mxu0 0.0
    %1789 = vmatprep.subr.mxu0 0.0
    %1790 = vmatpush1.msra.mxu0 0.0
    %1791 = vmatprep.subr.mxu0 0.0
    %1792 = vmatpush1.msra.mxu0 0.0
    %1793 = vmatprep.subr.mxu0 0.0
    %1794 = vmatpush1.msra.mxu0 0.0
    %1795 = vmatprep.subr.mxu0 0.0
    %1796 = vmatpush1.msra.mxu0 0.0
    %1797 = vmatprep.subr.mxu0 0.0
    %1798 = vmatpush1.msra.mxu0 0.0
    %1799 = vmatprep.subr.mxu0 0.0
    %1800 = vmatpush1.msra.mxu0 0.0
    %1801 = vmatprep.subr.mxu0 0.0
    %1802 = vmatpush1.msra.mxu0 0.0
    %1803 = vmatprep.subr.mxu0 0.0
    %1804 = vmatpush1.msra.mxu0 0.0
    %1805 = vmatprep.subr.mxu0 0.0
    %1806 = vmatpush1.msra.mxu0 0.0
    %1807 = vmatprep.subr.mxu0 0.0
    %1808 = vmatpush1.msra.mxu0 0.0
    %1809 = vmatprep.subr.mxu0 0.0
    %1810 = vmatpush1.msra.mxu0 0.0
    %1811 = vmatprep.subr.mxu0 0.0
    %1812 = vmatpush1.msra.mxu0 0.0
    %1813 = vmatprep.subr.mxu0 0.0
    %1814 = vmatpush1.msra.mxu0 0.0
    %1815 = vmatprep.subr.mxu0 0.0
    %1816 = vmatpush1.msra.mxu0 0.0
    %1817 = vmatprep.subr.mxu0 0.0
    %1818 = vmatpush1.msra.mxu0 0.0
    %1819 = vmatprep.subr.mxu0 0.0
    %1820 = vmatpush1.msra.mxu0 0.0
    %1821 = vmatprep.subr.mxu0 0.0
    %1822 = vmatpush1.msra.mxu0 0.0
    %1823 = vmatprep.subr.mxu0 0.0
    %1824 = vmatpush1.msra.mxu0 0.0
    %1825 = vmatprep.mubr.f32.mxu0 0.0
    %1826 = vmatmul.mubr.f32.gmra.mrb[0].mxu0 %v1759
    %v1827 = vpop.f32.mrb[0].mxu0
    %v1828 = vadd.f32 %v145, %v1827
    %v1829 = vpop.f32.mrb[0].mxu0
    %1830 = vdwg.mxu0
    %v1831 = vsel %vm165, %v1562, 0
    %1833 = vmatprep.subr.mxu0 0.0
    %1834 = vmatpush1.msra.mxu0 %v146
    %1835 = vmatprep.subr.mxu0 0.0
    %1836 = vmatpush1.msra.mxu0 %v147
    %1837 = vmatprep.subr.mxu0 0.0
    %1838 = vmatpush1.msra.mxu0 %v148
    %1839 = vmatprep.subr.mxu0 0.0
    %1840 = vmatpush1.msra.mxu0 %v149
    %1841 = vmatprep.subr.mxu0 0.0
    %1842 = vmatpush1.msra.mxu0 0.0
    %1843 = vmatprep.subr.mxu0 0.0
    %1844 = vmatpush1.msra.mxu0 0.0
    %1845 = vmatprep.subr.mxu0 0.0
    %1846 = vmatpush1.msra.mxu0 0.0
    %1847 = vmatprep.subr.mxu0 0.0
    %1848 = vmatpush1.msra.mxu0 0.0
    %1849 = vmatprep.subr.mxu0 0.0
    %1850 = vmatpush1.msra.mxu0 0.0
    %1851 = vmatprep.subr.mxu0 0.0
    %1852 = vmatpush1.msra.mxu0 0.0
    %1853 = vmatprep.subr.mxu0 0.0
    %1854 = vmatpush1.msra.mxu0 0.0
    %1855 = vmatprep.subr.mxu0 0.0
    %1856 = vmatpush1.msra.mxu0 0.0
    %1857 = vmatprep.subr.mxu0 0.0
    %1858 = vmatpush1.msra.mxu0 0.0
    %1859 = vmatprep.subr.mxu0 0.0
    %1860 = vmatpush1.msra.mxu0 0.0
    %1861 = vmatprep.subr.mxu0 0.0
    %1862 = vmatpush1.msra.mxu0 0.0
    %1863 = vmatprep.subr.mxu0 0.0
    %1864 = vmatpush1.msra.mxu0 0.0
    %1865 = vmatprep.subr.mxu0 0.0
    %1866 = vmatpush1.msra.mxu0 0.0
    %1867 = vmatprep.subr.mxu0 0.0
    %1868 = vmatpush1.msra.mxu0 0.0
    %1869 = vmatprep.subr.mxu0 0.0
    %1870 = vmatpush1.msra.mxu0 0.0
    %1871 = vmatprep.subr.mxu0 0.0
    %1872 = vmatpush1.msra.mxu0 0.0
    %1873 = vmatprep.subr.mxu0 0.0
    %1874 = vmatpush1.msra.mxu0 0.0
    %1875 = vmatprep.subr.mxu0 0.0
    %1876 = vmatpush1.msra.mxu0 0.0
    %1877 = vmatprep.subr.mxu0 0.0
    %1878 = vmatpush1.msra.mxu0 0.0
    %1879 = vmatprep.subr.mxu0 0.0
    %1880 = vmatpush1.msra.mxu0 0.0
    %1881 = vmatprep.subr.mxu0 0.0
    %1882 = vmatpush1.msra.mxu0 0.0
    %1883 = vmatprep.subr.mxu0 0.0
    %1884 = vmatpush1.msra.mxu0 0.0
    %1885 = vmatprep.subr.mxu0 0.0
    %1886 = vmatpush1.msra.mxu0 0.0
    %1887 = vmatprep.subr.mxu0 0.0
    %1888 = vmatpush1.msra.mxu0 0.0
    %1889 = vmatprep.subr.mxu0 0.0
    %1890 = vmatpush1.msra.mxu0 0.0
    %1891 = vmatprep.subr.mxu0 0.0
    %1892 = vmatpush1.msra.mxu0 0.0
    %1893 = vmatprep.subr.mxu0 0.0
    %1894 = vmatpush1.msra.mxu0 0.0
    %1895 = vmatprep.subr.mxu0 0.0
    %1896 = vmatpush1.msra.mxu0 0.0
    %1897 = vmatprep.mubr.f32.mxu0 0.0
    %1898 = vmatmul.mubr.f32.gmra.mrb[0].mxu0 %v1831
    %v1899 = vpop.f32.mrb[0].mxu0
    %v1900 = vadd.f32 %v150, %v1899
    %v1901 = vpop.f32.mrb[0].mxu0
    %1902 = vdwg.mxu0
    %v1903 = vadd.f32 %v1828, %v1900
    %v1904 = vxor.u32 %v1903, 2147483648
    %v1905 = vmul.f32 %v1904, 1.442695
    %v1906 = vpow.pop %v1905
    %v1907 = vadd.f32 %v1906, 1.0
    %v1908 = vrcp.pop %v1907
    %v1909 = vmul.f32 1.0, %v1908
    %1911 = vrot.lane.b32.xlu0 %v1900, 64
    %v1912 = vpop.permute.xlu0 %1911
    %v1914 = vmul.f32 %v1909, %v1912
    %1916 = vrot.lane.b32.xlu0 %v1914, 64
    %v1917 = vpop.permute.xlu0 %1916
    %v1919 = vadd.f32 %v1828, %v1917
    %v1920 = vtanh.pop %v1919
    %v1921 = vsub.f32 1.0, %v1909
    %1923 = vrot.lane.b32.xlu0 %v1920, 96
    %v1924 = vpop.permute.xlu0 %1923
    %v1926 = vmul.f32 %v1921, %v1924
    %v1927 = vmul.f32 %v1909, %v1466
    %v1928 = vadd.f32 %v1926, %v1927
    %1930 = vset.pattern.permute.xlu0 32
    %1931 = vperm.xlu0 %1930, %v1928
    %v1932 = vpop.permute.xlu0 %1931
    %v1934 = vmul.f32 %v1932, %v152
    %v1935 = vsel %vm547, %v1934, -inf
    %1936 = vmax.xlane.f32.xlu0 %v1935
    %v1937 = vpop.xlane.xlu0 %1936
    %v1938 = vsub.f32 %v1934, %v1937
    %v1939 = vmul.f32 %v1938, 1.442695
    %v1940 = vpow.pop %v1939
    %v1941 = vsel %vm547, %v1940, 0.0
    %1942 = vadd.xlane.f32.xlu0 %v1941
    %v1943 = vpop.xlane.xlu0 %1942
    %v1944 = vrcp.pop %v1943
    %v1945 = vmul.f32 %v1940, %v1944
    %v1947 = vsel %vm559, %v1945, 0
    %1949 = vmatprep.subr.mxu0 0.0
    %1950 = vmatpush1.msra.mxu0 %v151
    %1951 = vmatprep.subr.mxu0 0.0
    %1952 = vmatpush1.msra.mxu0 0.0
    %1953 = vmatprep.subr.mxu0 0.0
    %1954 = vmatpush1.msra.mxu0 0.0
    %1955 = vmatprep.subr.mxu0 0.0
    %1956 = vmatpush1.msra.mxu0 0.0
    %1957 = vmatprep.subr.mxu0 0.0
    %1958 = vmatpush1.msra.mxu0 0.0
    %1959 = vmatprep.subr.mxu0 0.0
    %1960 = vmatpush1.msra.mxu0 0.0
    %1961 = vmatprep.subr.mxu0 0.0
    %1962 = vmatpush1.msra.mxu0 0.0
    %1963 = vmatprep.subr.mxu0 0.0
    %1964 = vmatpush1.msra.mxu0 0.0
    %1965 = vmatprep.subr.mxu0 0.0
    %1966 = vmatpush1.msra.mxu0 0.0
    %1967 = vmatprep.subr.mxu0 0.0
    %1968 = vmatpush1.msra.mxu0 0.0
    %1969 = vmatprep.subr.mxu0 0.0
    %1970 = vmatpush1.msra.mxu0 0.0
    %1971 = vmatprep.subr.mxu0 0.0
    %1972 = vmatpush1.msra.mxu0 0.0
    %1973 = vmatprep.subr.mxu0 0.0
    %1974 = vmatpush1.msra.mxu0 0.0
    %1975 = vmatprep.subr.mxu0 0.0
    %1976 = vmatpush1.msra.mxu0 0.0
    %1977 = vmatprep.subr.mxu0 0.0
    %1978 = vmatpush1.msra.mxu0 0.0
    %1979 = vmatprep.subr.mxu0 0.0
    %1980 = vmatpush1.msra.mxu0 0.0
    %1981 = vmatprep.subr.mxu0 0.0
    %1982 = vmatpush1.msra.mxu0 0.0
    %1983 = vmatprep.subr.mxu0 0.0
    %1984 = vmatpush1.msra.mxu0 0.0
    %1985 = vmatprep.subr.mxu0 0.0
    %1986 = vmatpush1.msra.mxu0 0.0
    %1987 = vmatprep.subr.mxu0 0.0
    %1988 = vmatpush1.msra.mxu0 0.0
    %1989 = vmatprep.subr.mxu0 0.0
    %1990 = vmatpush1.msra.mxu0 0.0
    %1991 = vmatprep.subr.mxu0 0.0
    %1992 = vmatpush1.msra.mxu0 0.0
    %1993 = vmatprep.subr.mxu0 0.0
    %1994 = vmatpush1.msra.mxu0 0.0
    %1995 = vmatprep.subr.mxu0 0.0
    %1996 = vmatpush1.msra.mxu0 0.0
    %1997 = vmatprep.subr.mxu0 0.0
    %1998 = vmatpush1.msra.mxu0 0.0
    %1999 = vmatprep.subr.mxu0 0.0
    %2000 = vmatpush1.msra.mxu0 0.0
    %2001 = vmatprep.subr.mxu0 0.0
    %2002 = vmatpush1.msra.mxu0 0.0
    %2003 = vmatprep.subr.mxu0 0.0
    %2004 = vmatpush1.msra.mxu0 0.0
    %2005 = vmatprep.subr.mxu0 0.0
    %2006 = vmatpush1.msra.mxu0 0.0
    %2007 = vmatprep.subr.mxu0 0.0
    %2008 = vmatpush1.msra.mxu0 0.0
    %2009 = vmatprep.subr.mxu0 0.0
    %2010 = vmatpush1.msra.mxu0 0.0
    %2011 = vmatprep.subr.mxu0 0.0
    %2012 = vmatpush1.msra.mxu0 0.0
    %2013 = vmatprep.mubr.f32.mxu0 0.0
    %2014 = vmatmul.mubr.f32.gmra.mrb[0].mxu0 %v1947
    %v2015 = vpop.f32.mrb[0].mxu0
    %v2016 = vadd.f32 0.0, %v2015
    %v2017 = vpop.f32.mrb[0].mxu0
    %2018 = vdwg.mxu0
    %s2019 = scalar_lea.vmem [#allocation16], 24
    %2020 = vst.msk [vmem:[%s2019] sm:$0x1] %vm633, %v2016
    %2022 = vst.msk [vmem:[%s2019 + $0x1] sm:$0x1] %vm633, %v1758
    %2023 = vrot.lane.b32.xlu0 %v1928, 96
    %v2024 = vpop.permute.xlu0 %2023
    %2026 = vst.msk [vmem:[%s2019 + $0x2] sm:$0x1] %vm633, %v2024
    %2027 = vst.msk [vmem:[%s2019 + $0x3] sm:$0x1] %vm547, %v1945
    %s2028 = scalar_lea.vmem [#allocation5], 4
    %v2029 = vld [vmem:[%s2028] sm:$0x1]
    %v2031 = vsel %vm165, %v2016, 0
    %2033 = vmatprep.subr.mxu0 0.0
    %2034 = vmatpush1.msra.mxu0 %v132
    %2035 = vmatprep.subr.mxu0 0.0
    %2036 = vmatpush1.msra.mxu0 %v133
    %2037 = vmatprep.subr.mxu0 0.0
    %2038 = vmatpush1.msra.mxu0 %v134
    %2039 = vmatprep.subr.mxu0 0.0
    %2040 = vmatpush1.msra.mxu0 %v135
    %2041 = vmatprep.subr.mxu0 0.0
    %2042 = vmatpush1.msra.mxu0 0.0
    %2043 = vmatprep.subr.mxu0 0.0
    %2044 = vmatpush1.msra.mxu0 0.0
    %2045 = vmatprep.subr.mxu0 0.0
    %2046 = vmatpush1.msra.mxu0 0.0
    %2047 = vmatprep.subr.mxu0 0.0
    %2048 = vmatpush1.msra.mxu0 0.0
    %2049 = vmatprep.subr.mxu0 0.0
    %2050 = vmatpush1.msra.mxu0 0.0
    %2051 = vmatprep.subr.mxu0 0.0
    %2052 = vmatpush1.msra.mxu0 0.0
    %2053 = vmatprep.subr.mxu0 0.0
    %2054 = vmatpush1.msra.mxu0 0.0
    %2055 = vmatprep.subr.mxu0 0.0
    %2056 = vmatpush1.msra.mxu0 0.0
    %2057 = vmatprep.subr.mxu0 0.0
    %2058 = vmatpush1.msra.mxu0 0.0
    %2059 = vmatprep.subr.mxu0 0.0
    %2060 = vmatpush1.msra.mxu0 0.0
    %2061 = vmatprep.subr.mxu0 0.0
    %2062 = vmatpush1.msra.mxu0 0.0
    %2063 = vmatprep.subr.mxu0 0.0
    %2064 = vmatpush1.msra.mxu0 0.0
    %2065 = vmatprep.subr.mxu0 0.0
    %2066 = vmatpush1.msra.mxu0 0.0
    %2067 = vmatprep.subr.mxu0 0.0
    %2068 = vmatpush1.msra.mxu0 0.0
    %2069 = vmatprep.subr.mxu0 0.0
    %2070 = vmatpush1.msra.mxu0 0.0
    %2071 = vmatprep.subr.mxu0 0.0
    %2072 = vmatpush1.msra.mxu0 0.0
    %2073 = vmatprep.subr.mxu0 0.0
    %2074 = vmatpush1.msra.mxu0 0.0
    %2075 = vmatprep.subr.mxu0 0.0
    %2076 = vmatpush1.msra.mxu0 0.0
    %2077 = vmatprep.subr.mxu0 0.0
    %2078 = vmatpush1.msra.mxu0 0.0
    %2079 = vmatprep.subr.mxu0 0.0
    %2080 = vmatpush1.msra.mxu0 0.0
    %2081 = vmatprep.subr.mxu0 0.0
    %2082 = vmatpush1.msra.mxu0 0.0
    %2083 = vmatprep.subr.mxu0 0.0
    %2084 = vmatpush1.msra.mxu0 0.0
    %2085 = vmatprep.subr.mxu0 0.0
    %2086 = vmatpush1.msra.mxu0 0.0
    %2087 = vmatprep.subr.mxu0 0.0
    %2088 = vmatpush1.msra.mxu0 0.0
    %2089 = vmatprep.subr.mxu0 0.0
    %2090 = vmatpush1.msra.mxu0 0.0
    %2091 = vmatprep.subr.mxu0 0.0
    %2092 = vmatpush1.msra.mxu0 0.0
    %2093 = vmatprep.subr.mxu0 0.0
    %2094 = vmatpush1.msra.mxu0 0.0
    %2095 = vmatprep.subr.mxu0 0.0
    %2096 = vmatpush1.msra.mxu0 0.0
    %2097 = vmatprep.mubr.f32.mxu0 0.0
    %2098 = vmatmul.mubr.f32.gmra.mrb[0].mxu0 %v2031
    %v2099 = vpop.f32.mrb[0].mxu0
    %v2100 = vadd.f32 0.0, %v2099
    %v2101 = vpop.f32.mrb[0].mxu0
    %2102 = vdwg.mxu0
    %v2103 = vadd.f32 %v2029, %v2100
    %2104 = vmatprep.subr.mxu0 0.0
    %2105 = vmatpush1.msra.mxu0 %v136
    %2106 = vmatprep.subr.mxu0 0.0
    %2107 = vmatpush1.msra.mxu0 %v137
    %2108 = vmatprep.subr.mxu0 0.0
    %2109 = vmatpush1.msra.mxu0 %v138
    %2110 = vmatprep.subr.mxu0 0.0
    %2111 = vmatpush1.msra.mxu0 %v139
    %2112 = vmatprep.subr.mxu0 0.0
    %2113 = vmatpush1.msra.mxu0 0.0
    %2114 = vmatprep.subr.mxu0 0.0
    %2115 = vmatpush1.msra.mxu0 0.0
    %2116 = vmatprep.subr.mxu0 0.0
    %2117 = vmatpush1.msra.mxu0 0.0
    %2118 = vmatprep.subr.mxu0 0.0
    %2119 = vmatpush1.msra.mxu0 0.0
    %2120 = vmatprep.subr.mxu0 0.0
    %2121 = vmatpush1.msra.mxu0 0.0
    %2122 = vmatprep.subr.mxu0 0.0
    %2123 = vmatpush1.msra.mxu0 0.0
    %2124 = vmatprep.subr.mxu0 0.0
    %2125 = vmatpush1.msra.mxu0 0.0
    %2126 = vmatprep.subr.mxu0 0.0
    %2127 = vmatpush1.msra.mxu0 0.0
    %2128 = vmatprep.subr.mxu0 0.0
    %2129 = vmatpush1.msra.mxu0 0.0
    %2130 = vmatprep.subr.mxu0 0.0
    %2131 = vmatpush1.msra.mxu0 0.0
    %2132 = vmatprep.subr.mxu0 0.0
    %2133 = vmatpush1.msra.mxu0 0.0
    %2134 = vmatprep.subr.mxu0 0.0
    %2135 = vmatpush1.msra.mxu0 0.0
    %2136 = vmatprep.subr.mxu0 0.0
    %2137 = vmatpush1.msra.mxu0 0.0
    %2138 = vmatprep.subr.mxu0 0.0
    %2139 = vmatpush1.msra.mxu0 0.0
    %2140 = vmatprep.subr.mxu0 0.0
    %2141 = vmatpush1.msra.mxu0 0.0
    %2142 = vmatprep.subr.mxu0 0.0
    %2143 = vmatpush1.msra.mxu0 0.0
    %2144 = vmatprep.subr.mxu0 0.0
    %2145 = vmatpush1.msra.mxu0 0.0
    %2146 = vmatprep.subr.mxu0 0.0
    %2147 = vmatpush1.msra.mxu0 0.0
    %2148 = vmatprep.subr.mxu0 0.0
    %2149 = vmatpush1.msra.mxu0 0.0
    %2150 = vmatprep.subr.mxu0 0.0
    %2151 = vmatpush1.msra.mxu0 0.0
    %2152 = vmatprep.subr.mxu0 0.0
    %2153 = vmatpush1.msra.mxu0 0.0
    %2154 = vmatprep.subr.mxu0 0.0
    %2155 = vmatpush1.msra.mxu0 0.0
    %2156 = vmatprep.subr.mxu0 0.0
    %2157 = vmatpush1.msra.mxu0 0.0
    %2158 = vmatprep.subr.mxu0 0.0
    %2159 = vmatpush1.msra.mxu0 0.0
    %2160 = vmatprep.subr.mxu0 0.0
    %2161 = vmatpush1.msra.mxu0 0.0
    %2162 = vmatprep.subr.mxu0 0.0
    %2163 = vmatpush1.msra.mxu0 0.0
    %2164 = vmatprep.subr.mxu0 0.0
    %2165 = vmatpush1.msra.mxu0 0.0
    %2166 = vmatprep.subr.mxu0 0.0
    %2167 = vmatpush1.msra.mxu0 0.0
    %2168 = vmatprep.mubr.f32.mxu0 0.0
    %2169 = vmatmul.mubr.f32.gmra.mrb[0].mxu0 %v1759
    %v2170 = vpop.f32.mrb[0].mxu0
    %v2171 = vadd.f32 %v140, %v2170
    %v2172 = vpop.f32.mrb[0].mxu0
    %2173 = vdwg.mxu0
    %v2174 = vadd.f32 %v2103, %v2171
    %v2175 = vxor.u32 %v2174, 2147483648
    %v2176 = vmul.f32 %v2175, 1.442695
    %v2177 = vpow.pop %v2176
    %v2178 = vadd.f32 %v2177, 1.0
    %v2179 = vrcp.pop %v2178
    %v2180 = vmul.f32 1.0, %v2179
    %v2183 = vunpack.c.l.s4 1966171168
    %v2184 = vunpack.c.0.s8 %v2183
    %v2185 = vlaneseq
    %v2186 = vshrl.u32 %v2185, 7
    %v2187 = vsub.s32 %v2184, %v2186
    %v2188 = vrot.slane %v2171, %v2187
    %v2190 = vunpack.c.l.s4 1966171168
    %v2191 = vunpack.c.0.s8 %v2190
    %v2192 = vlaneseq
    %v2193 = vshrl.u32 %v2192, 7
    %v2194 = vsub.s32 %v2191, %v2193
    %v2195 = vrot.slane %v2188, %v2194
    %2196 = vrot.lane.b32.xlu0 %v2195, 64
    %v2197 = vpop.permute.xlu0 %2196
    %v2199 = vmul.f32 %v2180, %v2197
    %2201 = vrot.lane.b32.xlu0 %v2199, 64
    %v2202 = vpop.permute.xlu0 %2201
    %v2204 = vadd.f32 %v2103, %v2202
    %v2205 = vtanh.pop %v2204
    %v2206 = vsub.f32 1.0, %v2180
    %2208 = vrot.lane.b32.xlu0 %v2205, 96
    %v2209 = vpop.permute.xlu0 %2208
    %v2211 = vmul.f32 %v2206, %v2209
    %v2212 = vmul.f32 %v2180, %v1751
    %v2213 = vadd.f32 %v2211, %v2212
    %v2215 = vlaneseq
    %v2216 = vshrl.u32 %v2215, 7
    %v2217 = vsub.s32 0, %v2216
    %v2218 = vrot.slane %v2213, %v2217
    %2219 = vrot.lane.b32.xlu0 %v2218, 96
    %v2220 = vpop.permute.xlu0 %2219
    %v2221 = vsel %vm165, %v2220, 0
    %2223 = vmatprep.subr.mxu0 0.0
    %2224 = vmatpush1.msra.mxu0 %v141
    %2225 = vmatprep.subr.mxu0 0.0
    %2226 = vmatpush1.msra.mxu0 %v142
    %2227 = vmatprep.subr.mxu0 0.0
    %2228 = vmatpush1.msra.mxu0 %v143
    %2229 = vmatprep.subr.mxu0 0.0
    %2230 = vmatpush1.msra.mxu0 %v144
    %2231 = vmatprep.subr.mxu0 0.0
    %2232 = vmatpush1.msra.mxu0 0.0
    %2233 = vmatprep.subr.mxu0 0.0
    %2234 = vmatpush1.msra.mxu0 0.0
    %2235 = vmatprep.subr.mxu0 0.0
    %2236 = vmatpush1.msra.mxu0 0.0
    %2237 = vmatprep.subr.mxu0 0.0
    %2238 = vmatpush1.msra.mxu0 0.0
    %2239 = vmatprep.subr.mxu0 0.0
    %2240 = vmatpush1.msra.mxu0 0.0
    %2241 = vmatprep.subr.mxu0 0.0
    %2242 = vmatpush1.msra.mxu0 0.0
    %2243 = vmatprep.subr.mxu0 0.0
    %2244 = vmatpush1.msra.mxu0 0.0
    %2245 = vmatprep.subr.mxu0 0.0
    %2246 = vmatpush1.msra.mxu0 0.0
    %2247 = vmatprep.subr.mxu0 0.0
    %2248 = vmatpush1.msra.mxu0 0.0
    %2249 = vmatprep.subr.mxu0 0.0
    %2250 = vmatpush1.msra.mxu0 0.0
    %2251 = vmatprep.subr.mxu0 0.0
    %2252 = vmatpush1.msra.mxu0 0.0
    %2253 = vmatprep.subr.mxu0 0.0
    %2254 = vmatpush1.msra.mxu0 0.0
    %2255 = vmatprep.subr.mxu0 0.0
    %2256 = vmatpush1.msra.mxu0 0.0
    %2257 = vmatprep.subr.mxu0 0.0
    %2258 = vmatpush1.msra.mxu0 0.0
    %2259 = vmatprep.subr.mxu0 0.0
    %2260 = vmatpush1.msra.mxu0 0.0
    %2261 = vmatprep.subr.mxu0 0.0
    %2262 = vmatpush1.msra.mxu0 0.0
    %2263 = vmatprep.subr.mxu0 0.0
    %2264 = vmatpush1.msra.mxu0 0.0
    %2265 = vmatprep.subr.mxu0 0.0
    %2266 = vmatpush1.msra.mxu0 0.0
    %2267 = vmatprep.subr.mxu0 0.0
    %2268 = vmatpush1.msra.mxu0 0.0
    %2269 = vmatprep.subr.mxu0 0.0
    %2270 = vmatpush1.msra.mxu0 0.0
    %2271 = vmatprep.subr.mxu0 0.0
    %2272 = vmatpush1.msra.mxu0 0.0
    %2273 = vmatprep.subr.mxu0 0.0
    %2274 = vmatpush1.msra.mxu0 0.0
    %2275 = vmatprep.subr.mxu0 0.0
    %2276 = vmatpush1.msra.mxu0 0.0
    %2277 = vmatprep.subr.mxu0 0.0
    %2278 = vmatpush1.msra.mxu0 0.0
    %2279 = vmatprep.subr.mxu0 0.0
    %2280 = vmatpush1.msra.mxu0 0.0
    %2281 = vmatprep.subr.mxu0 0.0
    %2282 = vmatpush1.msra.mxu0 0.0
    %2283 = vmatprep.subr.mxu0 0.0
    %2284 = vmatpush1.msra.mxu0 0.0
    %2285 = vmatprep.subr.mxu0 0.0
    %2286 = vmatpush1.msra.mxu0 0.0
    %2287 = vmatprep.mubr.f32.mxu0 0.0
    %2288 = vmatmul.mubr.f32.gmra.mrb[0].mxu0 %v2221
    %v2289 = vpop.f32.mrb[0].mxu0
    %v2290 = vadd.f32 %v145, %v2289
    %v2291 = vpop.f32.mrb[0].mxu0
    %2292 = vdwg.mxu0
    %v2293 = vsel %vm165, %v2024, 0
    %2295 = vmatprep.subr.mxu0 0.0
    %2296 = vmatpush1.msra.mxu0 %v146
    %2297 = vmatprep.subr.mxu0 0.0
    %2298 = vmatpush1.msra.mxu0 %v147
    %2299 = vmatprep.subr.mxu0 0.0
    %2300 = vmatpush1.msra.mxu0 %v148
    %2301 = vmatprep.subr.mxu0 0.0
    %2302 = vmatpush1.msra.mxu0 %v149
    %2303 = vmatprep.subr.mxu0 0.0
    %2304 = vmatpush1.msra.mxu0 0.0
    %2305 = vmatprep.subr.mxu0 0.0
    %2306 = vmatpush1.msra.mxu0 0.0
    %2307 = vmatprep.subr.mxu0 0.0
    %2308 = vmatpush1.msra.mxu0 0.0
    %2309 = vmatprep.subr.mxu0 0.0
    %2310 = vmatpush1.msra.mxu0 0.0
    %2311 = vmatprep.subr.mxu0 0.0
    %2312 = vmatpush1.msra.mxu0 0.0
    %2313 = vmatprep.subr.mxu0 0.0
    %2314 = vmatpush1.msra.mxu0 0.0
    %2315 = vmatprep.subr.mxu0 0.0
    %2316 = vmatpush1.msra.mxu0 0.0
    %2317 = vmatprep.subr.mxu0 0.0
    %2318 = vmatpush1.msra.mxu0 0.0
    %2319 = vmatprep.subr.mxu0 0.0
    %2320 = vmatpush1.msra.mxu0 0.0
    %2321 = vmatprep.subr.mxu0 0.0
    %2322 = vmatpush1.msra.mxu0 0.0
    %2323 = vmatprep.subr.mxu0 0.0
    %2324 = vmatpush1.msra.mxu0 0.0
    %2325 = vmatprep.subr.mxu0 0.0
    %2326 = vmatpush1.msra.mxu0 0.0
    %2327 = vmatprep.subr.mxu0 0.0
    %2328 = vmatpush1.msra.mxu0 0.0
    %2329 = vmatprep.subr.mxu0 0.0
    %2330 = vmatpush1.msra.mxu0 0.0
    %2331 = vmatprep.subr.mxu0 0.0
    %2332 = vmatpush1.msra.mxu0 0.0
    %2333 = vmatprep.subr.mxu0 0.0
    %2334 = vmatpush1.msra.mxu0 0.0
    %2335 = vmatprep.subr.mxu0 0.0
    %2336 = vmatpush1.msra.mxu0 0.0
    %2337 = vmatprep.subr.mxu0 0.0
    %2338 = vmatpush1.msra.mxu0 0.0
    %2339 = vmatprep.subr.mxu0 0.0
    %2340 = vmatpush1.msra.mxu0 0.0
    %2341 = vmatprep.subr.mxu0 0.0
    %2342 = vmatpush1.msra.mxu0 0.0
    %2343 = vmatprep.subr.mxu0 0.0
    %2344 = vmatpush1.msra.mxu0 0.0
    %2345 = vmatprep.subr.mxu0 0.0
    %2346 = vmatpush1.msra.mxu0 0.0
    %2347 = vmatprep.subr.mxu0 0.0
    %2348 = vmatpush1.msra.mxu0 0.0
    %2349 = vmatprep.subr.mxu0 0.0
    %2350 = vmatpush1.msra.mxu0 0.0
    %2351 = vmatprep.subr.mxu0 0.0
    %2352 = vmatpush1.msra.mxu0 0.0
    %2353 = vmatprep.subr.mxu0 0.0
    %2354 = vmatpush1.msra.mxu0 0.0
    %2355 = vmatprep.subr.mxu0 0.0
    %2356 = vmatpush1.msra.mxu0 0.0
    %2357 = vmatprep.subr.mxu0 0.0
    %2358 = vmatpush1.msra.mxu0 0.0
    %2359 = vmatprep.mubr.f32.mxu0 0.0
    %2360 = vmatmul.mubr.f32.gmra.mrb[0].mxu0 %v2293
    %v2361 = vpop.f32.mrb[0].mxu0
    %v2362 = vadd.f32 %v150, %v2361
    %v2363 = vpop.f32.mrb[0].mxu0
    %2364 = vdwg.mxu0
    %v2365 = vadd.f32 %v2290, %v2362
    %v2366 = vxor.u32 %v2365, 2147483648
    %v2367 = vmul.f32 %v2366, 1.442695
    %v2368 = vpow.pop %v2367
    %v2369 = vadd.f32 %v2368, 1.0
    %v2370 = vrcp.pop %v2369
    %v2371 = vmul.f32 1.0, %v2370
    %2373 = vrot.lane.b32.xlu0 %v2362, 64
    %v2374 = vpop.permute.xlu0 %2373
    %v2376 = vmul.f32 %v2371, %v2374
    %2378 = vrot.lane.b32.xlu0 %v2376, 64
    %v2379 = vpop.permute.xlu0 %2378
    %v2381 = vadd.f32 %v2290, %v2379
    %v2382 = vtanh.pop %v2381
    %v2383 = vsub.f32 1.0, %v2371
    %2385 = vrot.lane.b32.xlu0 %v2382, 96
    %v2386 = vpop.permute.xlu0 %2385
    %v2388 = vmul.f32 %v2383, %v2386
    %v2389 = vmul.f32 %v2371, %v1928
    %v2390 = vadd.f32 %v2388, %v2389
    %2392 = vset.pattern.permute.xlu0 32
    %2393 = vperm.xlu0 %2392, %v2390
    %v2394 = vpop.permute.xlu0 %2393
    %v2396 = vmul.f32 %v2394, %v152
    %v2397 = vsel %vm547, %v2396, -inf
    %2398 = vmax.xlane.f32.xlu0 %v2397
    %v2399 = vpop.xlane.xlu0 %2398
    %v2400 = vsub.f32 %v2396, %v2399
    %v2401 = vmul.f32 %v2400, 1.442695
    %v2402 = vpow.pop %v2401
    %v2403 = vsel %vm547, %v2402, 0.0
    %2404 = vadd.xlane.f32.xlu0 %v2403
    %v2405 = vpop.xlane.xlu0 %2404
    %v2406 = vrcp.pop %v2405
    %v2407 = vmul.f32 %v2402, %v2406
    %v2409 = vsel %vm559, %v2407, 0
    %2411 = vmatprep.subr.mxu0 0.0
    %2412 = vmatpush1.msra.mxu0 %v151
    %2413 = vmatprep.subr.mxu0 0.0
    %2414 = vmatpush1.msra.mxu0 0.0
    %2415 = vmatprep.subr.mxu0 0.0
    %2416 = vmatpush1.msra.mxu0 0.0
    %2417 = vmatprep.subr.mxu0 0.0
    %2418 = vmatpush1.msra.mxu0 0.0
    %2419 = vmatprep.subr.mxu0 0.0
    %2420 = vmatpush1.msra.mxu0 0.0
    %2421 = vmatprep.subr.mxu0 0.0
    %2422 = vmatpush1.msra.mxu0 0.0
    %2423 = vmatprep.subr.mxu0 0.0
    %2424 = vmatpush1.msra.mxu0 0.0
    %2425 = vmatprep.subr.mxu0 0.0
    %2426 = vmatpush1.msra.mxu0 0.0
    %2427 = vmatprep.subr.mxu0 0.0
    %2428 = vmatpush1.msra.mxu0 0.0
    %2429 = vmatprep.subr.mxu0 0.0
    %2430 = vmatpush1.msra.mxu0 0.0
    %2431 = vmatprep.subr.mxu0 0.0
    %2432 = vmatpush1.msra.mxu0 0.0
    %2433 = vmatprep.subr.mxu0 0.0
    %2434 = vmatpush1.msra.mxu0 0.0
    %2435 = vmatprep.subr.mxu0 0.0
    %2436 = vmatpush1.msra.mxu0 0.0
    %2437 = vmatprep.subr.mxu0 0.0
    %2438 = vmatpush1.msra.mxu0 0.0
    %2439 = vmatprep.subr.mxu0 0.0
    %2440 = vmatpush1.msra.mxu0 0.0
    %2441 = vmatprep.subr.mxu0 0.0
    %2442 = vmatpush1.msra.mxu0 0.0
    %2443 = vmatprep.subr.mxu0 0.0
    %2444 = vmatpush1.msra.mxu0 0.0
    %2445 = vmatprep.subr.mxu0 0.0
    %2446 = vmatpush1.msra.mxu0 0.0
    %2447 = vmatprep.subr.mxu0 0.0
    %2448 = vmatpush1.msra.mxu0 0.0
    %2449 = vmatprep.subr.mxu0 0.0
    %2450 = vmatpush1.msra.mxu0 0.0
    %2451 = vmatprep.subr.mxu0 0.0
    %2452 = vmatpush1.msra.mxu0 0.0
    %2453 = vmatprep.subr.mxu0 0.0
    %2454 = vmatpush1.msra.mxu0 0.0
    %2455 = vmatprep.subr.mxu0 0.0
    %2456 = vmatpush1.msra.mxu0 0.0
    %2457 = vmatprep.subr.mxu0 0.0
    %2458 = vmatpush1.msra.mxu0 0.0
    %2459 = vmatprep.subr.mxu0 0.0
    %2460 = vmatpush1.msra.mxu0 0.0
    %2461 = vmatprep.subr.mxu0 0.0
    %2462 = vmatpush1.msra.mxu0 0.0
    %2463 = vmatprep.subr.mxu0 0.0
    %2464 = vmatpush1.msra.mxu0 0.0
    %2465 = vmatprep.subr.mxu0 0.0
    %2466 = vmatpush1.msra.mxu0 0.0
    %2467 = vmatprep.subr.mxu0 0.0
    %2468 = vmatpush1.msra.mxu0 0.0
    %2469 = vmatprep.subr.mxu0 0.0
    %2470 = vmatpush1.msra.mxu0 0.0
    %2471 = vmatprep.subr.mxu0 0.0
    %2472 = vmatpush1.msra.mxu0 0.0
    %2473 = vmatprep.subr.mxu0 0.0
    %2474 = vmatpush1.msra.mxu0 0.0
    %2475 = vmatprep.mubr.f32.mxu0 0.0
    %2476 = vmatmul.mubr.f32.gmra.mrb[0].mxu0 %v2409
    %v2477 = vpop.f32.mrb[0].mxu0
    %v2478 = vadd.f32 0.0, %v2477
    %v2479 = vpop.f32.mrb[0].mxu0
    %2480 = vdwg.mxu0
    %s2481 = scalar_lea.vmem [#allocation16], 32
    %2482 = vst.msk [vmem:[%s2481] sm:$0x1] %vm633, %v2478
    %2484 = vst.msk [vmem:[%s2481 + $0x1] sm:$0x1] %vm633, %v2220
    %2485 = vrot.lane.b32.xlu0 %v2390, 96
    %v2486 = vpop.permute.xlu0 %2485
    %2488 = vst.msk [vmem:[%s2481 + $0x2] sm:$0x1] %vm633, %v2486
    %2489 = vst.msk [vmem:[%s2481 + $0x3] sm:$0x1] %vm547, %v2407
    %s2490 = scalar_lea.vmem [#allocation5], 5
    %v2491 = vld [vmem:[%s2490] sm:$0x1]
    %v2493 = vsel %vm165, %v2478, 0
    %2495 = vmatprep.subr.mxu0 0.0
    %2496 = vmatpush1.msra.mxu0 %v132
    %2497 = vmatprep.subr.mxu0 0.0
    %2498 = vmatpush1.msra.mxu0 %v133
    %2499 = vmatprep.subr.mxu0 0.0
    %2500 = vmatpush1.msra.mxu0 %v134
    %2501 = vmatprep.subr.mxu0 0.0
    %2502 = vmatpush1.msra.mxu0 %v135
    %2503 = vmatprep.subr.mxu0 0.0
    %2504 = vmatpush1.msra.mxu0 0.0
    %2505 = vmatprep.subr.mxu0 0.0
    %2506 = vmatpush1.msra.mxu0 0.0
    %2507 = vmatprep.subr.mxu0 0.0
    %2508 = vmatpush1.msra.mxu0 0.0
    %2509 = vmatprep.subr.mxu0 0.0
    %2510 = vmatpush1.msra.mxu0 0.0
    %2511 = vmatprep.subr.mxu0 0.0
    %2512 = vmatpush1.msra.mxu0 0.0
    %2513 = vmatprep.subr.mxu0 0.0
    %2514 = vmatpush1.msra.mxu0 0.0
    %2515 = vmatprep.subr.mxu0 0.0
    %2516 = vmatpush1.msra.mxu0 0.0
    %2517 = vmatprep.subr.mxu0 0.0
    %2518 = vmatpush1.msra.mxu0 0.0
    %2519 = vmatprep.subr.mxu0 0.0
    %2520 = vmatpush1.msra.mxu0 0.0
    %2521 = vmatprep.subr.mxu0 0.0
    %2522 = vmatpush1.msra.mxu0 0.0
    %2523 = vmatprep.subr.mxu0 0.0
    %2524 = vmatpush1.msra.mxu0 0.0
    %2525 = vmatprep.subr.mxu0 0.0
    %2526 = vmatpush1.msra.mxu0 0.0
    %2527 = vmatprep.subr.mxu0 0.0
    %2528 = vmatpush1.msra.mxu0 0.0
    %2529 = vmatprep.subr.mxu0 0.0
    %2530 = vmatpush1.msra.mxu0 0.0
    %2531 = vmatprep.subr.mxu0 0.0
    %2532 = vmatpush1.msra.mxu0 0.0
    %2533 = vmatprep.subr.mxu0 0.0
    %2534 = vmatpush1.msra.mxu0 0.0
    %2535 = vmatprep.subr.mxu0 0.0
    %2536 = vmatpush1.msra.mxu0 0.0
    %2537 = vmatprep.subr.mxu0 0.0
    %2538 = vmatpush1.msra.mxu0 0.0
    %2539 = vmatprep.subr.mxu0 0.0
    %2540 = vmatpush1.msra.mxu0 0.0
    %2541 = vmatprep.subr.mxu0 0.0
    %2542 = vmatpush1.msra.mxu0 0.0
    %2543 = vmatprep.subr.mxu0 0.0
    %2544 = vmatpush1.msra.mxu0 0.0
    %2545 = vmatprep.subr.mxu0 0.0
    %2546 = vmatpush1.msra.mxu0 0.0
    %2547 = vmatprep.subr.mxu0 0.0
    %2548 = vmatpush1.msra.mxu0 0.0
    %2549 = vmatprep.subr.mxu0 0.0
    %2550 = vmatpush1.msra.mxu0 0.0
    %2551 = vmatprep.subr.mxu0 0.0
    %2552 = vmatpush1.msra.mxu0 0.0
    %2553 = vmatprep.subr.mxu0 0.0
    %2554 = vmatpush1.msra.mxu0 0.0
    %2555 = vmatprep.subr.mxu0 0.0
    %2556 = vmatpush1.msra.mxu0 0.0
    %2557 = vmatprep.subr.mxu0 0.0
    %2558 = vmatpush1.msra.mxu0 0.0
    %2559 = vmatprep.mubr.f32.mxu0 0.0
    %2560 = vmatmul.mubr.f32.gmra.mrb[0].mxu0 %v2493
    %v2561 = vpop.f32.mrb[0].mxu0
    %v2562 = vadd.f32 0.0, %v2561
    %v2563 = vpop.f32.mrb[0].mxu0
    %2564 = vdwg.mxu0
    %v2565 = vadd.f32 %v2491, %v2562
    %2566 = vmatprep.subr.mxu0 0.0
    %2567 = vmatpush1.msra.mxu0 %v136
    %2568 = vmatprep.subr.mxu0 0.0
    %2569 = vmatpush1.msra.mxu0 %v137
    %2570 = vmatprep.subr.mxu0 0.0
    %2571 = vmatpush1.msra.mxu0 %v138
    %2572 = vmatprep.subr.mxu0 0.0
    %2573 = vmatpush1.msra.mxu0 %v139
    %2574 = vmatprep.subr.mxu0 0.0
    %2575 = vmatpush1.msra.mxu0 0.0
    %2576 = vmatprep.subr.mxu0 0.0
    %2577 = vmatpush1.msra.mxu0 0.0
    %2578 = vmatprep.subr.mxu0 0.0
    %2579 = vmatpush1.msra.mxu0 0.0
    %2580 = vmatprep.subr.mxu0 0.0
    %2581 = vmatpush1.msra.mxu0 0.0
    %2582 = vmatprep.subr.mxu0 0.0
    %2583 = vmatpush1.msra.mxu0 0.0
    %2584 = vmatprep.subr.mxu0 0.0
    %2585 = vmatpush1.msra.mxu0 0.0
    %2586 = vmatprep.subr.mxu0 0.0
    %2587 = vmatpush1.msra.mxu0 0.0
    %2588 = vmatprep.subr.mxu0 0.0
    %2589 = vmatpush1.msra.mxu0 0.0
    %2590 = vmatprep.subr.mxu0 0.0
    %2591 = vmatpush1.msra.mxu0 0.0
    %2592 = vmatprep.subr.mxu0 0.0
    %2593 = vmatpush1.msra.mxu0 0.0
    %2594 = vmatprep.subr.mxu0 0.0
    %2595 = vmatpush1.msra.mxu0 0.0
    %2596 = vmatprep.subr.mxu0 0.0
    %2597 = vmatpush1.msra.mxu0 0.0
    %2598 = vmatprep.subr.mxu0 0.0
    %2599 = vmatpush1.msra.mxu0 0.0
    %2600 = vmatprep.subr.mxu0 0.0
    %2601 = vmatpush1.msra.mxu0 0.0
    %2602 = vmatprep.subr.mxu0 0.0
    %2603 = vmatpush1.msra.mxu0 0.0
    %2604 = vmatprep.subr.mxu0 0.0
    %2605 = vmatpush1.msra.mxu0 0.0
    %2606 = vmatprep.subr.mxu0 0.0
    %2607 = vmatpush1.msra.mxu0 0.0
    %2608 = vmatprep.subr.mxu0 0.0
    %2609 = vmatpush1.msra.mxu0 0.0
    %2610 = vmatprep.subr.mxu0 0.0
    %2611 = vmatpush1.msra.mxu0 0.0
    %2612 = vmatprep.subr.mxu0 0.0
    %2613 = vmatpush1.msra.mxu0 0.0
    %2614 = vmatprep.subr.mxu0 0.0
    %2615 = vmatpush1.msra.mxu0 0.0
    %2616 = vmatprep.subr.mxu0 0.0
    %2617 = vmatpush1.msra.mxu0 0.0
    %2618 = vmatprep.subr.mxu0 0.0
    %2619 = vmatpush1.msra.mxu0 0.0
    %2620 = vmatprep.subr.mxu0 0.0
    %2621 = vmatpush1.msra.mxu0 0.0
    %2622 = vmatprep.subr.mxu0 0.0
    %2623 = vmatpush1.msra.mxu0 0.0
    %2624 = vmatprep.subr.mxu0 0.0
    %2625 = vmatpush1.msra.mxu0 0.0
    %2626 = vmatprep.subr.mxu0 0.0
    %2627 = vmatpush1.msra.mxu0 0.0
    %2628 = vmatprep.subr.mxu0 0.0
    %2629 = vmatpush1.msra.mxu0 0.0
    %2630 = vmatprep.mubr.f32.mxu0 0.0
    %2631 = vmatmul.mubr.f32.gmra.mrb[0].mxu0 %v2221
    %v2632 = vpop.f32.mrb[0].mxu0
    %v2633 = vadd.f32 %v140, %v2632
    %v2634 = vpop.f32.mrb[0].mxu0
    %2635 = vdwg.mxu0
    %v2636 = vadd.f32 %v2565, %v2633
    %v2637 = vxor.u32 %v2636, 2147483648
    %v2638 = vmul.f32 %v2637, 1.442695
    %v2639 = vpow.pop %v2638
    %v2640 = vadd.f32 %v2639, 1.0
    %v2641 = vrcp.pop %v2640
    %v2642 = vmul.f32 1.0, %v2641
    %v2645 = vunpack.c.l.s4 1966171168
    %v2646 = vunpack.c.0.s8 %v2645
    %v2647 = vlaneseq
    %v2648 = vshrl.u32 %v2647, 7
    %v2649 = vsub.s32 %v2646, %v2648
    %v2650 = vrot.slane %v2633, %v2649
    %v2652 = vunpack.c.l.s4 1966171168
    %v2653 = vunpack.c.0.s8 %v2652
    %v2654 = vlaneseq
    %v2655 = vshrl.u32 %v2654, 7
    %v2656 = vsub.s32 %v2653, %v2655
    %v2657 = vrot.slane %v2650, %v2656
    %2658 = vrot.lane.b32.xlu0 %v2657, 64
    %v2659 = vpop.permute.xlu0 %2658
    %v2661 = vmul.f32 %v2642, %v2659
    %2663 = vrot.lane.b32.xlu0 %v2661, 64
    %v2664 = vpop.permute.xlu0 %2663
    %v2666 = vadd.f32 %v2565, %v2664
    %v2667 = vtanh.pop %v2666
    %v2668 = vsub.f32 1.0, %v2642
    %2670 = vrot.lane.b32.xlu0 %v2667, 96
    %v2671 = vpop.permute.xlu0 %2670
    %v2673 = vmul.f32 %v2668, %v2671
    %v2674 = vmul.f32 %v2642, %v2213
    %v2675 = vadd.f32 %v2673, %v2674
    %v2677 = vlaneseq
    %v2678 = vshrl.u32 %v2677, 7
    %v2679 = vsub.s32 0, %v2678
    %v2680 = vrot.slane %v2675, %v2679
    %2681 = vrot.lane.b32.xlu0 %v2680, 96
    %v2682 = vpop.permute.xlu0 %2681
    %v2683 = vsel %vm165, %v2682, 0
    %2685 = vmatprep.subr.mxu0 0.0
    %2686 = vmatpush1.msra.mxu0 %v141
    %2687 = vmatprep.subr.mxu0 0.0
    %2688 = vmatpush1.msra.mxu0 %v142
    %2689 = vmatprep.subr.mxu0 0.0
    %2690 = vmatpush1.msra.mxu0 %v143
    %2691 = vmatprep.subr.mxu0 0.0
    %2692 = vmatpush1.msra.mxu0 %v144
    %2693 = vmatprep.subr.mxu0 0.0
    %2694 = vmatpush1.msra.mxu0 0.0
    %2695 = vmatprep.subr.mxu0 0.0
    %2696 = vmatpush1.msra.mxu0 0.0
    %2697 = vmatprep.subr.mxu0 0.0
    %2698 = vmatpush1.msra.mxu0 0.0
    %2699 = vmatprep.subr.mxu0 0.0
    %2700 = vmatpush1.msra.mxu0 0.0
    %2701 = vmatprep.subr.mxu0 0.0
    %2702 = vmatpush1.msra.mxu0 0.0
    %2703 = vmatprep.subr.mxu0 0.0
    %2704 = vmatpush1.msra.mxu0 0.0
    %2705 = vmatprep.subr.mxu0 0.0
    %2706 = vmatpush1.msra.mxu0 0.0
    %2707 = vmatprep.subr.mxu0 0.0
    %2708 = vmatpush1.msra.mxu0 0.0
    %2709 = vmatprep.subr.mxu0 0.0
    %2710 = vmatpush1.msra.mxu0 0.0
    %2711 = vmatprep.subr.mxu0 0.0
    %2712 = vmatpush1.msra.mxu0 0.0
    %2713 = vmatprep.subr.mxu0 0.0
    %2714 = vmatpush1.msra.mxu0 0.0
    %2715 = vmatprep.subr.mxu0 0.0
    %2716 = vmatpush1.msra.mxu0 0.0
    %2717 = vmatprep.subr.mxu0 0.0
    %2718 = vmatpush1.msra.mxu0 0.0
    %2719 = vmatprep.subr.mxu0 0.0
    %2720 = vmatpush1.msra.mxu0 0.0
    %2721 = vmatprep.subr.mxu0 0.0
    %2722 = vmatpush1.msra.mxu0 0.0
    %2723 = vmatprep.subr.mxu0 0.0
    %2724 = vmatpush1.msra.mxu0 0.0
    %2725 = vmatprep.subr.mxu0 0.0
    %2726 = vmatpush1.msra.mxu0 0.0
    %2727 = vmatprep.subr.mxu0 0.0
    %2728 = vmatpush1.msra.mxu0 0.0
    %2729 = vmatprep.subr.mxu0 0.0
    %2730 = vmatpush1.msra.mxu0 0.0
    %2731 = vmatprep.subr.mxu0 0.0
    %2732 = vmatpush1.msra.mxu0 0.0
    %2733 = vmatprep.subr.mxu0 0.0
    %2734 = vmatpush1.msra.mxu0 0.0
    %2735 = vmatprep.subr.mxu0 0.0
    %2736 = vmatpush1.msra.mxu0 0.0
    %2737 = vmatprep.subr.mxu0 0.0
    %2738 = vmatpush1.msra.mxu0 0.0
    %2739 = vmatprep.subr.mxu0 0.0
    %2740 = vmatpush1.msra.mxu0 0.0
    %2741 = vmatprep.subr.mxu0 0.0
    %2742 = vmatpush1.msra.mxu0 0.0
    %2743 = vmatprep.subr.mxu0 0.0
    %2744 = vmatpush1.msra.mxu0 0.0
    %2745 = vmatprep.subr.mxu0 0.0
    %2746 = vmatpush1.msra.mxu0 0.0
    %2747 = vmatprep.subr.mxu0 0.0
    %2748 = vmatpush1.msra.mxu0 0.0
    %2749 = vmatprep.mubr.f32.mxu0 0.0
    %2750 = vmatmul.mubr.f32.gmra.mrb[0].mxu0 %v2683
    %v2751 = vpop.f32.mrb[0].mxu0
    %v2752 = vadd.f32 %v145, %v2751
    %v2753 = vpop.f32.mrb[0].mxu0
    %2754 = vdwg.mxu0
    %v2755 = vsel %vm165, %v2486, 0
    %2757 = vmatprep.subr.mxu0 0.0
    %2758 = vmatpush1.msra.mxu0 %v146
    %2759 = vmatprep.subr.mxu0 0.0
    %2760 = vmatpush1.msra.mxu0 %v147
    %2761 = vmatprep.subr.mxu0 0.0
    %2762 = vmatpush1.msra.mxu0 %v148
    %2763 = vmatprep.subr.mxu0 0.0
    %2764 = vmatpush1.msra.mxu0 %v149
    %2765 = vmatprep.subr.mxu0 0.0
    %2766 = vmatpush1.msra.mxu0 0.0
    %2767 = vmatprep.subr.mxu0 0.0
    %2768 = vmatpush1.msra.mxu0 0.0
    %2769 = vmatprep.subr.mxu0 0.0
    %2770 = vmatpush1.msra.mxu0 0.0
    %2771 = vmatprep.subr.mxu0 0.0
    %2772 = vmatpush1.msra.mxu0 0.0
    %2773 = vmatprep.subr.mxu0 0.0
    %2774 = vmatpush1.msra.mxu0 0.0
    %2775 = vmatprep.subr.mxu0 0.0
    %2776 = vmatpush1.msra.mxu0 0.0
    %2777 = vmatprep.subr.mxu0 0.0
    %2778 = vmatpush1.msra.mxu0 0.0
    %2779 = vmatprep.subr.mxu0 0.0
    %2780 = vmatpush1.msra.mxu0 0.0
    %2781 = vmatprep.subr.mxu0 0.0
    %2782 = vmatpush1.msra.mxu0 0.0
    %2783 = vmatprep.subr.mxu0 0.0
    %2784 = vmatpush1.msra.mxu0 0.0
    %2785 = vmatprep.subr.mxu0 0.0
    %2786 = vmatpush1.msra.mxu0 0.0
    %2787 = vmatprep.subr.mxu0 0.0
    %2788 = vmatpush1.msra.mxu0 0.0
    %2789 = vmatprep.subr.mxu0 0.0
    %2790 = vmatpush1.msra.mxu0 0.0
    %2791 = vmatprep.subr.mxu0 0.0
    %2792 = vmatpush1.msra.mxu0 0.0
    %2793 = vmatprep.subr.mxu0 0.0
    %2794 = vmatpush1.msra.mxu0 0.0
    %2795 = vmatprep.subr.mxu0 0.0
    %2796 = vmatpush1.msra.mxu0 0.0
    %2797 = vmatprep.subr.mxu0 0.0
    %2798 = vmatpush1.msra.mxu0 0.0
    %2799 = vmatprep.subr.mxu0 0.0
    %2800 = vmatpush1.msra.mxu0 0.0
    %2801 = vmatprep.subr.mxu0 0.0
    %2802 = vmatpush1.msra.mxu0 0.0
    %2803 = vmatprep.subr.mxu0 0.0
    %2804 = vmatpush1.msra.mxu0 0.0
    %2805 = vmatprep.subr.mxu0 0.0
    %2806 = vmatpush1.msra.mxu0 0.0
    %2807 = vmatprep.subr.mxu0 0.0
    %2808 = vmatpush1.msra.mxu0 0.0
    %2809 = vmatprep.subr.mxu0 0.0
    %2810 = vmatpush1.msra.mxu0 0.0
    %2811 = vmatprep.subr.mxu0 0.0
    %2812 = vmatpush1.msra.mxu0 0.0
    %2813 = vmatprep.subr.mxu0 0.0
    %2814 = vmatpush1.msra.mxu0 0.0
    %2815 = vmatprep.subr.mxu0 0.0
    %2816 = vmatpush1.msra.mxu0 0.0
    %2817 = vmatprep.subr.mxu0 0.0
    %2818 = vmatpush1.msra.mxu0 0.0
    %2819 = vmatprep.subr.mxu0 0.0
    %2820 = vmatpush1.msra.mxu0 0.0
    %2821 = vmatprep.mubr.f32.mxu0 0.0
    %2822 = vmatmul.mubr.f32.gmra.mrb[0].mxu0 %v2755
    %v2823 = vpop.f32.mrb[0].mxu0
    %v2824 = vadd.f32 %v150, %v2823
    %v2825 = vpop.f32.mrb[0].mxu0
    %2826 = vdwg.mxu0
    %v2827 = vadd.f32 %v2752, %v2824
    %v2828 = vxor.u32 %v2827, 2147483648
    %v2829 = vmul.f32 %v2828, 1.442695
    %v2830 = vpow.pop %v2829
    %v2831 = vadd.f32 %v2830, 1.0
    %v2832 = vrcp.pop %v2831
    %v2833 = vmul.f32 1.0, %v2832
    %2835 = vrot.lane.b32.xlu0 %v2824, 64
    %v2836 = vpop.permute.xlu0 %2835
    %v2838 = vmul.f32 %v2833, %v2836
    %2840 = vrot.lane.b32.xlu0 %v2838, 64
    %v2841 = vpop.permute.xlu0 %2840
    %v2843 = vadd.f32 %v2752, %v2841
    %v2844 = vtanh.pop %v2843
    %v2845 = vsub.f32 1.0, %v2833
    %2847 = vrot.lane.b32.xlu0 %v2844, 96
    %v2848 = vpop.permute.xlu0 %2847
    %v2850 = vmul.f32 %v2845, %v2848
    %v2851 = vmul.f32 %v2833, %v2390
    %v2852 = vadd.f32 %v2850, %v2851
    %2854 = vset.pattern.permute.xlu0 32
    %2855 = vperm.xlu0 %2854, %v2852
    %v2856 = vpop.permute.xlu0 %2855
    %v2858 = vmul.f32 %v2856, %v152
    %v2859 = vsel %vm547, %v2858, -inf
    %2860 = vmax.xlane.f32.xlu0 %v2859
    %v2861 = vpop.xlane.xlu0 %2860
    %v2862 = vsub.f32 %v2858, %v2861
    %v2863 = vmul.f32 %v2862, 1.442695
    %v2864 = vpow.pop %v2863
    %v2865 = vsel %vm547, %v2864, 0.0
    %2866 = vadd.xlane.f32.xlu0 %v2865
    %v2867 = vpop.xlane.xlu0 %2866
    %v2868 = vrcp.pop %v2867
    %v2869 = vmul.f32 %v2864, %v2868
    %v2871 = vsel %vm559, %v2869, 0
    %2873 = vmatprep.subr.mxu0 0.0
    %2874 = vmatpush1.msra.mxu0 %v151
    %2875 = vmatprep.subr.mxu0 0.0
    %2876 = vmatpush1.msra.mxu0 0.0
    %2877 = vmatprep.subr.mxu0 0.0
    %2878 = vmatpush1.msra.mxu0 0.0
    %2879 = vmatprep.subr.mxu0 0.0
    %2880 = vmatpush1.msra.mxu0 0.0
    %2881 = vmatprep.subr.mxu0 0.0
    %2882 = vmatpush1.msra.mxu0 0.0
    %2883 = vmatprep.subr.mxu0 0.0
    %2884 = vmatpush1.msra.mxu0 0.0
    %2885 = vmatprep.subr.mxu0 0.0
    %2886 = vmatpush1.msra.mxu0 0.0
    %2887 = vmatprep.subr.mxu0 0.0
    %2888 = vmatpush1.msra.mxu0 0.0
    %2889 = vmatprep.subr.mxu0 0.0
    %2890 = vmatpush1.msra.mxu0 0.0
    %2891 = vmatprep.subr.mxu0 0.0
    %2892 = vmatpush1.msra.mxu0 0.0
    %2893 = vmatprep.subr.mxu0 0.0
    %2894 = vmatpush1.msra.mxu0 0.0
    %2895 = vmatprep.subr.mxu0 0.0
    %2896 = vmatpush1.msra.mxu0 0.0
    %2897 = vmatprep.subr.mxu0 0.0
    %2898 = vmatpush1.msra.mxu0 0.0
    %2899 = vmatprep.subr.mxu0 0.0
    %2900 = vmatpush1.msra.mxu0 0.0
    %2901 = vmatprep.subr.mxu0 0.0
    %2902 = vmatpush1.msra.mxu0 0.0
    %2903 = vmatprep.subr.mxu0 0.0
    %2904 = vmatpush1.msra.mxu0 0.0
    %2905 = vmatprep.subr.mxu0 0.0
    %2906 = vmatpush1.msra.mxu0 0.0
    %2907 = vmatprep.subr.mxu0 0.0
    %2908 = vmatpush1.msra.mxu0 0.0
    %2909 = vmatprep.subr.mxu0 0.0
    %2910 = vmatpush1.msra.mxu0 0.0
    %2911 = vmatprep.subr.mxu0 0.0
    %2912 = vmatpush1.msra.mxu0 0.0
    %2913 = vmatprep.subr.mxu0 0.0
    %2914 = vmatpush1.msra.mxu0 0.0
    %2915 = vmatprep.subr.mxu0 0.0
    %2916 = vmatpush1.msra.mxu0 0.0
    %2917 = vmatprep.subr.mxu0 0.0
    %2918 = vmatpush1.msra.mxu0 0.0
    %2919 = vmatprep.subr.mxu0 0.0
    %2920 = vmatpush1.msra.mxu0 0.0
    %2921 = vmatprep.subr.mxu0 0.0
    %2922 = vmatpush1.msra.mxu0 0.0
    %2923 = vmatprep.subr.mxu0 0.0
    %2924 = vmatpush1.msra.mxu0 0.0
    %2925 = vmatprep.subr.mxu0 0.0
    %2926 = vmatpush1.msra.mxu0 0.0
    %2927 = vmatprep.subr.mxu0 0.0
    %2928 = vmatpush1.msra.mxu0 0.0
    %2929 = vmatprep.subr.mxu0 0.0
    %2930 = vmatpush1.msra.mxu0 0.0
    %2931 = vmatprep.subr.mxu0 0.0
    %2932 = vmatpush1.msra.mxu0 0.0
    %2933 = vmatprep.subr.mxu0 0.0
    %2934 = vmatpush1.msra.mxu0 0.0
    %2935 = vmatprep.subr.mxu0 0.0
    %2936 = vmatpush1.msra.mxu0 0.0
    %2937 = vmatprep.mubr.f32.mxu0 0.0
    %2938 = vmatmul.mubr.f32.gmra.mrb[0].mxu0 %v2871
    %v2939 = vpop.f32.mrb[0].mxu0
    %v2940 = vadd.f32 0.0, %v2939
    %v2941 = vpop.f32.mrb[0].mxu0
    %2942 = vdwg.mxu0
    %s2943 = scalar_lea.vmem [#allocation16], 40
    %2944 = vst.msk [vmem:[%s2943] sm:$0x1] %vm633, %v2940
    %2946 = vst.msk [vmem:[%s2943 + $0x1] sm:$0x1] %vm633, %v2682
    %2947 = vrot.lane.b32.xlu0 %v2852, 96
    %v2948 = vpop.permute.xlu0 %2947
    %2950 = vst.msk [vmem:[%s2943 + $0x2] sm:$0x1] %vm633, %v2948
    %2951 = vst.msk [vmem:[%s2943 + $0x3] sm:$0x1] %vm547, %v2869
    %s2952 = scalar_lea.vmem [#allocation5], 6
    %v2953 = vld [vmem:[%s2952] sm:$0x1]
    %v2955 = vsel %vm165, %v2940, 0
    %2957 = vmatprep.subr.mxu0 0.0
    %2958 = vmatpush1.msra.mxu0 %v132
    %2959 = vmatprep.subr.mxu0 0.0
    %2960 = vmatpush1.msra.mxu0 %v133
    %2961 = vmatprep.subr.mxu0 0.0
    %2962 = vmatpush1.msra.mxu0 %v134
    %2963 = vmatprep.subr.mxu0 0.0
    %2964 = vmatpush1.msra.mxu0 %v135
    %2965 = vmatprep.subr.mxu0 0.0
    %2966 = vmatpush1.msra.mxu0 0.0
    %2967 = vmatprep.subr.mxu0 0.0
    %2968 = vmatpush1.msra.mxu0 0.0
    %2969 = vmatprep.subr.mxu0 0.0
    %2970 = vmatpush1.msra.mxu0 0.0
    %2971 = vmatprep.subr.mxu0 0.0
    %2972 = vmatpush1.msra.mxu0 0.0
    %2973 = vmatprep.subr.mxu0 0.0
    %2974 = vmatpush1.msra.mxu0 0.0
    %2975 = vmatprep.subr.mxu0 0.0
    %2976 = vmatpush1.msra.mxu0 0.0
    %2977 = vmatprep.subr.mxu0 0.0
    %2978 = vmatpush1.msra.mxu0 0.0
    %2979 = vmatprep.subr.mxu0 0.0
    %2980 = vmatpush1.msra.mxu0 0.0
    %2981 = vmatprep.subr.mxu0 0.0
    %2982 = vmatpush1.msra.mxu0 0.0
    %2983 = vmatprep.subr.mxu0 0.0
    %2984 = vmatpush1.msra.mxu0 0.0
    %2985 = vmatprep.subr.mxu0 0.0
    %2986 = vmatpush1.msra.mxu0 0.0
    %2987 = vmatprep.subr.mxu0 0.0
    %2988 = vmatpush1.msra.mxu0 0.0
    %2989 = vmatprep.subr.mxu0 0.0
    %2990 = vmatpush1.msra.mxu0 0.0
    %2991 = vmatprep.subr.mxu0 0.0
    %2992 = vmatpush1.msra.mxu0 0.0
    %2993 = vmatprep.subr.mxu0 0.0
    %2994 = vmatpush1.msra.mxu0 0.0
    %2995 = vmatprep.subr.mxu0 0.0
    %2996 = vmatpush1.msra.mxu0 0.0
    %2997 = vmatprep.subr.mxu0 0.0
    %2998 = vmatpush1.msra.mxu0 0.0
    %2999 = vmatprep.subr.mxu0 0.0
    %3000 = vmatpush1.msra.mxu0 0.0
    %3001 = vmatprep.subr.mxu0 0.0
    %3002 = vmatpush1.msra.mxu0 0.0
    %3003 = vmatprep.subr.mxu0 0.0
    %3004 = vmatpush1.msra.mxu0 0.0
    %3005 = vmatprep.subr.mxu0 0.0
    %3006 = vmatpush1.msra.mxu0 0.0
    %3007 = vmatprep.subr.mxu0 0.0
    %3008 = vmatpush1.msra.mxu0 0.0
    %3009 = vmatprep.subr.mxu0 0.0
    %3010 = vmatpush1.msra.mxu0 0.0
    %3011 = vmatprep.subr.mxu0 0.0
    %3012 = vmatpush1.msra.mxu0 0.0
    %3013 = vmatprep.subr.mxu0 0.0
    %3014 = vmatpush1.msra.mxu0 0.0
    %3015 = vmatprep.subr.mxu0 0.0
    %3016 = vmatpush1.msra.mxu0 0.0
    %3017 = vmatprep.subr.mxu0 0.0
    %3018 = vmatpush1.msra.mxu0 0.0
    %3019 = vmatprep.subr.mxu0 0.0
    %3020 = vmatpush1.msra.mxu0 0.0
    %3021 = vmatprep.mubr.f32.mxu0 0.0
    %3022 = vmatmul.mubr.f32.gmra.mrb[0].mxu0 %v2955
    %v3023 = vpop.f32.mrb[0].mxu0
    %v3024 = vadd.f32 0.0, %v3023
    %v3025 = vpop.f32.mrb[0].mxu0
    %3026 = vdwg.mxu0
    %v3027 = vadd.f32 %v2953, %v3024
    %3028 = vmatprep.subr.mxu0 0.0
    %3029 = vmatpush1.msra.mxu0 %v136
    %3030 = vmatprep.subr.mxu0 0.0
    %3031 = vmatpush1.msra.mxu0 %v137
    %3032 = vmatprep.subr.mxu0 0.0
    %3033 = vmatpush1.msra.mxu0 %v138
    %3034 = vmatprep.subr.mxu0 0.0
    %3035 = vmatpush1.msra.mxu0 %v139
    %3036 = vmatprep.subr.mxu0 0.0
    %3037 = vmatpush1.msra.mxu0 0.0
    %3038 = vmatprep.subr.mxu0 0.0
    %3039 = vmatpush1.msra.mxu0 0.0
    %3040 = vmatprep.subr.mxu0 0.0
    %3041 = vmatpush1.msra.mxu0 0.0
    %3042 = vmatprep.subr.mxu0 0.0
    %3043 = vmatpush1.msra.mxu0 0.0
    %3044 = vmatprep.subr.mxu0 0.0
    %3045 = vmatpush1.msra.mxu0 0.0
    %3046 = vmatprep.subr.mxu0 0.0
    %3047 = vmatpush1.msra.mxu0 0.0
    %3048 = vmatprep.subr.mxu0 0.0
    %3049 = vmatpush1.msra.mxu0 0.0
    %3050 = vmatprep.subr.mxu0 0.0
    %3051 = vmatpush1.msra.mxu0 0.0
    %3052 = vmatprep.subr.mxu0 0.0
    %3053 = vmatpush1.msra.mxu0 0.0
    %3054 = vmatprep.subr.mxu0 0.0
    %3055 = vmatpush1.msra.mxu0 0.0
    %3056 = vmatprep.subr.mxu0 0.0
    %3057 = vmatpush1.msra.mxu0 0.0
    %3058 = vmatprep.subr.mxu0 0.0
    %3059 = vmatpush1.msra.mxu0 0.0
    %3060 = vmatprep.subr.mxu0 0.0
    %3061 = vmatpush1.msra.mxu0 0.0
    %3062 = vmatprep.subr.mxu0 0.0
    %3063 = vmatpush1.msra.mxu0 0.0
    %3064 = vmatprep.subr.mxu0 0.0
    %3065 = vmatpush1.msra.mxu0 0.0
    %3066 = vmatprep.subr.mxu0 0.0
    %3067 = vmatpush1.msra.mxu0 0.0
    %3068 = vmatprep.subr.mxu0 0.0
    %3069 = vmatpush1.msra.mxu0 0.0
    %3070 = vmatprep.subr.mxu0 0.0
    %3071 = vmatpush1.msra.mxu0 0.0
    %3072 = vmatprep.subr.mxu0 0.0
    %3073 = vmatpush1.msra.mxu0 0.0
    %3074 = vmatprep.subr.mxu0 0.0
    %3075 = vmatpush1.msra.mxu0 0.0
    %3076 = vmatprep.subr.mxu0 0.0
    %3077 = vmatpush1.msra.mxu0 0.0
    %3078 = vmatprep.subr.mxu0 0.0
    %3079 = vmatpush1.msra.mxu0 0.0
    %3080 = vmatprep.subr.mxu0 0.0
    %3081 = vmatpush1.msra.mxu0 0.0
    %3082 = vmatprep.subr.mxu0 0.0
    %3083 = vmatpush1.msra.mxu0 0.0
    %3084 = vmatprep.subr.mxu0 0.0
    %3085 = vmatpush1.msra.mxu0 0.0
    %3086 = vmatprep.subr.mxu0 0.0
    %3087 = vmatpush1.msra.mxu0 0.0
    %3088 = vmatprep.subr.mxu0 0.0
    %3089 = vmatpush1.msra.mxu0 0.0
    %3090 = vmatprep.subr.mxu0 0.0
    %3091 = vmatpush1.msra.mxu0 0.0
    %3092 = vmatprep.mubr.f32.mxu0 0.0
    %3093 = vmatmul.mubr.f32.gmra.mrb[0].mxu0 %v2683
    %v3094 = vpop.f32.mrb[0].mxu0
    %v3095 = vadd.f32 %v140, %v3094
    %v3096 = vpop.f32.mrb[0].mxu0
    %3097 = vdwg.mxu0
    %v3098 = vadd.f32 %v3027, %v3095
    %v3099 = vxor.u32 %v3098, 2147483648
    %v3100 = vmul.f32 %v3099, 1.442695
    %v3101 = vpow.pop %v3100
    %v3102 = vadd.f32 %v3101, 1.0
    %v3103 = vrcp.pop %v3102
    %v3104 = vmul.f32 1.0, %v3103
    %v3107 = vunpack.c.l.s4 1966171168
    %v3108 = vunpack.c.0.s8 %v3107
    %v3109 = vlaneseq
    %v3110 = vshrl.u32 %v3109, 7
    %v3111 = vsub.s32 %v3108, %v3110
    %v3112 = vrot.slane %v3095, %v3111
    %v3114 = vunpack.c.l.s4 1966171168
    %v3115 = vunpack.c.0.s8 %v3114
    %v3116 = vlaneseq
    %v3117 = vshrl.u32 %v3116, 7
    %v3118 = vsub.s32 %v3115, %v3117
    %v3119 = vrot.slane %v3112, %v3118
    %3120 = vrot.lane.b32.xlu0 %v3119, 64
    %v3121 = vpop.permute.xlu0 %3120
    %v3123 = vmul.f32 %v3104, %v3121
    %3125 = vrot.lane.b32.xlu0 %v3123, 64
    %v3126 = vpop.permute.xlu0 %3125
    %v3128 = vadd.f32 %v3027, %v3126
    %v3129 = vtanh.pop %v3128
    %v3130 = vsub.f32 1.0, %v3104
    %3132 = vrot.lane.b32.xlu0 %v3129, 96
    %v3133 = vpop.permute.xlu0 %3132
    %v3135 = vmul.f32 %v3130, %v3133
    %v3136 = vmul.f32 %v3104, %v2675
    %v3137 = vadd.f32 %v3135, %v3136
    %v3139 = vlaneseq
    %v3140 = vshrl.u32 %v3139, 7
    %v3141 = vsub.s32 0, %v3140
    %v3142 = vrot.slane %v3137, %v3141
    %3143 = vrot.lane.b32.xlu0 %v3142, 96
    %v3144 = vpop.permute.xlu0 %3143
    %v3145 = vsel %vm165, %v3144, 0
    %3147 = vmatprep.subr.mxu0 0.0
    %3148 = vmatpush1.msra.mxu0 %v141
    %3149 = vmatprep.subr.mxu0 0.0
    %3150 = vmatpush1.msra.mxu0 %v142
    %3151 = vmatprep.subr.mxu0 0.0
    %3152 = vmatpush1.msra.mxu0 %v143
    %3153 = vmatprep.subr.mxu0 0.0
    %3154 = vmatpush1.msra.mxu0 %v144
    %3155 = vmatprep.subr.mxu0 0.0
    %3156 = vmatpush1.msra.mxu0 0.0
    %3157 = vmatprep.subr.mxu0 0.0
    %3158 = vmatpush1.msra.mxu0 0.0
    %3159 = vmatprep.subr.mxu0 0.0
    %3160 = vmatpush1.msra.mxu0 0.0
    %3161 = vmatprep.subr.mxu0 0.0
    %3162 = vmatpush1.msra.mxu0 0.0
    %3163 = vmatprep.subr.mxu0 0.0
    %3164 = vmatpush1.msra.mxu0 0.0
    %3165 = vmatprep.subr.mxu0 0.0
    %3166 = vmatpush1.msra.mxu0 0.0
    %3167 = vmatprep.subr.mxu0 0.0
    %3168 = vmatpush1.msra.mxu0 0.0
    %3169 = vmatprep.subr.mxu0 0.0
    %3170 = vmatpush1.msra.mxu0 0.0
    %3171 = vmatprep.subr.mxu0 0.0
    %3172 = vmatpush1.msra.mxu0 0.0
    %3173 = vmatprep.subr.mxu0 0.0
    %3174 = vmatpush1.msra.mxu0 0.0
    %3175 = vmatprep.subr.mxu0 0.0
    %3176 = vmatpush1.msra.mxu0 0.0
    %3177 = vmatprep.subr.mxu0 0.0
    %3178 = vmatpush1.msra.mxu0 0.0
    %3179 = vmatprep.subr.mxu0 0.0
    %3180 = vmatpush1.msra.mxu0 0.0
    %3181 = vmatprep.subr.mxu0 0.0
    %3182 = vmatpush1.msra.mxu0 0.0
    %3183 = vmatprep.subr.mxu0 0.0
    %3184 = vmatpush1.msra.mxu0 0.0
    %3185 = vmatprep.subr.mxu0 0.0
    %3186 = vmatpush1.msra.mxu0 0.0
    %3187 = vmatprep.subr.mxu0 0.0
    %3188 = vmatpush1.msra.mxu0 0.0
    %3189 = vmatprep.subr.mxu0 0.0
    %3190 = vmatpush1.msra.mxu0 0.0
    %3191 = vmatprep.subr.mxu0 0.0
    %3192 = vmatpush1.msra.mxu0 0.0
    %3193 = vmatprep.subr.mxu0 0.0
    %3194 = vmatpush1.msra.mxu0 0.0
    %3195 = vmatprep.subr.mxu0 0.0
    %3196 = vmatpush1.msra.mxu0 0.0
    %3197 = vmatprep.subr.mxu0 0.0
    %3198 = vmatpush1.msra.mxu0 0.0
    %3199 = vmatprep.subr.mxu0 0.0
    %3200 = vmatpush1.msra.mxu0 0.0
    %3201 = vmatprep.subr.mxu0 0.0
    %3202 = vmatpush1.msra.mxu0 0.0
    %3203 = vmatprep.subr.mxu0 0.0
    %3204 = vmatpush1.msra.mxu0 0.0
    %3205 = vmatprep.subr.mxu0 0.0
    %3206 = vmatpush1.msra.mxu0 0.0
    %3207 = vmatprep.subr.mxu0 0.0
    %3208 = vmatpush1.msra.mxu0 0.0
    %3209 = vmatprep.subr.mxu0 0.0
    %3210 = vmatpush1.msra.mxu0 0.0
    %3211 = vmatprep.mubr.f32.mxu0 0.0
    %3212 = vmatmul.mubr.f32.gmra.mrb[0].mxu0 %v3145
    %v3213 = vpop.f32.mrb[0].mxu0
    %v3214 = vadd.f32 %v145, %v3213
    %v3215 = vpop.f32.mrb[0].mxu0
    %3216 = vdwg.mxu0
    %v3217 = vsel %vm165, %v2948, 0
    %3219 = vmatprep.subr.mxu0 0.0
    %3220 = vmatpush1.msra.mxu0 %v146
    %3221 = vmatprep.subr.mxu0 0.0
    %3222 = vmatpush1.msra.mxu0 %v147
    %3223 = vmatprep.subr.mxu0 0.0
    %3224 = vmatpush1.msra.mxu0 %v148
    %3225 = vmatprep.subr.mxu0 0.0
    %3226 = vmatpush1.msra.mxu0 %v149
    %3227 = vmatprep.subr.mxu0 0.0
    %3228 = vmatpush1.msra.mxu0 0.0
    %3229 = vmatprep.subr.mxu0 0.0
    %3230 = vmatpush1.msra.mxu0 0.0
    %3231 = vmatprep.subr.mxu0 0.0
    %3232 = vmatpush1.msra.mxu0 0.0
    %3233 = vmatprep.subr.mxu0 0.0
    %3234 = vmatpush1.msra.mxu0 0.0
    %3235 = vmatprep.subr.mxu0 0.0
    %3236 = vmatpush1.msra.mxu0 0.0
    %3237 = vmatprep.subr.mxu0 0.0
    %3238 = vmatpush1.msra.mxu0 0.0
    %3239 = vmatprep.subr.mxu0 0.0
    %3240 = vmatpush1.msra.mxu0 0.0
    %3241 = vmatprep.subr.mxu0 0.0
    %3242 = vmatpush1.msra.mxu0 0.0
    %3243 = vmatprep.subr.mxu0 0.0
    %3244 = vmatpush1.msra.mxu0 0.0
    %3245 = vmatprep.subr.mxu0 0.0
    %3246 = vmatpush1.msra.mxu0 0.0
    %3247 = vmatprep.subr.mxu0 0.0
    %3248 = vmatpush1.msra.mxu0 0.0
    %3249 = vmatprep.subr.mxu0 0.0
    %3250 = vmatpush1.msra.mxu0 0.0
    %3251 = vmatprep.subr.mxu0 0.0
    %3252 = vmatpush1.msra.mxu0 0.0
    %3253 = vmatprep.subr.mxu0 0.0
    %3254 = vmatpush1.msra.mxu0 0.0
    %3255 = vmatprep.subr.mxu0 0.0
    %3256 = vmatpush1.msra.mxu0 0.0
    %3257 = vmatprep.subr.mxu0 0.0
    %3258 = vmatpush1.msra.mxu0 0.0
    %3259 = vmatprep.subr.mxu0 0.0
    %3260 = vmatpush1.msra.mxu0 0.0
    %3261 = vmatprep.subr.mxu0 0.0
    %3262 = vmatpush1.msra.mxu0 0.0
    %3263 = vmatprep.subr.mxu0 0.0
    %3264 = vmatpush1.msra.mxu0 0.0
    %3265 = vmatprep.subr.mxu0 0.0
    %3266 = vmatpush1.msra.mxu0 0.0
    %3267 = vmatprep.subr.mxu0 0.0
    %3268 = vmatpush1.msra.mxu0 0.0
    %3269 = vmatprep.subr.mxu0 0.0
    %3270 = vmatpush1.msra.mxu0 0.0
    %3271 = vmatprep.subr.mxu0 0.0
    %3272 = vmatpush1.msra.mxu0 0.0
    %3273 = vmatprep.subr.mxu0 0.0
    %3274 = vmatpush1.msra.mxu0 0.0
    %3275 = vmatprep.subr.mxu0 0.0
    %3276 = vmatpush1.msra.mxu0 0.0
    %3277 = vmatprep.subr.mxu0 0.0
    %3278 = vmatpush1.msra.mxu0 0.0
    %3279 = vmatprep.subr.mxu0 0.0
    %3280 = vmatpush1.msra.mxu0 0.0
    %3281 = vmatprep.subr.mxu0 0.0
    %3282 = vmatpush1.msra.mxu0 0.0
    %3283 = vmatprep.mubr.f32.mxu0 0.0
    %3284 = vmatmul.mubr.f32.gmra.mrb[0].mxu0 %v3217
    %v3285 = vpop.f32.mrb[0].mxu0
    %v3286 = vadd.f32 %v150, %v3285
    %v3287 = vpop.f32.mrb[0].mxu0
    %3288 = vdwg.mxu0
    %v3289 = vadd.f32 %v3214, %v3286
    %v3290 = vxor.u32 %v3289, 2147483648
    %v3291 = vmul.f32 %v3290, 1.442695
    %v3292 = vpow.pop %v3291
    %v3293 = vadd.f32 %v3292, 1.0
    %v3294 = vrcp.pop %v3293
    %v3295 = vmul.f32 1.0, %v3294
    %3297 = vrot.lane.b32.xlu0 %v3286, 64
    %v3298 = vpop.permute.xlu0 %3297
    %v3300 = vmul.f32 %v3295, %v3298
    %3302 = vrot.lane.b32.xlu0 %v3300, 64
    %v3303 = vpop.permute.xlu0 %3302
    %v3305 = vadd.f32 %v3214, %v3303
    %v3306 = vtanh.pop %v3305
    %v3307 = vsub.f32 1.0, %v3295
    %3309 = vrot.lane.b32.xlu0 %v3306, 96
    %v3310 = vpop.permute.xlu0 %3309
    %v3312 = vmul.f32 %v3307, %v3310
    %v3313 = vmul.f32 %v3295, %v2852
    %v3314 = vadd.f32 %v3312, %v3313
    %3316 = vset.pattern.permute.xlu0 32
    %3317 = vperm.xlu0 %3316, %v3314
    %v3318 = vpop.permute.xlu0 %3317
    %v3320 = vmul.f32 %v3318, %v152
    %v3321 = vsel %vm547, %v3320, -inf
    %3322 = vmax.xlane.f32.xlu0 %v3321
    %v3323 = vpop.xlane.xlu0 %3322
    %v3324 = vsub.f32 %v3320, %v3323
    %v3325 = vmul.f32 %v3324, 1.442695
    %v3326 = vpow.pop %v3325
    %v3327 = vsel %vm547, %v3326, 0.0
    %3328 = vadd.xlane.f32.xlu0 %v3327
    %v3329 = vpop.xlane.xlu0 %3328
    %v3330 = vrcp.pop %v3329
    %v3331 = vmul.f32 %v3326, %v3330
    %v3333 = vsel %vm559, %v3331, 0
    %3335 = vmatprep.subr.mxu0 0.0
    %3336 = vmatpush1.msra.mxu0 %v151
    %3337 = vmatprep.subr.mxu0 0.0
    %3338 = vmatpush1.msra.mxu0 0.0
    %3339 = vmatprep.subr.mxu0 0.0
    %3340 = vmatpush1.msra.mxu0 0.0
    %3341 = vmatprep.subr.mxu0 0.0
    %3342 = vmatpush1.msra.mxu0 0.0
    %3343 = vmatprep.subr.mxu0 0.0
    %3344 = vmatpush1.msra.mxu0 0.0
    %3345 = vmatprep.subr.mxu0 0.0
    %3346 = vmatpush1.msra.mxu0 0.0
    %3347 = vmatprep.subr.mxu0 0.0
    %3348 = vmatpush1.msra.mxu0 0.0
    %3349 = vmatprep.subr.mxu0 0.0
    %3350 = vmatpush1.msra.mxu0 0.0
    %3351 = vmatprep.subr.mxu0 0.0
    %3352 = vmatpush1.msra.mxu0 0.0
    %3353 = vmatprep.subr.mxu0 0.0
    %3354 = vmatpush1.msra.mxu0 0.0
    %3355 = vmatprep.subr.mxu0 0.0
    %3356 = vmatpush1.msra.mxu0 0.0
    %3357 = vmatprep.subr.mxu0 0.0
    %3358 = vmatpush1.msra.mxu0 0.0
    %3359 = vmatprep.subr.mxu0 0.0
    %3360 = vmatpush1.msra.mxu0 0.0
    %3361 = vmatprep.subr.mxu0 0.0
    %3362 = vmatpush1.msra.mxu0 0.0
    %3363 = vmatprep.subr.mxu0 0.0
    %3364 = vmatpush1.msra.mxu0 0.0
    %3365 = vmatprep.subr.mxu0 0.0
    %3366 = vmatpush1.msra.mxu0 0.0
    %3367 = vmatprep.subr.mxu0 0.0
    %3368 = vmatpush1.msra.mxu0 0.0
    %3369 = vmatprep.subr.mxu0 0.0
    %3370 = vmatpush1.msra.mxu0 0.0
    %3371 = vmatprep.subr.mxu0 0.0
    %3372 = vmatpush1.msra.mxu0 0.0
    %3373 = vmatprep.subr.mxu0 0.0
    %3374 = vmatpush1.msra.mxu0 0.0
    %3375 = vmatprep.subr.mxu0 0.0
    %3376 = vmatpush1.msra.mxu0 0.0
    %3377 = vmatprep.subr.mxu0 0.0
    %3378 = vmatpush1.msra.mxu0 0.0
    %3379 = vmatprep.subr.mxu0 0.0
    %3380 = vmatpush1.msra.mxu0 0.0
    %3381 = vmatprep.subr.mxu0 0.0
    %3382 = vmatpush1.msra.mxu0 0.0
    %3383 = vmatprep.subr.mxu0 0.0
    %3384 = vmatpush1.msra.mxu0 0.0
    %3385 = vmatprep.subr.mxu0 0.0
    %3386 = vmatpush1.msra.mxu0 0.0
    %3387 = vmatprep.subr.mxu0 0.0
    %3388 = vmatpush1.msra.mxu0 0.0
    %3389 = vmatprep.subr.mxu0 0.0
    %3390 = vmatpush1.msra.mxu0 0.0
    %3391 = vmatprep.subr.mxu0 0.0
    %3392 = vmatpush1.msra.mxu0 0.0
    %3393 = vmatprep.subr.mxu0 0.0
    %3394 = vmatpush1.msra.mxu0 0.0
    %3395 = vmatprep.subr.mxu0 0.0
    %3396 = vmatpush1.msra.mxu0 0.0
    %3397 = vmatprep.subr.mxu0 0.0
    %3398 = vmatpush1.msra.mxu0 0.0
    %3399 = vmatprep.mubr.f32.mxu0 0.0
    %3400 = vmatmul.mubr.f32.gmra.mrb[0].mxu0 %v3333
    %v3401 = vpop.f32.mrb[0].mxu0
    %v3402 = vadd.f32 0.0, %v3401
    %v3403 = vpop.f32.mrb[0].mxu0
    %3404 = vdwg.mxu0
    %s3405 = scalar_lea.vmem [#allocation16], 48
    %3406 = vst.msk [vmem:[%s3405] sm:$0x1] %vm633, %v3402
    %3408 = vst.msk [vmem:[%s3405 + $0x1] sm:$0x1] %vm633, %v3144
    %3409 = vrot.lane.b32.xlu0 %v3314, 96
    %v3410 = vpop.permute.xlu0 %3409
    %3412 = vst.msk [vmem:[%s3405 + $0x2] sm:$0x1] %vm633, %v3410
    %3413 = vst.msk [vmem:[%s3405 + $0x3] sm:$0x1] %vm547, %v3331
    %s3414 = scalar_lea.vmem [#allocation5], 7
    %v3415 = vld [vmem:[%s3414] sm:$0x1]
    %v3417 = vsel %vm165, %v3402, 0
    %3419 = vmatprep.subr.mxu0 0.0
    %3420 = vmatpush1.msra.mxu0 %v132
    %3421 = vmatprep.subr.mxu0 0.0
    %3422 = vmatpush1.msra.mxu0 %v133
    %3423 = vmatprep.subr.mxu0 0.0
    %3424 = vmatpush1.msra.mxu0 %v134
    %3425 = vmatprep.subr.mxu0 0.0
    %3426 = vmatpush1.msra.mxu0 %v135
    %3427 = vmatprep.subr.mxu0 0.0
    %3428 = vmatpush1.msra.mxu0 0.0
    %3429 = vmatprep.subr.mxu0 0.0
    %3430 = vmatpush1.msra.mxu0 0.0
    %3431 = vmatprep.subr.mxu0 0.0
    %3432 = vmatpush1.msra.mxu0 0.0
    %3433 = vmatprep.subr.mxu0 0.0
    %3434 = vmatpush1.msra.mxu0 0.0
    %3435 = vmatprep.subr.mxu0 0.0
    %3436 = vmatpush1.msra.mxu0 0.0
    %3437 = vmatprep.subr.mxu0 0.0
    %3438 = vmatpush1.msra.mxu0 0.0
    %3439 = vmatprep.subr.mxu0 0.0
    %3440 = vmatpush1.msra.mxu0 0.0
    %3441 = vmatprep.subr.mxu0 0.0
    %3442 = vmatpush1.msra.mxu0 0.0
    %3443 = vmatprep.subr.mxu0 0.0
    %3444 = vmatpush1.msra.mxu0 0.0
    %3445 = vmatprep.subr.mxu0 0.0
    %3446 = vmatpush1.msra.mxu0 0.0
    %3447 = vmatprep.subr.mxu0 0.0
    %3448 = vmatpush1.msra.mxu0 0.0
    %3449 = vmatprep.subr.mxu0 0.0
    %3450 = vmatpush1.msra.mxu0 0.0
    %3451 = vmatprep.subr.mxu0 0.0
    %3452 = vmatpush1.msra.mxu0 0.0
    %3453 = vmatprep.subr.mxu0 0.0
    %3454 = vmatpush1.msra.mxu0 0.0
    %3455 = vmatprep.subr.mxu0 0.0
    %3456 = vmatpush1.msra.mxu0 0.0
    %3457 = vmatprep.subr.mxu0 0.0
    %3458 = vmatpush1.msra.mxu0 0.0
    %3459 = vmatprep.subr.mxu0 0.0
    %3460 = vmatpush1.msra.mxu0 0.0
    %3461 = vmatprep.subr.mxu0 0.0
    %3462 = vmatpush1.msra.mxu0 0.0
    %3463 = vmatprep.subr.mxu0 0.0
    %3464 = vmatpush1.msra.mxu0 0.0
    %3465 = vmatprep.subr.mxu0 0.0
    %3466 = vmatpush1.msra.mxu0 0.0
    %3467 = vmatprep.subr.mxu0 0.0
    %3468 = vmatpush1.msra.mxu0 0.0
    %3469 = vmatprep.subr.mxu0 0.0
    %3470 = vmatpush1.msra.mxu0 0.0
    %3471 = vmatprep.subr.mxu0 0.0
    %3472 = vmatpush1.msra.mxu0 0.0
    %3473 = vmatprep.subr.mxu0 0.0
    %3474 = vmatpush1.msra.mxu0 0.0
    %3475 = vmatprep.subr.mxu0 0.0
    %3476 = vmatpush1.msra.mxu0 0.0
    %3477 = vmatprep.subr.mxu0 0.0
    %3478 = vmatpush1.msra.mxu0 0.0
    %3479 = vmatprep.subr.mxu0 0.0
    %3480 = vmatpush1.msra.mxu0 0.0
    %3481 = vmatprep.subr.mxu0 0.0
    %3482 = vmatpush1.msra.mxu0 0.0
    %3483 = vmatprep.mubr.f32.mxu0 0.0
    %3484 = vmatmul.mubr.f32.gmra.mrb[0].mxu0 %v3417
    %v3485 = vpop.f32.mrb[0].mxu0
    %v3486 = vadd.f32 0.0, %v3485
    %v3487 = vpop.f32.mrb[0].mxu0
    %3488 = vdwg.mxu0
    %v3489 = vadd.f32 %v3415, %v3486
    %3490 = vmatprep.subr.mxu0 0.0
    %3491 = vmatpush1.msra.mxu0 %v136
    %3492 = vmatprep.subr.mxu0 0.0
    %3493 = vmatpush1.msra.mxu0 %v137
    %3494 = vmatprep.subr.mxu0 0.0
    %3495 = vmatpush1.msra.mxu0 %v138
    %3496 = vmatprep.subr.mxu0 0.0
    %3497 = vmatpush1.msra.mxu0 %v139
    %3498 = vmatprep.subr.mxu0 0.0
    %3499 = vmatpush1.msra.mxu0 0.0
    %3500 = vmatprep.subr.mxu0 0.0
    %3501 = vmatpush1.msra.mxu0 0.0
    %3502 = vmatprep.subr.mxu0 0.0
    %3503 = vmatpush1.msra.mxu0 0.0
    %3504 = vmatprep.subr.mxu0 0.0
    %3505 = vmatpush1.msra.mxu0 0.0
    %3506 = vmatprep.subr.mxu0 0.0
    %3507 = vmatpush1.msra.mxu0 0.0
    %3508 = vmatprep.subr.mxu0 0.0
    %3509 = vmatpush1.msra.mxu0 0.0
    %3510 = vmatprep.subr.mxu0 0.0
    %3511 = vmatpush1.msra.mxu0 0.0
    %3512 = vmatprep.subr.mxu0 0.0
    %3513 = vmatpush1.msra.mxu0 0.0
    %3514 = vmatprep.subr.mxu0 0.0
    %3515 = vmatpush1.msra.mxu0 0.0
    %3516 = vmatprep.subr.mxu0 0.0
    %3517 = vmatpush1.msra.mxu0 0.0
    %3518 = vmatprep.subr.mxu0 0.0
    %3519 = vmatpush1.msra.mxu0 0.0
    %3520 = vmatprep.subr.mxu0 0.0
    %3521 = vmatpush1.msra.mxu0 0.0
    %3522 = vmatprep.subr.mxu0 0.0
    %3523 = vmatpush1.msra.mxu0 0.0
    %3524 = vmatprep.subr.mxu0 0.0
    %3525 = vmatpush1.msra.mxu0 0.0
    %3526 = vmatprep.subr.mxu0 0.0
    %3527 = vmatpush1.msra.mxu0 0.0
    %3528 = vmatprep.subr.mxu0 0.0
    %3529 = vmatpush1.msra.mxu0 0.0
    %3530 = vmatprep.subr.mxu0 0.0
    %3531 = vmatpush1.msra.mxu0 0.0
    %3532 = vmatprep.subr.mxu0 0.0
    %3533 = vmatpush1.msra.mxu0 0.0
    %3534 = vmatprep.subr.mxu0 0.0
    %3535 = vmatpush1.msra.mxu0 0.0
    %3536 = vmatprep.subr.mxu0 0.0
    %3537 = vmatpush1.msra.mxu0 0.0
    %3538 = vmatprep.subr.mxu0 0.0
    %3539 = vmatpush1.msra.mxu0 0.0
    %3540 = vmatprep.subr.mxu0 0.0
    %3541 = vmatpush1.msra.mxu0 0.0
    %3542 = vmatprep.subr.mxu0 0.0
    %3543 = vmatpush1.msra.mxu0 0.0
    %3544 = vmatprep.subr.mxu0 0.0
    %3545 = vmatpush1.msra.mxu0 0.0
    %3546 = vmatprep.subr.mxu0 0.0
    %3547 = vmatpush1.msra.mxu0 0.0
    %3548 = vmatprep.subr.mxu0 0.0
    %3549 = vmatpush1.msra.mxu0 0.0
    %3550 = vmatprep.subr.mxu0 0.0
    %3551 = vmatpush1.msra.mxu0 0.0
    %3552 = vmatprep.subr.mxu0 0.0
    %3553 = vmatpush1.msra.mxu0 0.0
    %3554 = vmatprep.mubr.f32.mxu0 0.0
    %3555 = vmatmul.mubr.f32.gmra.mrb[0].mxu0 %v3145
    %v3556 = vpop.f32.mrb[0].mxu0
    %v3557 = vadd.f32 %v140, %v3556
    %v3558 = vpop.f32.mrb[0].mxu0
    %3559 = vdwg.mxu0
    %v3560 = vadd.f32 %v3489, %v3557
    %v3561 = vxor.u32 %v3560, 2147483648
    %v3562 = vmul.f32 %v3561, 1.442695
    %v3563 = vpow.pop %v3562
    %v3564 = vadd.f32 %v3563, 1.0
    %v3565 = vrcp.pop %v3564
    %v3566 = vmul.f32 1.0, %v3565
    %v3569 = vunpack.c.l.s4 1966171168
    %v3570 = vunpack.c.0.s8 %v3569
    %v3571 = vlaneseq
    %v3572 = vshrl.u32 %v3571, 7
    %v3573 = vsub.s32 %v3570, %v3572
    %v3574 = vrot.slane %v3557, %v3573
    %v3576 = vunpack.c.l.s4 1966171168
    %v3577 = vunpack.c.0.s8 %v3576
    %v3578 = vlaneseq
    %v3579 = vshrl.u32 %v3578, 7
    %v3580 = vsub.s32 %v3577, %v3579
    %v3581 = vrot.slane %v3574, %v3580
    %3582 = vrot.lane.b32.xlu0 %v3581, 64
    %v3583 = vpop.permute.xlu0 %3582
    %v3585 = vmul.f32 %v3566, %v3583
    %3587 = vrot.lane.b32.xlu0 %v3585, 64
    %v3588 = vpop.permute.xlu0 %3587
    %v3590 = vadd.f32 %v3489, %v3588
    %v3591 = vtanh.pop %v3590
    %v3592 = vsub.f32 1.0, %v3566
    %3594 = vrot.lane.b32.xlu0 %v3591, 96
    %v3595 = vpop.permute.xlu0 %3594
    %v3597 = vmul.f32 %v3592, %v3595
    %v3598 = vmul.f32 %v3566, %v3137
    %v3599 = vadd.f32 %v3597, %v3598
    %v3601 = vlaneseq
    %v3602 = vshrl.u32 %v3601, 7
    %v3603 = vsub.s32 0, %v3602
    %v3604 = vrot.slane %v3599, %v3603
    %3605 = vrot.lane.b32.xlu0 %v3604, 96
    %v3606 = vpop.permute.xlu0 %3605
    %v3607 = vsel %vm165, %v3606, 0
    %3609 = vmatprep.subr.mxu0 0.0
    %3610 = vmatpush1.msra.mxu0 %v141
    %3611 = vmatprep.subr.mxu0 0.0
    %3612 = vmatpush1.msra.mxu0 %v142
    %3613 = vmatprep.subr.mxu0 0.0
    %3614 = vmatpush1.msra.mxu0 %v143
    %3615 = vmatprep.subr.mxu0 0.0
    %3616 = vmatpush1.msra.mxu0 %v144
    %3617 = vmatprep.subr.mxu0 0.0
    %3618 = vmatpush1.msra.mxu0 0.0
    %3619 = vmatprep.subr.mxu0 0.0
    %3620 = vmatpush1.msra.mxu0 0.0
    %3621 = vmatprep.subr.mxu0 0.0
    %3622 = vmatpush1.msra.mxu0 0.0
    %3623 = vmatprep.subr.mxu0 0.0
    %3624 = vmatpush1.msra.mxu0 0.0
    %3625 = vmatprep.subr.mxu0 0.0
    %3626 = vmatpush1.msra.mxu0 0.0
    %3627 = vmatprep.subr.mxu0 0.0
    %3628 = vmatpush1.msra.mxu0 0.0
    %3629 = vmatprep.subr.mxu0 0.0
    %3630 = vmatpush1.msra.mxu0 0.0
    %3631 = vmatprep.subr.mxu0 0.0
    %3632 = vmatpush1.msra.mxu0 0.0
    %3633 = vmatprep.subr.mxu0 0.0
    %3634 = vmatpush1.msra.mxu0 0.0
    %3635 = vmatprep.subr.mxu0 0.0
    %3636 = vmatpush1.msra.mxu0 0.0
    %3637 = vmatprep.subr.mxu0 0.0
    %3638 = vmatpush1.msra.mxu0 0.0
    %3639 = vmatprep.subr.mxu0 0.0
    %3640 = vmatpush1.msra.mxu0 0.0
    %3641 = vmatprep.subr.mxu0 0.0
    %3642 = vmatpush1.msra.mxu0 0.0
    %3643 = vmatprep.subr.mxu0 0.0
    %3644 = vmatpush1.msra.mxu0 0.0
    %3645 = vmatprep.subr.mxu0 0.0
    %3646 = vmatpush1.msra.mxu0 0.0
    %3647 = vmatprep.subr.mxu0 0.0
    %3648 = vmatpush1.msra.mxu0 0.0
    %3649 = vmatprep.subr.mxu0 0.0
    %3650 = vmatpush1.msra.mxu0 0.0
    %3651 = vmatprep.subr.mxu0 0.0
    %3652 = vmatpush1.msra.mxu0 0.0
    %3653 = vmatprep.subr.mxu0 0.0
    %3654 = vmatpush1.msra.mxu0 0.0
    %3655 = vmatprep.subr.mxu0 0.0
    %3656 = vmatpush1.msra.mxu0 0.0
    %3657 = vmatprep.subr.mxu0 0.0
    %3658 = vmatpush1.msra.mxu0 0.0
    %3659 = vmatprep.subr.mxu0 0.0
    %3660 = vmatpush1.msra.mxu0 0.0
    %3661 = vmatprep.subr.mxu0 0.0
    %3662 = vmatpush1.msra.mxu0 0.0
    %3663 = vmatprep.subr.mxu0 0.0
    %3664 = vmatpush1.msra.mxu0 0.0
    %3665 = vmatprep.subr.mxu0 0.0
    %3666 = vmatpush1.msra.mxu0 0.0
    %3667 = vmatprep.subr.mxu0 0.0
    %3668 = vmatpush1.msra.mxu0 0.0
    %3669 = vmatprep.subr.mxu0 0.0
    %3670 = vmatpush1.msra.mxu0 0.0
    %3671 = vmatprep.subr.mxu0 0.0
    %3672 = vmatpush1.msra.mxu0 0.0
    %3673 = vmatprep.mubr.f32.mxu0 0.0
    %3674 = vmatmul.mubr.f32.gmra.mrb[0].mxu0 %v3607
    %v3675 = vpop.f32.mrb[0].mxu0
    %v3676 = vadd.f32 %v145, %v3675
    %v3677 = vpop.f32.mrb[0].mxu0
    %3678 = vdwg.mxu0
    %v3679 = vsel %vm165, %v3410, 0
    %3681 = vmatprep.subr.mxu0 0.0
    %3682 = vmatpush1.msra.mxu0 %v146
    %3683 = vmatprep.subr.mxu0 0.0
    %3684 = vmatpush1.msra.mxu0 %v147
    %3685 = vmatprep.subr.mxu0 0.0
    %3686 = vmatpush1.msra.mxu0 %v148
    %3687 = vmatprep.subr.mxu0 0.0
    %3688 = vmatpush1.msra.mxu0 %v149
    %3689 = vmatprep.subr.mxu0 0.0
    %3690 = vmatpush1.msra.mxu0 0.0
    %3691 = vmatprep.subr.mxu0 0.0
    %3692 = vmatpush1.msra.mxu0 0.0
    %3693 = vmatprep.subr.mxu0 0.0
    %3694 = vmatpush1.msra.mxu0 0.0
    %3695 = vmatprep.subr.mxu0 0.0
    %3696 = vmatpush1.msra.mxu0 0.0
    %3697 = vmatprep.subr.mxu0 0.0
    %3698 = vmatpush1.msra.mxu0 0.0
    %3699 = vmatprep.subr.mxu0 0.0
    %3700 = vmatpush1.msra.mxu0 0.0
    %3701 = vmatprep.subr.mxu0 0.0
    %3702 = vmatpush1.msra.mxu0 0.0
    %3703 = vmatprep.subr.mxu0 0.0
    %3704 = vmatpush1.msra.mxu0 0.0
    %3705 = vmatprep.subr.mxu0 0.0
    %3706 = vmatpush1.msra.mxu0 0.0
    %3707 = vmatprep.subr.mxu0 0.0
    %3708 = vmatpush1.msra.mxu0 0.0
    %3709 = vmatprep.subr.mxu0 0.0
    %3710 = vmatpush1.msra.mxu0 0.0
    %3711 = vmatprep.subr.mxu0 0.0
    %3712 = vmatpush1.msra.mxu0 0.0
    %3713 = vmatprep.subr.mxu0 0.0
    %3714 = vmatpush1.msra.mxu0 0.0
    %3715 = vmatprep.subr.mxu0 0.0
    %3716 = vmatpush1.msra.mxu0 0.0
    %3717 = vmatprep.subr.mxu0 0.0
    %3718 = vmatpush1.msra.mxu0 0.0
    %3719 = vmatprep.subr.mxu0 0.0
    %3720 = vmatpush1.msra.mxu0 0.0
    %3721 = vmatprep.subr.mxu0 0.0
    %3722 = vmatpush1.msra.mxu0 0.0
    %3723 = vmatprep.subr.mxu0 0.0
    %3724 = vmatpush1.msra.mxu0 0.0
    %3725 = vmatprep.subr.mxu0 0.0
    %3726 = vmatpush1.msra.mxu0 0.0
    %3727 = vmatprep.subr.mxu0 0.0
    %3728 = vmatpush1.msra.mxu0 0.0
    %3729 = vmatprep.subr.mxu0 0.0
    %3730 = vmatpush1.msra.mxu0 0.0
    %3731 = vmatprep.subr.mxu0 0.0
    %3732 = vmatpush1.msra.mxu0 0.0
    %3733 = vmatprep.subr.mxu0 0.0
    %3734 = vmatpush1.msra.mxu0 0.0
    %3735 = vmatprep.subr.mxu0 0.0
    %3736 = vmatpush1.msra.mxu0 0.0
    %3737 = vmatprep.subr.mxu0 0.0
    %3738 = vmatpush1.msra.mxu0 0.0
    %3739 = vmatprep.subr.mxu0 0.0
    %3740 = vmatpush1.msra.mxu0 0.0
    %3741 = vmatprep.subr.mxu0 0.0
    %3742 = vmatpush1.msra.mxu0 0.0
    %3743 = vmatprep.subr.mxu0 0.0
    %3744 = vmatpush1.msra.mxu0 0.0
    %3745 = vmatprep.mubr.f32.mxu0 0.0
    %3746 = vmatmul.mubr.f32.gmra.mrb[0].mxu0 %v3679
    %v3747 = vpop.f32.mrb[0].mxu0
    %v3748 = vadd.f32 %v150, %v3747
    %v3749 = vpop.f32.mrb[0].mxu0
    %3750 = vdwg.mxu0
    %v3751 = vadd.f32 %v3676, %v3748
    %v3752 = vxor.u32 %v3751, 2147483648
    %v3753 = vmul.f32 %v3752, 1.442695
    %v3754 = vpow.pop %v3753
    %v3755 = vadd.f32 %v3754, 1.0
    %v3756 = vrcp.pop %v3755
    %v3757 = vmul.f32 1.0, %v3756
    %3759 = vrot.lane.b32.xlu0 %v3748, 64
    %v3760 = vpop.permute.xlu0 %3759
    %v3762 = vmul.f32 %v3757, %v3760
    %3764 = vrot.lane.b32.xlu0 %v3762, 64
    %v3765 = vpop.permute.xlu0 %3764
    %v3767 = vadd.f32 %v3676, %v3765
    %v3768 = vtanh.pop %v3767
    %v3769 = vsub.f32 1.0, %v3757
    %3771 = vrot.lane.b32.xlu0 %v3768, 96
    %v3772 = vpop.permute.xlu0 %3771
    %v3774 = vmul.f32 %v3769, %v3772
    %v3775 = vmul.f32 %v3757, %v3314
    %v3776 = vadd.f32 %v3774, %v3775
    %3778 = vset.pattern.permute.xlu0 32
    %3779 = vperm.xlu0 %3778, %v3776
    %v3780 = vpop.permute.xlu0 %3779
    %v3782 = vmul.f32 %v3780, %v152
    %v3783 = vsel %vm547, %v3782, -inf
    %3784 = vmax.xlane.f32.xlu0 %v3783
    %v3785 = vpop.xlane.xlu0 %3784
    %v3786 = vsub.f32 %v3782, %v3785
    %v3787 = vmul.f32 %v3786, 1.442695
    %v3788 = vpow.pop %v3787
    %v3789 = vsel %vm547, %v3788, 0.0
    %3790 = vadd.xlane.f32.xlu0 %v3789
    %v3791 = vpop.xlane.xlu0 %3790
    %v3792 = vrcp.pop %v3791
    %v3793 = vmul.f32 %v3788, %v3792
    %v3795 = vsel %vm559, %v3793, 0
    %3797 = vmatprep.subr.mxu0 0.0
    %3798 = vmatpush1.msra.mxu0 %v151
    %3799 = vmatprep.subr.mxu0 0.0
    %3800 = vmatpush1.msra.mxu0 0.0
    %3801 = vmatprep.subr.mxu0 0.0
    %3802 = vmatpush1.msra.mxu0 0.0
    %3803 = vmatprep.subr.mxu0 0.0
    %3804 = vmatpush1.msra.mxu0 0.0
    %3805 = vmatprep.subr.mxu0 0.0
    %3806 = vmatpush1.msra.mxu0 0.0
    %3807 = vmatprep.subr.mxu0 0.0
    %3808 = vmatpush1.msra.mxu0 0.0
    %3809 = vmatprep.subr.mxu0 0.0
    %3810 = vmatpush1.msra.mxu0 0.0
    %3811 = vmatprep.subr.mxu0 0.0
    %3812 = vmatpush1.msra.mxu0 0.0
    %3813 = vmatprep.subr.mxu0 0.0
    %3814 = vmatpush1.msra.mxu0 0.0
    %3815 = vmatprep.subr.mxu0 0.0
    %3816 = vmatpush1.msra.mxu0 0.0
    %3817 = vmatprep.subr.mxu0 0.0
    %3818 = vmatpush1.msra.mxu0 0.0
    %3819 = vmatprep.subr.mxu0 0.0
    %3820 = vmatpush1.msra.mxu0 0.0
    %3821 = vmatprep.subr.mxu0 0.0
    %3822 = vmatpush1.msra.mxu0 0.0
    %3823 = vmatprep.subr.mxu0 0.0
    %3824 = vmatpush1.msra.mxu0 0.0
    %3825 = vmatprep.subr.mxu0 0.0
    %3826 = vmatpush1.msra.mxu0 0.0
    %3827 = vmatprep.subr.mxu0 0.0
    %3828 = vmatpush1.msra.mxu0 0.0
    %3829 = vmatprep.subr.mxu0 0.0
    %3830 = vmatpush1.msra.mxu0 0.0
    %3831 = vmatprep.subr.mxu0 0.0
    %3832 = vmatpush1.msra.mxu0 0.0
    %3833 = vmatprep.subr.mxu0 0.0
    %3834 = vmatpush1.msra.mxu0 0.0
    %3835 = vmatprep.subr.mxu0 0.0
    %3836 = vmatpush1.msra.mxu0 0.0
    %3837 = vmatprep.subr.mxu0 0.0
    %3838 = vmatpush1.msra.mxu0 0.0
    %3839 = vmatprep.subr.mxu0 0.0
    %3840 = vmatpush1.msra.mxu0 0.0
    %3841 = vmatprep.subr.mxu0 0.0
    %3842 = vmatpush1.msra.mxu0 0.0
    %3843 = vmatprep.subr.mxu0 0.0
    %3844 = vmatpush1.msra.mxu0 0.0
    %3845 = vmatprep.subr.mxu0 0.0
    %3846 = vmatpush1.msra.mxu0 0.0
    %3847 = vmatprep.subr.mxu0 0.0
    %3848 = vmatpush1.msra.mxu0 0.0
    %3849 = vmatprep.subr.mxu0 0.0
    %3850 = vmatpush1.msra.mxu0 0.0
    %3851 = vmatprep.subr.mxu0 0.0
    %3852 = vmatpush1.msra.mxu0 0.0
    %3853 = vmatprep.subr.mxu0 0.0
    %3854 = vmatpush1.msra.mxu0 0.0
    %3855 = vmatprep.subr.mxu0 0.0
    %3856 = vmatpush1.msra.mxu0 0.0
    %3857 = vmatprep.subr.mxu0 0.0
    %3858 = vmatpush1.msra.mxu0 0.0
    %3859 = vmatprep.subr.mxu0 0.0
    %3860 = vmatpush1.msra.mxu0 0.0
    %3861 = vmatprep.mubr.f32.mxu0 0.0
    %3862 = vmatmul.mubr.f32.gmra.mrb[0].mxu0 %v3795
    %v3863 = vpop.f32.mrb[0].mxu0
    %v3864 = vadd.f32 0.0, %v3863
    %v3865 = vpop.f32.mrb[0].mxu0
    %3866 = vdwg.mxu0
    %s3867 = scalar_lea.vmem [#allocation16], 56
    %3868 = vst.msk [vmem:[%s3867] sm:$0x1] %vm633, %v3864
    %3870 = vst.msk [vmem:[%s3867 + $0x1] sm:$0x1] %vm633, %v3606
    %3871 = vrot.lane.b32.xlu0 %v3776, 96
    %v3872 = vpop.permute.xlu0 %3871
    %3874 = vst.msk [vmem:[%s3867 + $0x2] sm:$0x1] %vm633, %v3872
    %3875 = vst.msk [vmem:[%s3867 + $0x3] sm:$0x1] %vm547, %v3793
    %3876 = vst.msk [vmem:[#allocation2] sm:$0x1] %vm633, %v3606
    %3877 = vst.msk [vmem:[#allocation3] sm:$0x1] %vm633, %v3872
    %3878 = vst.msk [vmem:[#allocation4] sm:$0x1] %vm633, %v3864
    // Predicated region
    $region78: #{tpu_custom_call.1} parent=1 // pred_check
      _
    $region79: #{tpu_custom_call.1} parent=1 // pred_check_branch
      %3880 = sbr.rel (0) target = $region81
    $region80: #{tpu_custom_call.1} parent=1 // pred_region
      %s3882 = ssub.s32 1024, 1024
      %3883 = vsyncadd [#allocation7], %s3882
      %s3884 = sshll.u32 [#allocation16], 4
      %s3885 = int_to_ptr.vmem [resolvable:$true] %s3884
      %3890 = dma.vmem_to_hbm [thread:$0]  %s3885, 1024, %s12, [#allocation7], 128, 128, 8
    $region81: #{tpu_custom_call.1} parent=1 // pred_fallthru
      _
    // Predicated region
    $region82: #{tpu_custom_call.1} parent=1 // pred_check
      _
    $region83: #{tpu_custom_call.1} parent=1 // pred_check_branch
      %3892 = sbr.rel (0) target = $region85
    $region84: #{tpu_custom_call.1} parent=1 // pred_region
      %3893 = dma.done [#allocation7], 1024
    $region85: #{tpu_custom_call.1} parent=1 // pred_fallthru
      _
    %3894 = vsyncpa [#allocation6], 1
    %3895 = vsyncpa [#allocation9], 1
    %3896 = vsyncpa [#allocation12], 1
    %3897 = vsyncpa [#allocation15], 1
    %3898 = vsyncpa [#allocation7], 1

</llo_original>
